<compile_context>
chip_gen: v5e
topology: v5e:2x2
jax: 0.10.0
libtpu: 0.0.40
codegen_flags: <defaults>
</compile_context>

<pallas_src>
import math

import jax
import jax.numpy as jnp
from jax.experimental import pallas as pl
from jax.experimental.pallas import tpu as pltpu

# ----------------------------- config ----------------------------------------
T = 2            # sequence length
B = 2            # batch
IN_CHANNELS = 2  # head cam = channel 0, neck cam = channel 1
WH = 64          # spatial size -> NatureEncoder flatten = 64*4*4 = 1024
STATE_DIM = 16
HIDDEN = 32      # cfg['hidden_dims'][-1]
VISUAL_DIM = IN_CHANNELS * WH * WH
NATURE_OUT = 1024
EPS = 1e-5

E3 = 3 * HIDDEN          # 96  (3 branches lane-stacked)
SLAB_W = 6 * HIDDEN      # 192 (widest packed bias row: fused KV bias)
ABIAS_ROW = 15           # first row of the packed attention-bias block

VMEM_SPEC = pl.BlockSpec(memory_space=pltpu.MemorySpace.VMEM)


# ----------------------------- conv stage (Pallas GEMM, both cameras) --------
def _conv_gemm_kernel(p_ref, w_ref, b_ref, o_ref):
    """One camera per grid step: ReLU(patches @ W + b). bf16 MXU, f32 acc."""
    acc = jnp.dot(p_ref[0], w_ref[0], preferred_element_type=jnp.float32)
    o_ref[0] = jnp.maximum(acc + b_ref[0], 0.0).astype(o_ref.dtype)


def conv_gemm_relu(patches, w, b):
    """patches: (2, M, K) bf16, w: (2, K, N) bf16, b: (2, 1, N) f32 -> bf16.

    grid=(2,) over cameras, 'parallel' so v7x can split the two identical
    encoders across its two TensorCores (on v5e/v6e it is a 2-step loop).
    """
    n_cam, M, K = patches.shape
    N = w.shape[-1]
    return pl.pallas_call(
        _conv_gemm_kernel,
        grid=(n_cam,),
        in_specs=[pl.BlockSpec((1, M, K), lambda i: (i, 0, 0)),
                  pl.BlockSpec((1, K, N), lambda i: (i, 0, 0)),
                  pl.BlockSpec((1, 1, N), lambda i: (i, 0, 0))],
        out_specs=pl.BlockSpec((1, M, N), lambda i: (i, 0, 0)),
        out_shape=jax.ShapeDtypeStruct((n_cam, M, N), jnp.bfloat16),
        compiler_params=pltpu.CompilerParams(
            dimension_semantics=("parallel",)),
    )(patches, w, b)


def extract_patches(x_nhwc, k, s):
    """(N,H,W,C) -> (N, OH*OW, k*k*C), patch-column order (kh, kw, c).

    Built from static strided slices (no XLA gather); dtype preserved (bf16).
    """
    N, H, W, C = x_nhwc.shape
    oh = (H - k) // s + 1
    ow = (W - k) // s + 1
    taps = []
    for kh in range(k):
        for kw in range(k):
            taps.append(jax.lax.slice(
                x_nhwc,
                (0, kh, kw, 0),
                (N, kh + (oh - 1) * s + 1, kw + (ow - 1) * s + 1, C),
                (1, s, s, 1)))                       # (N, oh, ow, C)
    patches = jnp.stack(taps, axis=3)                # (N, oh, ow, k*k, C)
    return patches.reshape(N, oh * ow, k * k * C), oh, ow


def dual_nature_encoder(cams, p):
    """cams: (2, N, H, W, 1) bf16 camera-major -> (2, N, 1024) bf16 in HWC
    flatten order (the projection weight rows were permuted to HWC at init,
    so no transpose is needed here)."""
    n_cam, N = cams.shape[0], cams.shape[1]
    x = cams.reshape(n_cam * N, WH, WH, 1)

    pt, oh, ow = extract_patches(x, 8, 4)                       # 64x64 -> 15x15
    y = conv_gemm_relu(pt.reshape(n_cam, N * oh * ow, -1), p["w1"], p["b1"])
    x = y.reshape(n_cam * N, oh, ow, 32)

    pt, oh, ow = extract_patches(x, 4, 2)                       # 15x15 -> 6x6
    y = conv_gemm_relu(pt.reshape(n_cam, N * oh * ow, -1), p["w2"], p["b2"])
    x = y.reshape(n_cam * N, oh, ow, 64)

    pt, oh, ow = extract_patches(x, 3, 1)                       # 6x6 -> 4x4
    y = conv_gemm_relu(pt.reshape(n_cam, N * oh * ow, -1), p["w3"], p["b3"])
    # (2, N*16, 64) -> (2, N, 1024) is a free HWC-order reshape (no transpose)
    return y.reshape(n_cam, N, oh * ow * 64)


# ----------------------------- fused downstream kernel -----------------------
def _fused_head_kernel(vh_ref, vn_ref, st_ref, mask_ref, h0_ref, c0_ref,
                       pw_ref, wsq_ref, wkv_ref, wlstm_ref, bw_ref, bias_ref,
                       y_ref, hT_ref, cT_ref):
    E = hT_ref.shape[-1]                       # 32
    Bq = h0_ref.shape[0]                       # batch
    Tn = mask_ref.shape[0]                     # seq len
    TB = vh_ref.shape[0]                       # T*B
    scale = 1.0 / math.sqrt(E)

    bias = bias_ref[...]                       # (15 + TB, 192) f32 packed slab

    def bvec(row, width):                      # (1, width) slice of the slab
        return bias[row:row + 1, 0:width]

    def relu(v):
        return jnp.maximum(v, 0.0)

    def layer_norm(v, g, b):
        mu = jnp.mean(v, axis=-1, keepdims=True)
        var = jnp.mean((v - mu) ** 2, axis=-1, keepdims=True)
        return (v - mu) * jax.lax.rsqrt(var + EPS) * g + b

    def mm(a, b):
        return jnp.dot(a, b, preferred_element_type=jnp.float32)

    # --- camera projections (1024 -> 32): bf16 operands, f32 accumulate
    vh = relu(mm(vh_ref[...], pw_ref[0]) + bvec(13, E))          # (TB, E)
    vn = relu(mm(vn_ref[...], pw_ref[1]) + bvec(14, E))

    # --- MLPBase(state_dim -> hidden): Linear + ReLU (f32, tiny)
    st = relu(mm(st_ref[...], bw_ref[...]) + bvec(12, E))

    # --- constant additive cross-batch mask (packed in the slab at init)
    abias = bias[ABIAS_ROW:ABIAS_ROW + TB, 0:2 * TB]             # (TB, 2*TB)

    # --- batched single-head attention over the 3 branches
    # (lane-stacked activations + block-diagonal weights; per-(b,l) softmax is
    # recovered by the additive cross-batch bias, nn.MultiheadAttention
    # semantics per branch)
    x_all = jnp.concatenate([vh, vn, st], axis=1)                # (TB, 3E)
    kv_in = jnp.concatenate(
        [jnp.concatenate([vn, vh, vh], axis=1),
         jnp.concatenate([st, st, vn], axis=1)], axis=0)         # (2*TB, 3E)

    q_all = mm(x_all, wsq_ref[0]) + bvec(0, 3 * E)               # (TB, 3E)
    kv_all = mm(kv_in, wkv_ref[...]) + bvec(2, 6 * E)            # (2*TB, 6E)

    pv = []
    for i in range(3):
        q_i = q_all[:, i * E:(i + 1) * E] * scale
        k_i = kv_all[:, (2 * i) * E:(2 * i + 1) * E]
        v_i = kv_all[:, (2 * i + 1) * E:(2 * i + 2) * E]
        s = jax.lax.dot_general(q_i, k_i, (((1,), (1,)), ((), ())),
                                preferred_element_type=jnp.float32) + abias
        p = jnp.exp(s - jnp.max(s, axis=-1, keepdims=True))
        p = p * pl.reciprocal(jnp.sum(p, axis=-1, keepdims=True), approx=True)
        pv.append(mm(p, v_i))                                    # (TB, E)
    pv_all = jnp.concatenate(pv, axis=1)                         # (TB, 3E)

    # output projection + residual (block-diagonal Wo)
    a_all = mm(pv_all, wsq_ref[1]) + bvec(1, 3 * E) + x_all

    # --- per-branch LayerNorm (over 32-lane groups), then batched MLP
    g_all = bvec(3, 3 * E)
    beta_all = bvec(4, 3 * E)
    ln = [layer_norm(a_all[:, i * E:(i + 1) * E],
                     g_all[:, i * E:(i + 1) * E],
                     beta_all[:, i * E:(i + 1) * E]) for i in range(3)]
    ln_all = jnp.concatenate(ln, axis=1)                         # (TB, 3E)
    h_mid = relu(mm(ln_all, wsq_ref[2]) + bvec(5, 3 * E))
    out_all = mm(h_mid, wsq_ref[3]) + bvec(6, 3 * E)

    x_rnn = (out_all[:, 0:E] * out_all[:, E:2 * E]
             * out_all[:, 2 * E:3 * E])                          # (TB, E)

    # --- masked LayerNorm-LSTM, fused-gate GEMM, statically unrolled over T
    rb = bvec(7, 4 * E)
    gg = bvec(8, 4 * E)
    bg = bvec(9, 4 * E)
    gc = bvec(10, E)
    bc = bvec(11, E)
    h = h0_ref[...]
    c = c0_ref[...]
    for t in range(Tn):
        m = mask_ref[t]                                          # (B, 1)
        h = h * m
        c = c * m
        xt = x_rnn[t * Bq:(t + 1) * Bq, :]                       # (B, E)
        gates = mm(jnp.concatenate([xt, h], axis=1), wlstm_ref[...]) + rb
        gates = layer_norm(gates, gg, bg)
        i_g = jax.nn.sigmoid(gates[:, 0 * E:1 * E])
        f_g = jax.nn.sigmoid(gates[:, 1 * E:2 * E])
        g_g = jnp.tanh(gates[:, 2 * E:3 * E])
        o_g = jax.nn.sigmoid(gates[:, 3 * E:4 * E])
        c = f_g * c + i_g * g_g
        h = o_g * jnp.tanh(layer_norm(c, gc, bc))
        y_ref[t] = h
    hT_ref[...] = h
    cT_ref[...] = c


# ----------------------------- forward ---------------------------------------
def forward(params, x, states, mask):
    Ts, Bb, _ = x.shape
    TB = Ts * Bb
    state2d = x[..., :STATE_DIM].reshape(TB, STATE_DIM)
    visual = x[..., STATE_DIM:].reshape(TB, IN_CHANNELS, WH, WH)
    # camera-major NHWC stack (head = channel 0, neck = channel 1), bf16
    cams = jnp.transpose(visual, (1, 0, 2, 3))[..., None].astype(jnp.bfloat16)

    flat = dual_nature_encoder(cams, params["conv"])   # (2, TB, 1024) bf16 HWC

    h0, c0 = states
    p = params
    y, hT, cT = pl.pallas_call(
        _fused_head_kernel,
        in_specs=[VMEM_SPEC] * 12,
        out_specs=(VMEM_SPEC, VMEM_SPEC, VMEM_SPEC),
        out_shape=(jax.ShapeDtypeStruct((Ts, Bb, HIDDEN), jnp.float32),
                   jax.ShapeDtypeStruct((Bb, HIDDEN), jnp.float32),
                   jax.ShapeDtypeStruct((Bb, HIDDEN), jnp.float32)),
    )(flat[0], flat[1], state2d, mask, h0, c0,
      p["proj_w"], p["w_sq"], p["w_kv"], p["w_lstm"], p["base_w"],
      p["bias_slab"])
    return y, (hT, cT)


# ----------------------------- deterministic parameter init ------------------
def init_params(key):
    keys = iter(jax.random.split(key, 64))

    def nrm(shape, scale=0.05):
        return (scale * jax.random.normal(next(keys), shape)).astype(jnp.float32)

    def zeros(shape):
        return jnp.zeros(shape, jnp.float32)

    def ones(shape):
        return jnp.ones(shape, jnp.float32)

    H = HIDDEN

    # Conv weights generated in torch OIHW layout, converted to the
    # (kh, kw, cin, cout) GEMM layout, stacked over cameras, pre-cast bf16.
    def gemm_w(w_oihw):
        cout, cin, k, _ = w_oihw.shape
        return jnp.transpose(w_oihw, (2, 3, 1, 0)).reshape(k * k * cin, cout)

    def nature():
        cin = IN_CHANNELS // 2
        return dict(w1=nrm((32, cin, 8, 8)), b1=zeros((1, 32)),
                    w2=nrm((64, 32, 4, 4)), b2=zeros((1, 64)),
                    w3=nrm((64, 64, 3, 3)), b3=zeros((1, 64)))

    head, neck = nature(), nature()
    conv = {}
    for name in ("w1", "w2", "w3"):
        conv[name] = jnp.stack(
            [gemm_w(head[name]), gemm_w(neck[name])]).astype(jnp.bfloat16)
    for name in ("b1", "b2", "b3"):
        conv[name] = jnp.stack([head[name], neck[name]])          # f32

    # 1024 -> 32 camera projections: rows permuted once from torch CHW-flatten
    # order to the HWC order the conv kernels emit; pre-cast bf16.
    def proj_hwc():
        w_chw = nrm((NATURE_OUT, H))                              # rows (c,h,w)
        return (w_chw.reshape(64, 4, 4, H)
                .transpose(1, 2, 0, 3).reshape(NATURE_OUT, H))    # rows (h,w,c)
    proj_w = jnp.stack([proj_hwc(), proj_hwc()]).astype(jnp.bfloat16)

    base_w = nrm((STATE_DIM, H))

    # attention / LN-MLP branches (0=head, 1=neck, 2=state) -> block-diagonal
    # batched weights so the head kernel runs one GEMM per projection.
    wq = [nrm((H, H)) for _ in range(3)]
    wk = [nrm((H, H)) for _ in range(3)]
    wv = [nrm((H, H)) for _ in range(3)]
    wo = [nrm((H, H)) for _ in range(3)]
    w1 = [nrm((H, H)) for _ in range(3)]
    w2 = [nrm((H, H)) for _ in range(3)]
    wkv = [jnp.concatenate([wk[i], wv[i]], axis=1) for i in range(3)]  # (H,2H)

    def bdiag(ws):
        e, f = ws[0].shape
        out = jnp.zeros((3 * e, 3 * f), jnp.float32)
        for i, w_ in enumerate(ws):
            out = out.at[i * e:(i + 1) * e, i * f:(i + 1) * f].set(w_)
        return out

    w_sq = jnp.stack([bdiag(wq), bdiag(wo), bdiag(w1), bdiag(w2)])  # (4,96,96)
    w_kv = bdiag(wkv)                                               # (96,192)

    # LSTM: fuse input / recurrent gate weights into one (2H, 4H) matrix.
    w_lstm = jnp.concatenate([nrm((H, 4 * H)), nrm((H, 4 * H))], axis=0)

    # Packed bias / gain / constant slab (one DMA into the head kernel).
    def pad_row(v):
        return jnp.pad(v, ((0, 0), (0, SLAB_W - v.shape[1])))

    rows = [
        zeros((1, 3 * H)),        # 0  bq (all branches)
        zeros((1, 3 * H)),        # 1  bo
        zeros((1, 6 * H)),        # 2  bkv (fused K|V)
        ones((1, 3 * H)),         # 3  LayerNorm gains (branches)
        zeros((1, 3 * H)),        # 4  LayerNorm betas
        zeros((1, 3 * H)),        # 5  MLP b1
        zeros((1, 3 * H)),        # 6  MLP b2
        zeros((1, 4 * H)),        # 7  LSTM gate bias
        ones((1, 4 * H)),         # 8  LSTM gate-LN gain
        zeros((1, 4 * H)),        # 9  LSTM gate-LN bias
        ones((1, H)),             # 10 LSTM cell-LN gain
        zeros((1, H)),            # 11 LSTM cell-LN bias
        zeros((1, H)),            # 12 MLPBase bias
        zeros((1, H)),            # 13 head-cam projection bias
        zeros((1, H)),            # 14 neck-cam projection bias
    ]
    # constant additive cross-batch attention mask (rows 15 .. 15+T*B-1)
    rb_idx = jnp.arange(T * B) % B
    cb_idx = jnp.arange(2 * T * B) % B
    abias = jnp.where(rb_idx[:, None] == cb_idx[None, :], 0.0,
                      -1e30).astype(jnp.float32)                   # (TB, 2TB)
    bias_slab = jnp.concatenate([pad_row(r) for r in rows]
                                + [pad_row(abias)], axis=0)        # (19, 192)

    return dict(conv=conv, proj_w=proj_w, base_w=base_w,
                w_sq=w_sq, w_kv=w_kv, w_lstm=w_lstm, bias_slab=bias_slab)


# ----------------------------- main -------------------------------------------
if __name__ == "__main__":
    key = jax.random.PRNGKey(0)
    k_param, k_x, k_h, k_c = jax.random.split(key, 4)

    params = init_params(k_param)

    x = jax.random.normal(k_x, (T, B, STATE_DIM + VISUAL_DIM), jnp.float32)
    h0 = 0.1 * jax.random.normal(k_h, (B, HIDDEN), jnp.float32)
    c0 = 0.1 * jax.random.normal(k_c, (B, HIDDEN), jnp.float32)
    mask = jnp.ones((T, B, 1), jnp.float32).at[1, 0, 0].set(0.0)

    fwd = jax.jit(forward)
    rnn_out, (hT, cT) = fwd(params, x, (h0, c0), mask)
    jax.block_until_ready((rnn_out, hT, cT))

    assert rnn_out.shape == (T, B, HIDDEN)
    assert hT.shape == (B, HIDDEN) and cT.shape == (B, HIDDEN)
    assert bool(jnp.all(jnp.isfinite(rnn_out)))
    assert bool(jnp.all(jnp.isfinite(hT))) and bool(jnp.all(jnp.isfinite(cT)))
    print("KERNEL_OK")
</pallas_src>

<mosaic_0001>
module attributes {stable_mosaic.version = 11 : i64} {
  func.func @_conv_gemm_kernel(%arg0: i32, %arg1: memref<1x900x64xbf16, #tpu.memory_space<vmem>>, %arg2: memref<1x64x32xbf16, #tpu.memory_space<vmem>>, %arg3: memref<1x1x32xf32, #tpu.memory_space<vmem>>, %arg4: memref<1x900x32xbf16, #tpu.memory_space<vmem>>) attributes {dimension_semantics = [#tpu.dimension_semantics<parallel>], iteration_bounds = array<i64: 2>, scalar_prefetch = 0 : i64, scratch_operands = 0 : i64, tpu.core_type = #tpu.core_type<tc>, window_params = [{transform_indices = @transform_0, window_bounds = array<i64: 1, 900, 64>}, {transform_indices = @transform_1, window_bounds = array<i64: 1, 64, 32>}, {transform_indices = @transform_2, window_bounds = array<i64: 1, 1, 32>}, {transform_indices = @transform_3, window_bounds = array<i64: 1, 900, 32>}]} {
    %c0 = arith.constant 0 : index
    %c0_0 = arith.constant 0 : index
    %c0_1 = arith.constant 0 : index
    %0 = vector.load %arg1[%c0, %c0_0, %c0_1] : memref<1x900x64xbf16, #tpu.memory_space<vmem>>, vector<1x900x64xbf16>
    %1 = vector.shape_cast %0 : vector<1x900x64xbf16> to vector<900x64xbf16>
    %c0_2 = arith.constant 0 : index
    %c0_3 = arith.constant 0 : index
    %c0_4 = arith.constant 0 : index
    %2 = vector.load %arg2[%c0_2, %c0_3, %c0_4] : memref<1x64x32xbf16, #tpu.memory_space<vmem>>, vector<1x64x32xbf16>
    %3 = vector.shape_cast %2 : vector<1x64x32xbf16> to vector<64x32xbf16>
    %cst = arith.constant dense<0.000000e+00> : vector<900x32xf32>
    %4 = tpu.matmul %1, %3, %cst {dimension_numbers = #tpu.dot_dimension_numbers<[1], [0], [0], [1], [0, 0, 1, 1], [], []>} : vector<900x64xbf16>, vector<64x32xbf16>, vector<900x32xf32> -> vector<900x32xf32>
    %c0_5 = arith.constant 0 : index
    %c0_6 = arith.constant 0 : index
    %c0_7 = arith.constant 0 : index
    %5 = vector.load %arg3[%c0_5, %c0_6, %c0_7] : memref<1x1x32xf32, #tpu.memory_space<vmem>>, vector<1x1x32xf32>
    %6 = vector.shape_cast %5 : vector<1x1x32xf32> to vector<1x32xf32>
    %7 = vector.broadcast %6 : vector<1x32xf32> to vector<900x32xf32>
    %8 = arith.addf %4, %7 : vector<900x32xf32>
    %cst_8 = arith.constant 0.000000e+00 : f32
    %9 = vector.broadcast %cst_8 : f32 to vector<900x32xf32>
    %10 = arith.maximumf %8, %9 : vector<900x32xf32>
    %11 = arith.truncf %10 : vector<900x32xf32> to vector<900x32xbf16>
    %c0_9 = arith.constant 0 : index
    %c0_10 = arith.constant 0 : index
    %c0_11 = arith.constant 0 : index
    %12 = vector.load %arg4[%c0_9, %c0_10, %c0_11] : memref<1x900x32xbf16, #tpu.memory_space<vmem>>, vector<1x900x32xbf16>
    %13 = vector.shape_cast %12 : vector<1x900x32xbf16> to vector<900x32xbf16>
    %14 = vector.shape_cast %11 : vector<900x32xbf16> to vector<1x900x32xbf16>
    tpu.vector_store %arg4[%c0_9, %c0_10, %c0_11], %14 {strides = array<i32>} : memref<1x900x32xbf16, #tpu.memory_space<vmem>>, vector<1x900x32xbf16>,
    return
  }
  func.func @transform_0(%arg0: i32) -> (i32, i32, i32) {
    %c0_i32 = arith.constant 0 : i32
    %c0_i32_0 = arith.constant 0 : i32
    %c0_i32_1 = arith.constant 0 : i32
    return %arg0, %c0_i32, %c0_i32_0 : i32, i32, i32
  }
  func.func @transform_1(%arg0: i32) -> (i32, i32, i32) {
    %c0_i32 = arith.constant 0 : i32
    %c0_i32_0 = arith.constant 0 : i32
    %c0_i32_1 = arith.constant 0 : i32
    return %arg0, %c0_i32, %c0_i32_0 : i32, i32, i32
  }
  func.func @transform_2(%arg0: i32) -> (i32, i32, i32) {
    %c0_i32 = arith.constant 0 : i32
    %c0_i32_0 = arith.constant 0 : i32
    %c0_i32_1 = arith.constant 0 : i32
    return %arg0, %c0_i32, %c0_i32_0 : i32, i32, i32
  }
  func.func @transform_3(%arg0: i32) -> (i32, i32, i32) {
    %c0_i32 = arith.constant 0 : i32
    %c0_i32_0 = arith.constant 0 : i32
    %c0_i32_1 = arith.constant 0 : i32
    return %arg0, %c0_i32, %c0_i32_0 : i32, i32, i32
  }
}

module attributes {stable_mosaic.version = 11 : i64} {
  func.func @_conv_gemm_kernel(%arg0: i32, %arg1: memref<1x144x512xbf16, #tpu.memory_space<vmem>>, %arg2: memref<1x512x64xbf16, #tpu.memory_space<vmem>>, %arg3: memref<1x1x64xf32, #tpu.memory_space<vmem>>, %arg4: memref<1x144x64xbf16, #tpu.memory_space<vmem>>) attributes {dimension_semantics = [#tpu.dimension_semantics<parallel>], iteration_bounds = array<i64: 2>, scalar_prefetch = 0 : i64, scratch_operands = 0 : i64, tpu.core_type = #tpu.core_type<tc>, window_params = [{transform_indices = @transform_0, window_bounds = array<i64: 1, 144, 512>}, {transform_indices = @transform_1, window_bounds = array<i64: 1, 512, 64>}, {transform_indices = @transform_2, window_bounds = array<i64: 1, 1, 64>}, {transform_indices = @transform_3, window_bounds = array<i64: 1, 144, 64>}]} {
    %c0 = arith.constant 0 : index
    %c0_0 = arith.constant 0 : index
    %c0_1 = arith.constant 0 : index
    %0 = vector.load %arg1[%c0, %c0_0, %c0_1] : memref<1x144x512xbf16, #tpu.memory_space<vmem>>, vector<1x144x512xbf16>
    %1 = vector.shape_cast %0 : vector<1x144x512xbf16> to vector<144x512xbf16>
    %c0_2 = arith.constant 0 : index
    %c0_3 = arith.constant 0 : index
    %c0_4 = arith.constant 0 : index
    %2 = vector.load %arg2[%c0_2, %c0_3, %c0_4] : memref<1x512x64xbf16, #tpu.memory_space<vmem>>, vector<1x512x64xbf16>
    %3 = vector.shape_cast %2 : vector<1x512x64xbf16> to vector<512x64xbf16>
    %cst = arith.constant dense<0.000000e+00> : vector<144x64xf32>
    %4 = tpu.matmul %1, %3, %cst {dimension_numbers = #tpu.dot_dimension_numbers<[1], [0], [0], [1], [0, 0, 1, 1], [], []>} : vector<144x512xbf16>, vector<512x64xbf16>, vector<144x64xf32> -> vector<144x64xf32>
    %c0_5 = arith.constant 0 : index
    %c0_6 = arith.constant 0 : index
    %c0_7 = arith.constant 0 : index
    %5 = vector.load %arg3[%c0_5, %c0_6, %c0_7] : memref<1x1x64xf32, #tpu.memory_space<vmem>>, vector<1x1x64xf32>
    %6 = vector.shape_cast %5 : vector<1x1x64xf32> to vector<1x64xf32>
    %7 = vector.broadcast %6 : vector<1x64xf32> to vector<144x64xf32>
    %8 = arith.addf %4, %7 : vector<144x64xf32>
    %cst_8 = arith.constant 0.000000e+00 : f32
    %9 = vector.broadcast %cst_8 : f32 to vector<144x64xf32>
    %10 = arith.maximumf %8, %9 : vector<144x64xf32>
    %11 = arith.truncf %10 : vector<144x64xf32> to vector<144x64xbf16>
    %c0_9 = arith.constant 0 : index
    %c0_10 = arith.constant 0 : index
    %c0_11 = arith.constant 0 : index
    %12 = vector.load %arg4[%c0_9, %c0_10, %c0_11] : memref<1x144x64xbf16, #tpu.memory_space<vmem>>, vector<1x144x64xbf16>
    %13 = vector.shape_cast %12 : vector<1x144x64xbf16> to vector<144x64xbf16>
    %14 = vector.shape_cast %11 : vector<144x64xbf16> to vector<1x144x64xbf16>
    tpu.vector_store %arg4[%c0_9, %c0_10, %c0_11], %14 {strides = array<i32>} : memref<1x144x64xbf16, #tpu.memory_space<vmem>>, vector<1x144x64xbf16>,
    return
  }
  func.func @transform_0(%arg0: i32) -> (i32, i32, i32) {
    %c0_i32 = arith.constant 0 : i32
    %c0_i32_0 = arith.constant 0 : i32
    %c0_i32_1 = arith.constant 0 : i32
    return %arg0, %c0_i32, %c0_i32_0 : i32, i32, i32
  }
  func.func @transform_1(%arg0: i32) -> (i32, i32, i32) {
    %c0_i32 = arith.constant 0 : i32
    %c0_i32_0 = arith.constant 0 : i32
    %c0_i32_1 = arith.constant 0 : i32
    return %arg0, %c0_i32, %c0_i32_0 : i32, i32, i32
  }
  func.func @transform_2(%arg0: i32) -> (i32, i32, i32) {
    %c0_i32 = arith.constant 0 : i32
    %c0_i32_0 = arith.constant 0 : i32
    %c0_i32_1 = arith.constant 0 : i32
    return %arg0, %c0_i32, %c0_i32_0 : i32, i32, i32
  }
  func.func @transform_3(%arg0: i32) -> (i32, i32, i32) {
    %c0_i32 = arith.constant 0 : i32
    %c0_i32_0 = arith.constant 0 : i32
    %c0_i32_1 = arith.constant 0 : i32
    return %arg0, %c0_i32, %c0_i32_0 : i32, i32, i32
  }
}

module attributes {stable_mosaic.version = 11 : i64} {
  func.func @_conv_gemm_kernel(%arg0: i32, %arg1: memref<1x64x576xbf16, #tpu.memory_space<vmem>>, %arg2: memref<1x576x64xbf16, #tpu.memory_space<vmem>>, %arg3: memref<1x1x64xf32, #tpu.memory_space<vmem>>, %arg4: memref<1x64x64xbf16, #tpu.memory_space<vmem>>) attributes {dimension_semantics = [#tpu.dimension_semantics<parallel>], iteration_bounds = array<i64: 2>, scalar_prefetch = 0 : i64, scratch_operands = 0 : i64, tpu.core_type = #tpu.core_type<tc>, window_params = [{transform_indices = @transform_0, window_bounds = array<i64: 1, 64, 576>}, {transform_indices = @transform_1, window_bounds = array<i64: 1, 576, 64>}, {transform_indices = @transform_2, window_bounds = array<i64: 1, 1, 64>}, {transform_indices = @transform_3, window_bounds = array<i64: 1, 64, 64>}]} {
    %c0 = arith.constant 0 : index
    %c0_0 = arith.constant 0 : index
    %c0_1 = arith.constant 0 : index
    %0 = vector.load %arg1[%c0, %c0_0, %c0_1] : memref<1x64x576xbf16, #tpu.memory_space<vmem>>, vector<1x64x576xbf16>
    %1 = vector.shape_cast %0 : vector<1x64x576xbf16> to vector<64x576xbf16>
    %c0_2 = arith.constant 0 : index
    %c0_3 = arith.constant 0 : index
    %c0_4 = arith.constant 0 : index
    %2 = vector.load %arg2[%c0_2, %c0_3, %c0_4] : memref<1x576x64xbf16, #tpu.memory_space<vmem>>, vector<1x576x64xbf16>
    %3 = vector.shape_cast %2 : vector<1x576x64xbf16> to vector<576x64xbf16>
    %cst = arith.constant dense<0.000000e+00> : vector<64x64xf32>
    %4 = tpu.matmul %1, %3, %cst {dimension_numbers = #tpu.dot_dimension_numbers<[1], [0], [0], [1], [0, 0, 1, 1], [], []>} : vector<64x576xbf16>, vector<576x64xbf16>, vector<64x64xf32> -> vector<64x64xf32>
    %c0_5 = arith.constant 0 : index
    %c0_6 = arith.constant 0 : index
    %c0_7 = arith.constant 0 : index
    %5 = vector.load %arg3[%c0_5, %c0_6, %c0_7] : memref<1x1x64xf32, #tpu.memory_space<vmem>>, vector<1x1x64xf32>
    %6 = vector.shape_cast %5 : vector<1x1x64xf32> to vector<1x64xf32>
    %7 = vector.broadcast %6 : vector<1x64xf32> to vector<64x64xf32>
    %8 = arith.addf %4, %7 : vector<64x64xf32>
    %cst_8 = arith.constant 0.000000e+00 : f32
    %9 = vector.broadcast %cst_8 : f32 to vector<64x64xf32>
    %10 = arith.maximumf %8, %9 : vector<64x64xf32>
    %11 = arith.truncf %10 : vector<64x64xf32> to vector<64x64xbf16>
    %c0_9 = arith.constant 0 : index
    %c0_10 = arith.constant 0 : index
    %c0_11 = arith.constant 0 : index
    %12 = vector.load %arg4[%c0_9, %c0_10, %c0_11] : memref<1x64x64xbf16, #tpu.memory_space<vmem>>, vector<1x64x64xbf16>
    %13 = vector.shape_cast %12 : vector<1x64x64xbf16> to vector<64x64xbf16>
    %14 = vector.shape_cast %11 : vector<64x64xbf16> to vector<1x64x64xbf16>
    tpu.vector_store %arg4[%c0_9, %c0_10, %c0_11], %14 {strides = array<i32>} : memref<1x64x64xbf16, #tpu.memory_space<vmem>>, vector<1x64x64xbf16>,
    return
  }
  func.func @transform_0(%arg0: i32) -> (i32, i32, i32) {
    %c0_i32 = arith.constant 0 : i32
    %c0_i32_0 = arith.constant 0 : i32
    %c0_i32_1 = arith.constant 0 : i32
    return %arg0, %c0_i32, %c0_i32_0 : i32, i32, i32
  }
  func.func @transform_1(%arg0: i32) -> (i32, i32, i32) {
    %c0_i32 = arith.constant 0 : i32
    %c0_i32_0 = arith.constant 0 : i32
    %c0_i32_1 = arith.constant 0 : i32
    return %arg0, %c0_i32, %c0_i32_0 : i32, i32, i32
  }
  func.func @transform_2(%arg0: i32) -> (i32, i32, i32) {
    %c0_i32 = arith.constant 0 : i32
    %c0_i32_0 = arith.constant 0 : i32
    %c0_i32_1 = arith.constant 0 : i32
    return %arg0, %c0_i32, %c0_i32_0 : i32, i32, i32
  }
  func.func @transform_3(%arg0: i32) -> (i32, i32, i32) {
    %c0_i32 = arith.constant 0 : i32
    %c0_i32_0 = arith.constant 0 : i32
    %c0_i32_1 = arith.constant 0 : i32
    return %arg0, %c0_i32, %c0_i32_0 : i32, i32, i32
  }
}

module attributes {stable_mosaic.version = 11 : i64} {
  func.func @_fused_head_kernel(%arg0: memref<4x1024xbf16, #tpu.memory_space<vmem>>, %arg1: memref<4x1024xbf16, #tpu.memory_space<vmem>>, %arg2: memref<4x16xf32, #tpu.memory_space<vmem>>, %arg3: memref<2x2x1xf32, #tpu.memory_space<vmem>>, %arg4: memref<2x32xf32, #tpu.memory_space<vmem>>, %arg5: memref<2x32xf32, #tpu.memory_space<vmem>>, %arg6: memref<2x1024x32xbf16, #tpu.memory_space<vmem>>, %arg7: memref<4x96x96xf32, #tpu.memory_space<vmem>>, %arg8: memref<96x192xf32, #tpu.memory_space<vmem>>, %arg9: memref<64x128xf32, #tpu.memory_space<vmem>>, %arg10: memref<16x32xf32, #tpu.memory_space<vmem>>, %arg11: memref<19x192xf32, #tpu.memory_space<vmem>>, %arg12: memref<2x2x32xf32, #tpu.memory_space<vmem>>, %arg13: memref<2x32xf32, #tpu.memory_space<vmem>>, %arg14: memref<2x32xf32, #tpu.memory_space<vmem>>) attributes {dimension_semantics = [], scalar_prefetch = 0 : i64, scratch_operands = 0 : i64, tpu.core_type = #tpu.core_type<tc>} {
    %c0 = arith.constant 0 : index
    %c0_0 = arith.constant 0 : index
    %0 = vector.load %arg11[%c0, %c0_0] : memref<19x192xf32, #tpu.memory_space<vmem>>, vector<19x192xf32>
    %c0_1 = arith.constant 0 : index
    %c0_2 = arith.constant 0 : index
    %1 = vector.load %arg0[%c0_1, %c0_2] : memref<4x1024xbf16, #tpu.memory_space<vmem>>, vector<4x1024xbf16>
    %c0_3 = arith.constant 0 : index
    %c0_4 = arith.constant 0 : index
    %c0_5 = arith.constant 0 : index
    %2 = vector.load %arg6[%c0_3, %c0_4, %c0_5] : memref<2x1024x32xbf16, #tpu.memory_space<vmem>>, vector<1x1024x32xbf16>
    %3 = vector.shape_cast %2 : vector<1x1024x32xbf16> to vector<1024x32xbf16>
    %cst = arith.constant dense<0.000000e+00> : vector<4x32xf32>
    %4 = tpu.matmul %1, %3, %cst {dimension_numbers = #tpu.dot_dimension_numbers<[1], [0], [0], [1], [0, 0, 1, 1], [], []>} : vector<4x1024xbf16>, vector<1024x32xbf16>, vector<4x32xf32> -> vector<4x32xf32>
    %5 = vector.extract_strided_slice %0 {offsets = [13, 0], sizes = [1, 32], strides = [1, 1]} : vector<19x192xf32> to vector<1x32xf32>
    %6 = vector.broadcast %5 : vector<1x32xf32> to vector<4x32xf32>
    %7 = arith.addf %4, %6 : vector<4x32xf32>
    %cst_6 = arith.constant 0.000000e+00 : f32
    %8 = vector.broadcast %cst_6 : f32 to vector<4x32xf32>
    %9 = arith.maximumf %7, %8 : vector<4x32xf32>
    %c0_7 = arith.constant 0 : index
    %c0_8 = arith.constant 0 : index
    %10 = vector.load %arg1[%c0_7, %c0_8] : memref<4x1024xbf16, #tpu.memory_space<vmem>>, vector<4x1024xbf16>
    %c1 = arith.constant 1 : index
    %c0_9 = arith.constant 0 : index
    %c0_10 = arith.constant 0 : index
    %11 = vector.load %arg6[%c1, %c0_9, %c0_10] : memref<2x1024x32xbf16, #tpu.memory_space<vmem>>, vector<1x1024x32xbf16>
    %12 = vector.shape_cast %11 : vector<1x1024x32xbf16> to vector<1024x32xbf16>
    %cst_11 = arith.constant dense<0.000000e+00> : vector<4x32xf32>
    %13 = tpu.matmul %10, %12, %cst_11 {dimension_numbers = #tpu.dot_dimension_numbers<[1], [0], [0], [1], [0, 0, 1, 1], [], []>} : vector<4x1024xbf16>, vector<1024x32xbf16>, vector<4x32xf32> -> vector<4x32xf32>
    %14 = vector.extract_strided_slice %0 {offsets = [14, 0], sizes = [1, 32], strides = [1, 1]} : vector<19x192xf32> to vector<1x32xf32>
    %15 = vector.broadcast %14 : vector<1x32xf32> to vector<4x32xf32>
    %16 = arith.addf %13, %15 : vector<4x32xf32>
    %cst_12 = arith.constant 0.000000e+00 : f32
    %17 = vector.broadcast %cst_12 : f32 to vector<4x32xf32>
    %18 = arith.maximumf %16, %17 : vector<4x32xf32>
    %c0_13 = arith.constant 0 : index
    %c0_14 = arith.constant 0 : index
    %19 = vector.load %arg2[%c0_13, %c0_14] : memref<4x16xf32, #tpu.memory_space<vmem>>, vector<4x16xf32>
    %c0_15 = arith.constant 0 : index
    %c0_16 = arith.constant 0 : index
    %20 = vector.load %arg10[%c0_15, %c0_16] : memref<16x32xf32, #tpu.memory_space<vmem>>, vector<16x32xf32>
    %cst_17 = arith.constant dense<0.000000e+00> : vector<4x32xf32>
    %21 = tpu.matmul %19, %20, %cst_17 {dimension_numbers = #tpu.dot_dimension_numbers<[1], [0], [0], [1], [0, 0, 1, 1], [], []>} : vector<4x16xf32>, vector<16x32xf32>, vector<4x32xf32> -> vector<4x32xf32>
    %22 = vector.extract_strided_slice %0 {offsets = [12, 0], sizes = [1, 32], strides = [1, 1]} : vector<19x192xf32> to vector<1x32xf32>
    %23 = vector.broadcast %22 : vector<1x32xf32> to vector<4x32xf32>
    %24 = arith.addf %21, %23 : vector<4x32xf32>
    %cst_18 = arith.constant 0.000000e+00 : f32
    %25 = vector.broadcast %cst_18 : f32 to vector<4x32xf32>
    %26 = arith.maximumf %24, %25 : vector<4x32xf32>
    %27 = vector.extract_strided_slice %0 {offsets = [15, 0], sizes = [4, 8], strides = [1, 1]} : vector<19x192xf32> to vector<4x8xf32>
    %28 = tpu.concatenate %9, %18, %26 in 1 : vector<4x32xf32>, vector<4x32xf32>, vector<4x32xf32> -> vector<4x96xf32>
    %29 = tpu.concatenate %18, %9, %9 in 1 : vector<4x32xf32>, vector<4x32xf32>, vector<4x32xf32> -> vector<4x96xf32>
    %30 = tpu.concatenate %26, %26, %18 in 1 : vector<4x32xf32>, vector<4x32xf32>, vector<4x32xf32> -> vector<4x96xf32>
    %31 = tpu.concatenate %29, %30 in 0 : vector<4x96xf32>, vector<4x96xf32> -> vector<8x96xf32>
    %c0_19 = arith.constant 0 : index
    %c0_20 = arith.constant 0 : index
    %c0_21 = arith.constant 0 : index
    %32 = vector.load %arg7[%c0_19, %c0_20, %c0_21] : memref<4x96x96xf32, #tpu.memory_space<vmem>>, vector<1x96x96xf32>
    %33 = vector.shape_cast %32 : vector<1x96x96xf32> to vector<96x96xf32>
    %cst_22 = arith.constant dense<0.000000e+00> : vector<4x96xf32>
    %34 = tpu.matmul %28, %33, %cst_22 {dimension_numbers = #tpu.dot_dimension_numbers<[1], [0], [0], [1], [0, 0, 1, 1], [], []>} : vector<4x96xf32>, vector<96x96xf32>, vector<4x96xf32> -> vector<4x96xf32>
    %35 = vector.extract_strided_slice %0 {offsets = [0, 0], sizes = [1, 96], strides = [1, 1]} : vector<19x192xf32> to vector<1x96xf32>
    %36 = vector.broadcast %35 : vector<1x96xf32> to vector<4x96xf32>
    %37 = arith.addf %34, %36 : vector<4x96xf32>
    %c0_23 = arith.constant 0 : index
    %c0_24 = arith.constant 0 : index
    %38 = vector.load %arg8[%c0_23, %c0_24] : memref<96x192xf32, #tpu.memory_space<vmem>>, vector<96x192xf32>
    %cst_25 = arith.constant dense<0.000000e+00> : vector<8x192xf32>
    %39 = tpu.matmul %31, %38, %cst_25 {dimension_numbers = #tpu.dot_dimension_numbers<[1], [0], [0], [1], [0, 0, 1, 1], [], []>} : vector<8x96xf32>, vector<96x192xf32>, vector<8x192xf32> -> vector<8x192xf32>
    %40 = vector.extract_strided_slice %0 {offsets = [2, 0], sizes = [1, 192], strides = [1, 1]} : vector<19x192xf32> to vector<1x192xf32>
    %41 = vector.broadcast %40 : vector<1x192xf32> to vector<8x192xf32>
    %42 = arith.addf %39, %41 : vector<8x192xf32>
    %43 = vector.extract_strided_slice %37 {offsets = [0, 0], sizes = [4, 32], strides = [1, 1]} : vector<4x96xf32> to vector<4x32xf32>
    %cst_26 = arith.constant 0.176776692 : f32
    %44 = vector.broadcast %cst_26 : f32 to vector<4x32xf32>
    %45 = arith.mulf %43, %44 : vector<4x32xf32>
    %46 = vector.extract_strided_slice %42 {offsets = [0, 0], sizes = [8, 32], strides = [1, 1]} : vector<8x192xf32> to vector<8x32xf32>
    %47 = vector.extract_strided_slice %42 {offsets = [0, 32], sizes = [8, 32], strides = [1, 1]} : vector<8x192xf32> to vector<8x32xf32>
    %cst_27 = arith.constant dense<0.000000e+00> : vector<4x8xf32>
    %48 = tpu.matmul %45, %46, %cst_27 {dimension_numbers = #tpu.dot_dimension_numbers<[1], [1], [0], [0], [0, 0, 1, 0], [], []>} : vector<4x32xf32>, vector<8x32xf32>, vector<4x8xf32> -> vector<4x8xf32>
    %49 = arith.addf %48, %27 : vector<4x8xf32>
    %cst_28 = arith.constant dense<0xFF800000> : vector<4xf32>
    %50 = vector.multi_reduction <maximumf>, %49, %cst_28 [1] : vector<4x8xf32> to vector<4xf32>
    %51 = vector.shape_cast %50 : vector<4xf32> to vector<4x1xf32>
    %52 = vector.broadcast %51 : vector<4x1xf32> to vector<4x8xf32>
    %53 = arith.subf %49, %52 : vector<4x8xf32>
    %54 = math.exp %53 : vector<4x8xf32>
    %cst_29 = arith.constant dense<0.000000e+00> : vector<4xf32>
    %55 = vector.multi_reduction <add>, %54, %cst_29 [1] : vector<4x8xf32> to vector<4xf32>
    %56 = vector.shape_cast %55 : vector<4xf32> to vector<4x1xf32>
    %57 = tpu.reciprocal %56 {approx = true} : vector<4x1xf32> -> vector<4x1xf32>
    %58 = vector.broadcast %57 : vector<4x1xf32> to vector<4x8xf32>
    %59 = arith.mulf %54, %58 : vector<4x8xf32>
    %cst_30 = arith.constant dense<0.000000e+00> : vector<4x32xf32>
    %60 = tpu.matmul %59, %47, %cst_30 {dimension_numbers = #tpu.dot_dimension_numbers<[1], [0], [0], [1], [0, 0, 1, 1], [], []>} : vector<4x8xf32>, vector<8x32xf32>, vector<4x32xf32> -> vector<4x32xf32>
    %61 = vector.extract_strided_slice %37 {offsets = [0, 32], sizes = [4, 32], strides = [1, 1]} : vector<4x96xf32> to vector<4x32xf32>
    %cst_31 = arith.constant 0.176776692 : f32
    %62 = vector.broadcast %cst_31 : f32 to vector<4x32xf32>
    %63 = arith.mulf %61, %62 : vector<4x32xf32>
    %64 = vector.extract_strided_slice %42 {offsets = [0, 64], sizes = [8, 32], strides = [1, 1]} : vector<8x192xf32> to vector<8x32xf32>
    %65 = vector.extract_strided_slice %42 {offsets = [0, 96], sizes = [8, 32], strides = [1, 1]} : vector<8x192xf32> to vector<8x32xf32>
    %cst_32 = arith.constant dense<0.000000e+00> : vector<4x8xf32>
    %66 = tpu.matmul %63, %64, %cst_32 {dimension_numbers = #tpu.dot_dimension_numbers<[1], [1], [0], [0], [0, 0, 1, 0], [], []>} : vector<4x32xf32>, vector<8x32xf32>, vector<4x8xf32> -> vector<4x8xf32>
    %67 = arith.addf %66, %27 : vector<4x8xf32>
    %cst_33 = arith.constant dense<0xFF800000> : vector<4xf32>
    %68 = vector.multi_reduction <maximumf>, %67, %cst_33 [1] : vector<4x8xf32> to vector<4xf32>
    %69 = vector.shape_cast %68 : vector<4xf32> to vector<4x1xf32>
    %70 = vector.broadcast %69 : vector<4x1xf32> to vector<4x8xf32>
    %71 = arith.subf %67, %70 : vector<4x8xf32>
    %72 = math.exp %71 : vector<4x8xf32>
    %cst_34 = arith.constant dense<0.000000e+00> : vector<4xf32>
    %73 = vector.multi_reduction <add>, %72, %cst_34 [1] : vector<4x8xf32> to vector<4xf32>
    %74 = vector.shape_cast %73 : vector<4xf32> to vector<4x1xf32>
    %75 = tpu.reciprocal %74 {approx = true} : vector<4x1xf32> -> vector<4x1xf32>
    %76 = vector.broadcast %75 : vector<4x1xf32> to vector<4x8xf32>
    %77 = arith.mulf %72, %76 : vector<4x8xf32>
    %cst_35 = arith.constant dense<0.000000e+00> : vector<4x32xf32>
    %78 = tpu.matmul %77, %65, %cst_35 {dimension_numbers = #tpu.dot_dimension_numbers<[1], [0], [0], [1], [0, 0, 1, 1], [], []>} : vector<4x8xf32>, vector<8x32xf32>, vector<4x32xf32> -> vector<4x32xf32>
    %79 = vector.extract_strided_slice %37 {offsets = [0, 64], sizes = [4, 32], strides = [1, 1]} : vector<4x96xf32> to vector<4x32xf32>
    %cst_36 = arith.constant 0.176776692 : f32
    %80 = vector.broadcast %cst_36 : f32 to vector<4x32xf32>
    %81 = arith.mulf %79, %80 : vector<4x32xf32>
    %82 = vector.extract_strided_slice %42 {offsets = [0, 128], sizes = [8, 32], strides = [1, 1]} : vector<8x192xf32> to vector<8x32xf32>
    %83 = vector.extract_strided_slice %42 {offsets = [0, 160], sizes = [8, 32], strides = [1, 1]} : vector<8x192xf32> to vector<8x32xf32>
    %cst_37 = arith.constant dense<0.000000e+00> : vector<4x8xf32>
    %84 = tpu.matmul %81, %82, %cst_37 {dimension_numbers = #tpu.dot_dimension_numbers<[1], [1], [0], [0], [0, 0, 1, 0], [], []>} : vector<4x32xf32>, vector<8x32xf32>, vector<4x8xf32> -> vector<4x8xf32>
    %85 = arith.addf %84, %27 : vector<4x8xf32>
    %cst_38 = arith.constant dense<0xFF800000> : vector<4xf32>
    %86 = vector.multi_reduction <maximumf>, %85, %cst_38 [1] : vector<4x8xf32> to vector<4xf32>
    %87 = vector.shape_cast %86 : vector<4xf32> to vector<4x1xf32>
    %88 = vector.broadcast %87 : vector<4x1xf32> to vector<4x8xf32>
    %89 = arith.subf %85, %88 : vector<4x8xf32>
    %90 = math.exp %89 : vector<4x8xf32>
    %cst_39 = arith.constant dense<0.000000e+00> : vector<4xf32>
    %91 = vector.multi_reduction <add>, %90, %cst_39 [1] : vector<4x8xf32> to vector<4xf32>
    %92 = vector.shape_cast %91 : vector<4xf32> to vector<4x1xf32>
    %93 = tpu.reciprocal %92 {approx = true} : vector<4x1xf32> -> vector<4x1xf32>
    %94 = vector.broadcast %93 : vector<4x1xf32> to vector<4x8xf32>
    %95 = arith.mulf %90, %94 : vector<4x8xf32>
    %cst_40 = arith.constant dense<0.000000e+00> : vector<4x32xf32>
    %96 = tpu.matmul %95, %83, %cst_40 {dimension_numbers = #tpu.dot_dimension_numbers<[1], [0], [0], [1], [0, 0, 1, 1], [], []>} : vector<4x8xf32>, vector<8x32xf32>, vector<4x32xf32> -> vector<4x32xf32>
    %97 = tpu.concatenate %60, %78, %96 in 1 : vector<4x32xf32>, vector<4x32xf32>, vector<4x32xf32> -> vector<4x96xf32>
    %c1_41 = arith.constant 1 : index
    %c0_42 = arith.constant 0 : index
    %c0_43 = arith.constant 0 : index
    %98 = vector.load %arg7[%c1_41, %c0_42, %c0_43] : memref<4x96x96xf32, #tpu.memory_space<vmem>>, vector<1x96x96xf32>
    %99 = vector.shape_cast %98 : vector<1x96x96xf32> to vector<96x96xf32>
    %cst_44 = arith.constant dense<0.000000e+00> : vector<4x96xf32>
    %100 = tpu.matmul %97, %99, %cst_44 {dimension_numbers = #tpu.dot_dimension_numbers<[1], [0], [0], [1], [0, 0, 1, 1], [], []>} : vector<4x96xf32>, vector<96x96xf32>, vector<4x96xf32> -> vector<4x96xf32>
    %101 = vector.extract_strided_slice %0 {offsets = [1, 0], sizes = [1, 96], strides = [1, 1]} : vector<19x192xf32> to vector<1x96xf32>
    %102 = vector.broadcast %101 : vector<1x96xf32> to vector<4x96xf32>
    %103 = arith.addf %100, %102 : vector<4x96xf32>
    %104 = arith.addf %103, %28 : vector<4x96xf32>
    %105 = vector.extract_strided_slice %0 {offsets = [3, 0], sizes = [1, 96], strides = [1, 1]} : vector<19x192xf32> to vector<1x96xf32>
    %106 = vector.extract_strided_slice %0 {offsets = [4, 0], sizes = [1, 96], strides = [1, 1]} : vector<19x192xf32> to vector<1x96xf32>
    %107 = vector.extract_strided_slice %104 {offsets = [0, 0], sizes = [4, 32], strides = [1, 1]} : vector<4x96xf32> to vector<4x32xf32>
    %108 = vector.extract_strided_slice %105 {offsets = [0, 0], sizes = [1, 32], strides = [1, 1]} : vector<1x96xf32> to vector<1x32xf32>
    %109 = vector.extract_strided_slice %106 {offsets = [0, 0], sizes = [1, 32], strides = [1, 1]} : vector<1x96xf32> to vector<1x32xf32>
    %cst_45 = arith.constant dense<0.000000e+00> : vector<4xf32>
    %110 = vector.multi_reduction <add>, %107, %cst_45 [1] : vector<4x32xf32> to vector<4xf32>
    %111 = vector.shape_cast %110 : vector<4xf32> to vector<4x1xf32>
    %cst_46 = arith.constant 3.200000e+01 : f32
    %112 = vector.broadcast %cst_46 : f32 to vector<4x1xf32>
    %113 = arith.divf %111, %112 : vector<4x1xf32>
    %114 = vector.broadcast %113 : vector<4x1xf32> to vector<4x32xf32>
    %115 = arith.subf %107, %114 : vector<4x32xf32>
    %116 = arith.mulf %115, %115 : vector<4x32xf32>
    %cst_47 = arith.constant dense<0.000000e+00> : vector<4xf32>
    %117 = vector.multi_reduction <add>, %116, %cst_47 [1] : vector<4x32xf32> to vector<4xf32>
    %118 = vector.shape_cast %117 : vector<4xf32> to vector<4x1xf32>
    %cst_48 = arith.constant 3.200000e+01 : f32
    %119 = vector.broadcast %cst_48 : f32 to vector<4x1xf32>
    %120 = arith.divf %118, %119 : vector<4x1xf32>
    %121 = vector.broadcast %113 : vector<4x1xf32> to vector<4x32xf32>
    %122 = arith.subf %107, %121 : vector<4x32xf32>
    %cst_49 = arith.constant 9.99999974E-6 : f32
    %123 = vector.broadcast %cst_49 : f32 to vector<4x1xf32>
    %124 = arith.addf %120, %123 : vector<4x1xf32>
    %125 = math.rsqrt %124 : vector<4x1xf32>
    %126 = vector.broadcast %125 : vector<4x1xf32> to vector<4x32xf32>
    %127 = arith.mulf %122, %126 : vector<4x32xf32>
    %128 = vector.broadcast %108 : vector<1x32xf32> to vector<4x32xf32>
    %129 = arith.mulf %127, %128 : vector<4x32xf32>
    %130 = vector.broadcast %109 : vector<1x32xf32> to vector<4x32xf32>
    %131 = arith.addf %129, %130 : vector<4x32xf32>
    %132 = vector.extract_strided_slice %104 {offsets = [0, 32], sizes = [4, 32], strides = [1, 1]} : vector<4x96xf32> to vector<4x32xf32>
    %133 = vector.extract_strided_slice %105 {offsets = [0, 32], sizes = [1, 32], strides = [1, 1]} : vector<1x96xf32> to vector<1x32xf32>
    %134 = vector.extract_strided_slice %106 {offsets = [0, 32], sizes = [1, 32], strides = [1, 1]} : vector<1x96xf32> to vector<1x32xf32>
    %cst_50 = arith.constant dense<0.000000e+00> : vector<4xf32>
    %135 = vector.multi_reduction <add>, %132, %cst_50 [1] : vector<4x32xf32> to vector<4xf32>
    %136 = vector.shape_cast %135 : vector<4xf32> to vector<4x1xf32>
    %cst_51 = arith.constant 3.200000e+01 : f32
    %137 = vector.broadcast %cst_51 : f32 to vector<4x1xf32>
    %138 = arith.divf %136, %137 : vector<4x1xf32>
    %139 = vector.broadcast %138 : vector<4x1xf32> to vector<4x32xf32>
    %140 = arith.subf %132, %139 : vector<4x32xf32>
    %141 = arith.mulf %140, %140 : vector<4x32xf32>
    %cst_52 = arith.constant dense<0.000000e+00> : vector<4xf32>
    %142 = vector.multi_reduction <add>, %141, %cst_52 [1] : vector<4x32xf32> to vector<4xf32>
    %143 = vector.shape_cast %142 : vector<4xf32> to vector<4x1xf32>
    %cst_53 = arith.constant 3.200000e+01 : f32
    %144 = vector.broadcast %cst_53 : f32 to vector<4x1xf32>
    %145 = arith.divf %143, %144 : vector<4x1xf32>
    %146 = vector.broadcast %138 : vector<4x1xf32> to vector<4x32xf32>
    %147 = arith.subf %132, %146 : vector<4x32xf32>
    %cst_54 = arith.constant 9.99999974E-6 : f32
    %148 = vector.broadcast %cst_54 : f32 to vector<4x1xf32>
    %149 = arith.addf %145, %148 : vector<4x1xf32>
    %150 = math.rsqrt %149 : vector<4x1xf32>
    %151 = vector.broadcast %150 : vector<4x1xf32> to vector<4x32xf32>
    %152 = arith.mulf %147, %151 : vector<4x32xf32>
    %153 = vector.broadcast %133 : vector<1x32xf32> to vector<4x32xf32>
    %154 = arith.mulf %152, %153 : vector<4x32xf32>
    %155 = vector.broadcast %134 : vector<1x32xf32> to vector<4x32xf32>
    %156 = arith.addf %154, %155 : vector<4x32xf32>
    %157 = vector.extract_strided_slice %104 {offsets = [0, 64], sizes = [4, 32], strides = [1, 1]} : vector<4x96xf32> to vector<4x32xf32>
    %158 = vector.extract_strided_slice %105 {offsets = [0, 64], sizes = [1, 32], strides = [1, 1]} : vector<1x96xf32> to vector<1x32xf32>
    %159 = vector.extract_strided_slice %106 {offsets = [0, 64], sizes = [1, 32], strides = [1, 1]} : vector<1x96xf32> to vector<1x32xf32>
    %cst_55 = arith.constant dense<0.000000e+00> : vector<4xf32>
    %160 = vector.multi_reduction <add>, %157, %cst_55 [1] : vector<4x32xf32> to vector<4xf32>
    %161 = vector.shape_cast %160 : vector<4xf32> to vector<4x1xf32>
    %cst_56 = arith.constant 3.200000e+01 : f32
    %162 = vector.broadcast %cst_56 : f32 to vector<4x1xf32>
    %163 = arith.divf %161, %162 : vector<4x1xf32>
    %164 = vector.broadcast %163 : vector<4x1xf32> to vector<4x32xf32>
    %165 = arith.subf %157, %164 : vector<4x32xf32>
    %166 = arith.mulf %165, %165 : vector<4x32xf32>
    %cst_57 = arith.constant dense<0.000000e+00> : vector<4xf32>
    %167 = vector.multi_reduction <add>, %166, %cst_57 [1] : vector<4x32xf32> to vector<4xf32>
    %168 = vector.shape_cast %167 : vector<4xf32> to vector<4x1xf32>
    %cst_58 = arith.constant 3.200000e+01 : f32
    %169 = vector.broadcast %cst_58 : f32 to vector<4x1xf32>
    %170 = arith.divf %168, %169 : vector<4x1xf32>
    %171 = vector.broadcast %163 : vector<4x1xf32> to vector<4x32xf32>
    %172 = arith.subf %157, %171 : vector<4x32xf32>
    %cst_59 = arith.constant 9.99999974E-6 : f32
    %173 = vector.broadcast %cst_59 : f32 to vector<4x1xf32>
    %174 = arith.addf %170, %173 : vector<4x1xf32>
    %175 = math.rsqrt %174 : vector<4x1xf32>
    %176 = vector.broadcast %175 : vector<4x1xf32> to vector<4x32xf32>
    %177 = arith.mulf %172, %176 : vector<4x32xf32>
    %178 = vector.broadcast %158 : vector<1x32xf32> to vector<4x32xf32>
    %179 = arith.mulf %177, %178 : vector<4x32xf32>
    %180 = vector.broadcast %159 : vector<1x32xf32> to vector<4x32xf32>
    %181 = arith.addf %179, %180 : vector<4x32xf32>
    %182 = tpu.concatenate %131, %156, %181 in 1 : vector<4x32xf32>, vector<4x32xf32>, vector<4x32xf32> -> vector<4x96xf32>
    %c2 = arith.constant 2 : index
    %c0_60 = arith.constant 0 : index
    %c0_61 = arith.constant 0 : index
    %183 = vector.load %arg7[%c2, %c0_60, %c0_61] : memref<4x96x96xf32, #tpu.memory_space<vmem>>, vector<1x96x96xf32>
    %184 = vector.shape_cast %183 : vector<1x96x96xf32> to vector<96x96xf32>
    %cst_62 = arith.constant dense<0.000000e+00> : vector<4x96xf32>
    %185 = tpu.matmul %182, %184, %cst_62 {dimension_numbers = #tpu.dot_dimension_numbers<[1], [0], [0], [1], [0, 0, 1, 1], [], []>} : vector<4x96xf32>, vector<96x96xf32>, vector<4x96xf32> -> vector<4x96xf32>
    %186 = vector.extract_strided_slice %0 {offsets = [5, 0], sizes = [1, 96], strides = [1, 1]} : vector<19x192xf32> to vector<1x96xf32>
    %187 = vector.broadcast %186 : vector<1x96xf32> to vector<4x96xf32>
    %188 = arith.addf %185, %187 : vector<4x96xf32>
    %cst_63 = arith.constant 0.000000e+00 : f32
    %189 = vector.broadcast %cst_63 : f32 to vector<4x96xf32>
    %190 = arith.maximumf %188, %189 : vector<4x96xf32>
    %c3 = arith.constant 3 : index
    %c0_64 = arith.constant 0 : index
    %c0_65 = arith.constant 0 : index
    %191 = vector.load %arg7[%c3, %c0_64, %c0_65] : memref<4x96x96xf32, #tpu.memory_space<vmem>>, vector<1x96x96xf32>
    %192 = vector.shape_cast %191 : vector<1x96x96xf32> to vector<96x96xf32>
    %cst_66 = arith.constant dense<0.000000e+00> : vector<4x96xf32>
    %193 = tpu.matmul %190, %192, %cst_66 {dimension_numbers = #tpu.dot_dimension_numbers<[1], [0], [0], [1], [0, 0, 1, 1], [], []>} : vector<4x96xf32>, vector<96x96xf32>, vector<4x96xf32> -> vector<4x96xf32>
    %194 = vector.extract_strided_slice %0 {offsets = [6, 0], sizes = [1, 96], strides = [1, 1]} : vector<19x192xf32> to vector<1x96xf32>
    %195 = vector.broadcast %194 : vector<1x96xf32> to vector<4x96xf32>
    %196 = arith.addf %193, %195 : vector<4x96xf32>
    %197 = vector.extract_strided_slice %196 {offsets = [0, 0], sizes = [4, 32], strides = [1, 1]} : vector<4x96xf32> to vector<4x32xf32>
    %198 = vector.extract_strided_slice %196 {offsets = [0, 32], sizes = [4, 32], strides = [1, 1]} : vector<4x96xf32> to vector<4x32xf32>
    %199 = arith.mulf %197, %198 : vector<4x32xf32>
    %200 = vector.extract_strided_slice %196 {offsets = [0, 64], sizes = [4, 32], strides = [1, 1]} : vector<4x96xf32> to vector<4x32xf32>
    %201 = arith.mulf %199, %200 : vector<4x32xf32>
    %202 = vector.extract_strided_slice %0 {offsets = [7, 0], sizes = [1, 128], strides = [1, 1]} : vector<19x192xf32> to vector<1x128xf32>
    %203 = vector.extract_strided_slice %0 {offsets = [8, 0], sizes = [1, 128], strides = [1, 1]} : vector<19x192xf32> to vector<1x128xf32>
    %204 = vector.extract_strided_slice %0 {offsets = [9, 0], sizes = [1, 128], strides = [1, 1]} : vector<19x192xf32> to vector<1x128xf32>
    %205 = vector.extract_strided_slice %0 {offsets = [10, 0], sizes = [1, 32], strides = [1, 1]} : vector<19x192xf32> to vector<1x32xf32>
    %206 = vector.extract_strided_slice %0 {offsets = [11, 0], sizes = [1, 32], strides = [1, 1]} : vector<19x192xf32> to vector<1x32xf32>
    %c0_67 = arith.constant 0 : index
    %c0_68 = arith.constant 0 : index
    %207 = vector.load %arg4[%c0_67, %c0_68] : memref<2x32xf32, #tpu.memory_space<vmem>>, vector<2x32xf32>
    %c0_69 = arith.constant 0 : index
    %c0_70 = arith.constant 0 : index
    %208 = vector.load %arg5[%c0_69, %c0_70] : memref<2x32xf32, #tpu.memory_space<vmem>>, vector<2x32xf32>
    %c0_71 = arith.constant 0 : index
    %c0_72 = arith.constant 0 : index
    %c0_73 = arith.constant 0 : index
    %209 = vector.load %arg3[%c0_71, %c0_72, %c0_73] : memref<2x2x1xf32, #tpu.memory_space<vmem>>, vector<1x2x1xf32>
    %210 = vector.shape_cast %209 : vector<1x2x1xf32> to vector<2x1xf32>
    %211 = vector.broadcast %210 : vector<2x1xf32> to vector<2x32xf32>
    %212 = arith.mulf %207, %211 : vector<2x32xf32>
    %213 = vector.broadcast %210 : vector<2x1xf32> to vector<2x32xf32>
    %214 = arith.mulf %208, %213 : vector<2x32xf32>
    %215 = vector.extract_strided_slice %201 {offsets = [0, 0], sizes = [2, 32], strides = [1, 1]} : vector<4x32xf32> to vector<2x32xf32>
    %216 = tpu.concatenate %215, %212 in 1 : vector<2x32xf32>, vector<2x32xf32> -> vector<2x64xf32>
    %c0_74 = arith.constant 0 : index
    %c0_75 = arith.constant 0 : index
    %217 = vector.load %arg9[%c0_74, %c0_75] : memref<64x128xf32, #tpu.memory_space<vmem>>, vector<64x128xf32>
    %cst_76 = arith.constant dense<0.000000e+00> : vector<2x128xf32>
    %218 = tpu.matmul %216, %217, %cst_76 {dimension_numbers = #tpu.dot_dimension_numbers<[1], [0], [0], [1], [0, 0, 1, 1], [], []>} : vector<2x64xf32>, vector<64x128xf32>, vector<2x128xf32> -> vector<2x128xf32>
    %219 = vector.broadcast %202 : vector<1x128xf32> to vector<2x128xf32>
    %220 = arith.addf %218, %219 : vector<2x128xf32>
    %cst_77 = arith.constant dense<0.000000e+00> : vector<2xf32>
    %221 = vector.multi_reduction <add>, %220, %cst_77 [1] : vector<2x128xf32> to vector<2xf32>
    %222 = vector.shape_cast %221 : vector<2xf32> to vector<2x1xf32>
    %cst_78 = arith.constant 1.280000e+02 : f32
    %223 = vector.broadcast %cst_78 : f32 to vector<2x1xf32>
    %224 = arith.divf %222, %223 : vector<2x1xf32>
    %225 = vector.broadcast %224 : vector<2x1xf32> to vector<2x128xf32>
    %226 = arith.subf %220, %225 : vector<2x128xf32>
    %227 = arith.mulf %226, %226 : vector<2x128xf32>
    %cst_79 = arith.constant dense<0.000000e+00> : vector<2xf32>
    %228 = vector.multi_reduction <add>, %227, %cst_79 [1] : vector<2x128xf32> to vector<2xf32>
    %229 = vector.shape_cast %228 : vector<2xf32> to vector<2x1xf32>
    %cst_80 = arith.constant 1.280000e+02 : f32
    %230 = vector.broadcast %cst_80 : f32 to vector<2x1xf32>
    %231 = arith.divf %229, %230 : vector<2x1xf32>
    %232 = vector.broadcast %224 : vector<2x1xf32> to vector<2x128xf32>
    %233 = arith.subf %220, %232 : vector<2x128xf32>
    %cst_81 = arith.constant 9.99999974E-6 : f32
    %234 = vector.broadcast %cst_81 : f32 to vector<2x1xf32>
    %235 = arith.addf %231, %234 : vector<2x1xf32>
    %236 = math.rsqrt %235 : vector<2x1xf32>
    %237 = vector.broadcast %236 : vector<2x1xf32> to vector<2x128xf32>
    %238 = arith.mulf %233, %237 : vector<2x128xf32>
    %239 = vector.broadcast %203 : vector<1x128xf32> to vector<2x128xf32>
    %240 = arith.mulf %238, %239 : vector<2x128xf32>
    %241 = vector.broadcast %204 : vector<1x128xf32> to vector<2x128xf32>
    %242 = arith.addf %240, %241 : vector<2x128xf32>
    %243 = vector.extract_strided_slice %242 {offsets = [0, 0], sizes = [2, 32], strides = [1, 1]} : vector<2x128xf32> to vector<2x32xf32>
    %244 = arith.negf %243 : vector<2x32xf32>
    %245 = math.exp %244 : vector<2x32xf32>
    %cst_82 = arith.constant 1.000000e+00 : f32
    %246 = vector.broadcast %cst_82 : f32 to vector<2x32xf32>
    %247 = arith.addf %246, %245 : vector<2x32xf32>
    %248 = arith.divf %246, %247 : vector<2x32xf32>
    %249 = vector.extract_strided_slice %242 {offsets = [0, 32], sizes = [2, 32], strides = [1, 1]} : vector<2x128xf32> to vector<2x32xf32>
    %250 = arith.negf %249 : vector<2x32xf32>
    %251 = math.exp %250 : vector<2x32xf32>
    %cst_83 = arith.constant 1.000000e+00 : f32
    %252 = vector.broadcast %cst_83 : f32 to vector<2x32xf32>
    %253 = arith.addf %252, %251 : vector<2x32xf32>
    %254 = arith.divf %252, %253 : vector<2x32xf32>
    %255 = vector.extract_strided_slice %242 {offsets = [0, 64], sizes = [2, 32], strides = [1, 1]} : vector<2x128xf32> to vector<2x32xf32>
    %256 = math.tanh %255 : vector<2x32xf32>
    %257 = vector.extract_strided_slice %242 {offsets = [0, 96], sizes = [2, 32], strides = [1, 1]} : vector<2x128xf32> to vector<2x32xf32>
    %258 = arith.negf %257 : vector<2x32xf32>
    %259 = math.exp %258 : vector<2x32xf32>
    %cst_84 = arith.constant 1.000000e+00 : f32
    %260 = vector.broadcast %cst_84 : f32 to vector<2x32xf32>
    %261 = arith.addf %260, %259 : vector<2x32xf32>
    %262 = arith.divf %260, %261 : vector<2x32xf32>
    %263 = arith.mulf %254, %214 : vector<2x32xf32>
    %264 = arith.mulf %248, %256 : vector<2x32xf32>
    %265 = arith.addf %263, %264 : vector<2x32xf32>
    %cst_85 = arith.constant dense<0.000000e+00> : vector<2xf32>
    %266 = vector.multi_reduction <add>, %265, %cst_85 [1] : vector<2x32xf32> to vector<2xf32>
    %267 = vector.shape_cast %266 : vector<2xf32> to vector<2x1xf32>
    %cst_86 = arith.constant 3.200000e+01 : f32
    %268 = vector.broadcast %cst_86 : f32 to vector<2x1xf32>
    %269 = arith.divf %267, %268 : vector<2x1xf32>
    %270 = vector.broadcast %269 : vector<2x1xf32> to vector<2x32xf32>
    %271 = arith.subf %265, %270 : vector<2x32xf32>
    %272 = arith.mulf %271, %271 : vector<2x32xf32>
    %cst_87 = arith.constant dense<0.000000e+00> : vector<2xf32>
    %273 = vector.multi_reduction <add>, %272, %cst_87 [1] : vector<2x32xf32> to vector<2xf32>
    %274 = vector.shape_cast %273 : vector<2xf32> to vector<2x1xf32>
    %cst_88 = arith.constant 3.200000e+01 : f32
    %275 = vector.broadcast %cst_88 : f32 to vector<2x1xf32>
    %276 = arith.divf %274, %275 : vector<2x1xf32>
    %277 = vector.broadcast %269 : vector<2x1xf32> to vector<2x32xf32>
    %278 = arith.subf %265, %277 : vector<2x32xf32>
    %cst_89 = arith.constant 9.99999974E-6 : f32
    %279 = vector.broadcast %cst_89 : f32 to vector<2x1xf32>
    %280 = arith.addf %276, %279 : vector<2x1xf32>
    %281 = math.rsqrt %280 : vector<2x1xf32>
    %282 = vector.broadcast %281 : vector<2x1xf32> to vector<2x32xf32>
    %283 = arith.mulf %278, %282 : vector<2x32xf32>
    %284 = vector.broadcast %205 : vector<1x32xf32> to vector<2x32xf32>
    %285 = arith.mulf %283, %284 : vector<2x32xf32>
    %286 = vector.broadcast %206 : vector<1x32xf32> to vector<2x32xf32>
    %287 = arith.addf %285, %286 : vector<2x32xf32>
    %288 = math.tanh %287 : vector<2x32xf32>
    %289 = arith.mulf %262, %288 : vector<2x32xf32>
    %c0_90 = arith.constant 0 : index
    %c0_91 = arith.constant 0 : index
    %c0_92 = arith.constant 0 : index
    %290 = vector.load %arg12[%c0_90, %c0_91, %c0_92] : memref<2x2x32xf32, #tpu.memory_space<vmem>>, vector<1x2x32xf32>
    %291 = vector.shape_cast %290 : vector<1x2x32xf32> to vector<2x32xf32>
    %292 = vector.shape_cast %289 : vector<2x32xf32> to vector<1x2x32xf32>
    tpu.vector_store %arg12[%c0_90, %c0_91, %c0_92], %292 {strides = array<i32>} : memref<2x2x32xf32, #tpu.memory_space<vmem>>, vector<1x2x32xf32>,
    %c1_93 = arith.constant 1 : index
    %c0_94 = arith.constant 0 : index
    %c0_95 = arith.constant 0 : index
    %293 = vector.load %arg3[%c1_93, %c0_94, %c0_95] : memref<2x2x1xf32, #tpu.memory_space<vmem>>, vector<1x2x1xf32>
    %294 = vector.shape_cast %293 : vector<1x2x1xf32> to vector<2x1xf32>
    %295 = vector.broadcast %294 : vector<2x1xf32> to vector<2x32xf32>
    %296 = arith.mulf %289, %295 : vector<2x32xf32>
    %297 = vector.broadcast %294 : vector<2x1xf32> to vector<2x32xf32>
    %298 = arith.mulf %265, %297 : vector<2x32xf32>
    %299 = vector.extract_strided_slice %201 {offsets = [2, 0], sizes = [2, 32], strides = [1, 1]} : vector<4x32xf32> to vector<2x32xf32>
    %300 = tpu.concatenate %299, %296 in 1 : vector<2x32xf32>, vector<2x32xf32> -> vector<2x64xf32>
    %c0_96 = arith.constant 0 : index
    %c0_97 = arith.constant 0 : index
    %301 = vector.load %arg9[%c0_96, %c0_97] : memref<64x128xf32, #tpu.memory_space<vmem>>, vector<64x128xf32>
    %cst_98 = arith.constant dense<0.000000e+00> : vector<2x128xf32>
    %302 = tpu.matmul %300, %301, %cst_98 {dimension_numbers = #tpu.dot_dimension_numbers<[1], [0], [0], [1], [0, 0, 1, 1], [], []>} : vector<2x64xf32>, vector<64x128xf32>, vector<2x128xf32> -> vector<2x128xf32>
    %303 = vector.broadcast %202 : vector<1x128xf32> to vector<2x128xf32>
    %304 = arith.addf %302, %303 : vector<2x128xf32>
    %cst_99 = arith.constant dense<0.000000e+00> : vector<2xf32>
    %305 = vector.multi_reduction <add>, %304, %cst_99 [1] : vector<2x128xf32> to vector<2xf32>
    %306 = vector.shape_cast %305 : vector<2xf32> to vector<2x1xf32>
    %cst_100 = arith.constant 1.280000e+02 : f32
    %307 = vector.broadcast %cst_100 : f32 to vector<2x1xf32>
    %308 = arith.divf %306, %307 : vector<2x1xf32>
    %309 = vector.broadcast %308 : vector<2x1xf32> to vector<2x128xf32>
    %310 = arith.subf %304, %309 : vector<2x128xf32>
    %311 = arith.mulf %310, %310 : vector<2x128xf32>
    %cst_101 = arith.constant dense<0.000000e+00> : vector<2xf32>
    %312 = vector.multi_reduction <add>, %311, %cst_101 [1] : vector<2x128xf32> to vector<2xf32>
    %313 = vector.shape_cast %312 : vector<2xf32> to vector<2x1xf32>
    %cst_102 = arith.constant 1.280000e+02 : f32
    %314 = vector.broadcast %cst_102 : f32 to vector<2x1xf32>
    %315 = arith.divf %313, %314 : vector<2x1xf32>
    %316 = vector.broadcast %308 : vector<2x1xf32> to vector<2x128xf32>
    %317 = arith.subf %304, %316 : vector<2x128xf32>
    %cst_103 = arith.constant 9.99999974E-6 : f32
    %318 = vector.broadcast %cst_103 : f32 to vector<2x1xf32>
    %319 = arith.addf %315, %318 : vector<2x1xf32>
    %320 = math.rsqrt %319 : vector<2x1xf32>
    %321 = vector.broadcast %320 : vector<2x1xf32> to vector<2x128xf32>
    %322 = arith.mulf %317, %321 : vector<2x128xf32>
    %323 = vector.broadcast %203 : vector<1x128xf32> to vector<2x128xf32>
    %324 = arith.mulf %322, %323 : vector<2x128xf32>
    %325 = vector.broadcast %204 : vector<1x128xf32> to vector<2x128xf32>
    %326 = arith.addf %324, %325 : vector<2x128xf32>
    %327 = vector.extract_strided_slice %326 {offsets = [0, 0], sizes = [2, 32], strides = [1, 1]} : vector<2x128xf32> to vector<2x32xf32>
    %328 = arith.negf %327 : vector<2x32xf32>
    %329 = math.exp %328 : vector<2x32xf32>
    %cst_104 = arith.constant 1.000000e+00 : f32
    %330 = vector.broadcast %cst_104 : f32 to vector<2x32xf32>
    %331 = arith.addf %330, %329 : vector<2x32xf32>
    %332 = arith.divf %330, %331 : vector<2x32xf32>
    %333 = vector.extract_strided_slice %326 {offsets = [0, 32], sizes = [2, 32], strides = [1, 1]} : vector<2x128xf32> to vector<2x32xf32>
    %334 = arith.negf %333 : vector<2x32xf32>
    %335 = math.exp %334 : vector<2x32xf32>
    %cst_105 = arith.constant 1.000000e+00 : f32
    %336 = vector.broadcast %cst_105 : f32 to vector<2x32xf32>
    %337 = arith.addf %336, %335 : vector<2x32xf32>
    %338 = arith.divf %336, %337 : vector<2x32xf32>
    %339 = vector.extract_strided_slice %326 {offsets = [0, 64], sizes = [2, 32], strides = [1, 1]} : vector<2x128xf32> to vector<2x32xf32>
    %340 = math.tanh %339 : vector<2x32xf32>
    %341 = vector.extract_strided_slice %326 {offsets = [0, 96], sizes = [2, 32], strides = [1, 1]} : vector<2x128xf32> to vector<2x32xf32>
    %342 = arith.negf %341 : vector<2x32xf32>
    %343 = math.exp %342 : vector<2x32xf32>
    %cst_106 = arith.constant 1.000000e+00 : f32
    %344 = vector.broadcast %cst_106 : f32 to vector<2x32xf32>
    %345 = arith.addf %344, %343 : vector<2x32xf32>
    %346 = arith.divf %344, %345 : vector<2x32xf32>
    %347 = arith.mulf %338, %298 : vector<2x32xf32>
    %348 = arith.mulf %332, %340 : vector<2x32xf32>
    %349 = arith.addf %347, %348 : vector<2x32xf32>
    %cst_107 = arith.constant dense<0.000000e+00> : vector<2xf32>
    %350 = vector.multi_reduction <add>, %349, %cst_107 [1] : vector<2x32xf32> to vector<2xf32>
    %351 = vector.shape_cast %350 : vector<2xf32> to vector<2x1xf32>
    %cst_108 = arith.constant 3.200000e+01 : f32
    %352 = vector.broadcast %cst_108 : f32 to vector<2x1xf32>
    %353 = arith.divf %351, %352 : vector<2x1xf32>
    %354 = vector.broadcast %353 : vector<2x1xf32> to vector<2x32xf32>
    %355 = arith.subf %349, %354 : vector<2x32xf32>
    %356 = arith.mulf %355, %355 : vector<2x32xf32>
    %cst_109 = arith.constant dense<0.000000e+00> : vector<2xf32>
    %357 = vector.multi_reduction <add>, %356, %cst_109 [1] : vector<2x32xf32> to vector<2xf32>
    %358 = vector.shape_cast %357 : vector<2xf32> to vector<2x1xf32>
    %cst_110 = arith.constant 3.200000e+01 : f32
    %359 = vector.broadcast %cst_110 : f32 to vector<2x1xf32>
    %360 = arith.divf %358, %359 : vector<2x1xf32>
    %361 = vector.broadcast %353 : vector<2x1xf32> to vector<2x32xf32>
    %362 = arith.subf %349, %361 : vector<2x32xf32>
    %cst_111 = arith.constant 9.99999974E-6 : f32
    %363 = vector.broadcast %cst_111 : f32 to vector<2x1xf32>
    %364 = arith.addf %360, %363 : vector<2x1xf32>
    %365 = math.rsqrt %364 : vector<2x1xf32>
    %366 = vector.broadcast %365 : vector<2x1xf32> to vector<2x32xf32>
    %367 = arith.mulf %362, %366 : vector<2x32xf32>
    %368 = vector.broadcast %205 : vector<1x32xf32> to vector<2x32xf32>
    %369 = arith.mulf %367, %368 : vector<2x32xf32>
    %370 = vector.broadcast %206 : vector<1x32xf32> to vector<2x32xf32>
    %371 = arith.addf %369, %370 : vector<2x32xf32>
    %372 = math.tanh %371 : vector<2x32xf32>
    %373 = arith.mulf %346, %372 : vector<2x32xf32>
    %c1_112 = arith.constant 1 : index
    %c0_113 = arith.constant 0 : index
    %c0_114 = arith.constant 0 : index
    %374 = vector.load %arg12[%c1_112, %c0_113, %c0_114] : memref<2x2x32xf32, #tpu.memory_space<vmem>>, vector<1x2x32xf32>
    %375 = vector.shape_cast %374 : vector<1x2x32xf32> to vector<2x32xf32>
    %376 = vector.shape_cast %373 : vector<2x32xf32> to vector<1x2x32xf32>
    tpu.vector_store %arg12[%c1_112, %c0_113, %c0_114], %376 {strides = array<i32>} : memref<2x2x32xf32, #tpu.memory_space<vmem>>, vector<1x2x32xf32>,
    %c0_115 = arith.constant 0 : index
    %c0_116 = arith.constant 0 : index
    %377 = vector.load %arg13[%c0_115, %c0_116] : memref<2x32xf32, #tpu.memory_space<vmem>>, vector<2x32xf32>
    tpu.vector_store %arg13[%c0_115, %c0_116], %373 {strides = array<i32>} : memref<2x32xf32, #tpu.memory_space<vmem>>, vector<2x32xf32>,
    %c0_117 = arith.constant 0 : index
    %c0_118 = arith.constant 0 : index
    %378 = vector.load %arg14[%c0_117, %c0_118] : memref<2x32xf32, #tpu.memory_space<vmem>>, vector<2x32xf32>
    tpu.vector_store %arg14[%c0_117, %c0_118], %349 {strides = array<i32>} : memref<2x32xf32, #tpu.memory_space<vmem>>, vector<2x32xf32>,
    return
  }
}

</mosaic_0001>

<llo_original>
// kernel: forward.4
$region0: #{forward.4}
  #allocation0 [shape = 'u32[]', space=smem, size = 0x4, offset = 0x4, fixed_abs, tag = 'smem constant byte address 0x4 - core index']
  #allocation1 [shape = 'u32[72,128]{1,0:T(1,128)}', space=vmem, size = 0x9000, scoped, tag = 'internal scratch']
  %s0 = inlined_call_operand.vmem [shape: bf16[2,900,64], index: 0, kind: input, shape index: {}]
  %s1 = inlined_call_operand.vmem [shape: bf16[2,64,32], index: 1, kind: input, shape index: {}]
  %s2 = inlined_call_operand.vmem [shape: f32[2,1,32], index: 2, kind: input, shape index: {}]
  %s3 = inlined_call_operand.vmem [shape: bf16[2,900,32], index: 3, kind: output, shape index: {}]
  %s4 = sld [smem:[#allocation0]]
  $region45: #{forward.4} parent=0
    _
  %s6 = ssub.s32 1, %s4
  %s7 = scalar_select 0, %s6, %s4
  loop: start=0, step=1, limit=4
  $region2: #{forward.4} parent=0 // loop_pre_header
    _
  $region3: #{forward.4} parent=0 // loop_header
    %s9 = sphi 0, %s13
    %p10 = scmp.ge.s32.totalorder %s9, 4
    %s19 = sphi 0, %s21
    %s22 = sphi 0, %s19
    %s23 = sphi 0, %s22
    %s39 = sphi 0, %s23
    %s45 = sphi 0, %s47
    %s48 = sphi 0, %s45
    %s49 = sphi 0, %s48
    %s65 = sphi 0, %s49
    %s71 = sphi 0, %s73
    %s74 = sphi 0, %s71
    %s75 = sphi 0, %s74
    %s91 = sphi 0, %s75
    %s97 = sphi 0, %s99
    %s100 = sphi 0, %s97
    %s101 = sphi 0, %s100
    %s117 = sphi 0, %s101
  $region4: #{forward.4} parent=0 // loop_header_branch
    %12 = sbr.rel (%p10) target = $region8
  $region5: #{forward.4} parent=0 // loop_body
    %s14 = ssub.s32 %s9, 1
    %s15 = ssub.s32 %s9, 2
    %s16 = sadd.s32 %s9, 1
    %s17 = ssub.s32 %s9, %s16
    %p18 = scmp.eq.s32.totalorder %s17, 0
    %s20 = sadd.s32 %s19, 1
    %s21 = scalar_select %p18, %s19, %s20
    %p24 = pneg %p18
    %p25 = scmp.eq.s32.totalorder %s9, 1
    %p26 = por %p24, %p25
    %p27 = scmp.ne.s32.totalorder %s19, %s22
    %p28 = scmp.eq.s32.totalorder %s9, 0
    %p29 = por %p27, %p28
    %p30 = scmp.ne.s32.totalorder %s19, %s22
    %p31 = scmp.eq.s32.totalorder %s14, 1
    %p32 = por %p30, %p31
    %p33 = scmp.ne.s32.totalorder %s22, %s23
    %p34 = scmp.eq.s32.totalorder %s14, 0
    %p35 = por %p33, %p34
    %p36 = scmp.ne.s32.totalorder %s22, %s23
    %p37 = scmp.eq.s32.totalorder %s15, 1
    %p38 = por %p36, %p37
    %p40 = scmp.ne.s32.totalorder %s23, %s39
    %p41 = scmp.eq.s32.totalorder %s15, 0
    %p42 = por %p40, %p41
    %s43 = ssub.s32 %s9, %s16
    %p44 = scmp.eq.s32.totalorder %s43, 0
    %s46 = sadd.s32 %s45, 1
    %s47 = scalar_select %p44, %s45, %s46
    %p50 = pneg %p44
    %p51 = scmp.eq.s32.totalorder %s9, 1
    %p52 = por %p50, %p51
    %p53 = scmp.ne.s32.totalorder %s45, %s48
    %p54 = scmp.eq.s32.totalorder %s9, 0
    %p55 = por %p53, %p54
    %p56 = scmp.ne.s32.totalorder %s45, %s48
    %p57 = scmp.eq.s32.totalorder %s14, 1
    %p58 = por %p56, %p57
    %p59 = scmp.ne.s32.totalorder %s48, %s49
    %p60 = scmp.eq.s32.totalorder %s14, 0
    %p61 = por %p59, %p60
    %p62 = scmp.ne.s32.totalorder %s48, %s49
    %p63 = scmp.eq.s32.totalorder %s15, 1
    %p64 = por %p62, %p63
    %p66 = scmp.ne.s32.totalorder %s49, %s65
    %p67 = scmp.eq.s32.totalorder %s15, 0
    %p68 = por %p66, %p67
    %s69 = ssub.s32 %s9, %s16
    %p70 = scmp.eq.s32.totalorder %s69, 0
    %s72 = sadd.s32 %s71, 1
    %s73 = scalar_select %p70, %s71, %s72
    %p76 = pneg %p70
    %p77 = scmp.eq.s32.totalorder %s9, 1
    %p78 = por %p76, %p77
    %p79 = scmp.ne.s32.totalorder %s71, %s74
    %p80 = scmp.eq.s32.totalorder %s9, 0
    %p81 = por %p79, %p80
    %p82 = scmp.ne.s32.totalorder %s71, %s74
    %p83 = scmp.eq.s32.totalorder %s14, 1
    %p84 = por %p82, %p83
    %p85 = scmp.ne.s32.totalorder %s74, %s75
    %p86 = scmp.eq.s32.totalorder %s14, 0
    %p87 = por %p85, %p86
    %p88 = scmp.ne.s32.totalorder %s74, %s75
    %p89 = scmp.eq.s32.totalorder %s15, 1
    %p90 = por %p88, %p89
    %p92 = scmp.ne.s32.totalorder %s75, %s91
    %p93 = scmp.eq.s32.totalorder %s15, 0
    %p94 = por %p92, %p93
    %s95 = ssub.s32 %s9, %s16
    %p96 = scmp.eq.s32.totalorder %s95, 0
    %s98 = sadd.s32 %s97, 1
    %s99 = scalar_select %p96, %s97, %s98
    %p102 = pneg %p96
    %p103 = scmp.eq.s32.totalorder %s9, 1
    %p104 = por %p102, %p103
    %p105 = scmp.ne.s32.totalorder %s97, %s100
    %p106 = scmp.eq.s32.totalorder %s9, 0
    %p107 = por %p105, %p106
    %p108 = scmp.ne.s32.totalorder %s97, %s100
    %p109 = scmp.eq.s32.totalorder %s14, 1
    %p110 = por %p108, %p109
    %p111 = scmp.ne.s32.totalorder %s100, %s101
    %p112 = scmp.eq.s32.totalorder %s14, 0
    %p113 = por %p111, %p112
    %p114 = scmp.ne.s32.totalorder %s100, %s101
    %p115 = scmp.eq.s32.totalorder %s15, 1
    %p116 = por %p114, %p115
    %p118 = scmp.ne.s32.totalorder %s101, %s117
    %p119 = scmp.eq.s32.totalorder %s15, 0
    %p120 = por %p118, %p119
    %p121 = scmp.le.s32.totalorder 1, %s9
    %p122 = scmp.lt.s32.totalorder %s9, 3
    %p123 = pnand %p121, %p122
    %p124 = pneg %p123
    // Predicated region
    $region9: #{forward.4} parent=5 // pred_check
      _
    $region10: #{forward.4} parent=5 // pred_check_branch
      %126 = sbr.rel (%p123) target = $region12
    $region11: #{forward.4} parent=5 // pred_region
      %s127 = ssub.s32 %s9, 1
    $region12: #{forward.4} parent=5 // pred_fallthru
      _
    %p128 = scmp.lt.s32.totalorder %s9, 2
    // Predicated region
    $region13: #{forward.4} parent=5 // pred_check
      %p129 = pneg %p128
    $region14: #{forward.4} parent=5 // pred_check_branch
      %131 = sbr.rel (%p129) target = $region16
    $region15: #{forward.4} parent=5 // pred_region
      // Predicated region
      $region17: #{forward.4} parent=15 // pred_check
        %p132 = pneg %p29
      $region18: #{forward.4} parent=15 // pred_check_branch
        %134 = sbr.rel (%p132) target = $region20
      $region19: #{forward.4} parent=15 // pred_region
        %p135 = scmp.lt.s32.totalorder %s9, 1
        %s136 = scalar_select %p135, %s9, 1
        %s137 = smul.addr %s136, 113
        %s138 = smul.addr %s137, 4
        %s139 = scalar_lea.vmem %s0, %s138
      $region20: #{forward.4} parent=15 // pred_fallthru
        _
      // Predicated region
      $region21: #{forward.4} parent=15 // pred_check
        %p140 = pneg %p55
      $region22: #{forward.4} parent=15 // pred_check_branch
        %142 = sbr.rel (%p140) target = $region24
      $region23: #{forward.4} parent=15 // pred_region
        %p143 = scmp.lt.s32.totalorder %s9, 1
        %s144 = scalar_select %p143, %s9, 1
        %s145 = smul.addr %s144, 8
        %s146 = smul.addr %s145, 4
        %s147 = scalar_lea.vmem %s1, %s146
      $region24: #{forward.4} parent=15 // pred_fallthru
        _
      // Predicated region
      $region25: #{forward.4} parent=15 // pred_check
        %p148 = pneg %p81
      $region26: #{forward.4} parent=15 // pred_check_branch
        %150 = sbr.rel (%p148) target = $region28
      $region27: #{forward.4} parent=15 // pred_region
        %p151 = scmp.lt.s32.totalorder %s9, 1
        %s152 = scalar_select %p151, %s9, 1
        %s153 = scalar_lea.vmem %s2, %s152
      $region28: #{forward.4} parent=15 // pred_fallthru
        _
    $region16: #{forward.4} parent=5 // pred_fallthru
      _
    %p154 = scmp.le.s32.totalorder 1, %s9
    %p155 = scmp.lt.s32.totalorder %s9, 3
    %p156 = pnand %p154, %p155
    %p157 = pneg %p156
    // Predicated region
    $region29: #{forward.4} parent=5 // pred_check
      _
    $region30: #{forward.4} parent=5 // pred_check_branch
      %159 = sbr.rel (%p156) target = $region32
    $region31: #{forward.4} parent=5 // pred_region
      %s160 = ssub.s32 %s9, 1
      %p161 = scmp.lt.s32.totalorder %s14, 1
      %s162 = scalar_select %p161, %s14, 1
      %s163 = smul.addr %s162, 113
      %s164 = smul.addr %s163, 4
      %s165 = scalar_lea.vmem %s0, %s164
      %p166 = pneg %p35
      %p167 = pneg %p32
      %p168 = scmp.lt.s32.totalorder %s14, 1
      %s169 = scalar_select %p168, %s14, 1
      %s170 = smul.addr %s169, 8
      %s171 = smul.addr %s170, 4
      %s172 = scalar_lea.vmem %s1, %s171
      %p173 = pneg %p61
      %p174 = pneg %p58
      %p175 = scmp.lt.s32.totalorder %s14, 1
      %s176 = scalar_select %p175, %s14, 1
      %s177 = scalar_lea.vmem %s2, %s176
      %p178 = pneg %p87
      %p179 = pneg %p84
      %p180 = pneg %p113
      %p181 = pneg %p110
      %p182 = scmp.lt.s32.totalorder %s14, 1
      %s183 = scalar_select %p182, %s14, 1
      %s184 = smul.addr %s183, 113
      %s185 = smul.addr %s184, 4
      %s186 = scalar_lea.vmem %s3, %s185
      %p187 = scmp.lt.s32.totalorder %s14, 1
      %s188 = scalar_select %p187, %s14, 1
      %s189 = smul.addr %s188, 113
      %s190 = smul.addr %s189, 4
      %s191 = scalar_lea.vmem %s0, %s190
      %p192 = scmp.lt.s32.totalorder %s14, 1
      %s193 = scalar_select %p192, %s14, 1
      %s194 = smul.addr %s193, 8
      %s195 = smul.addr %s194, 4
      %s196 = scalar_lea.vmem %s1, %s195
      %p197 = scmp.lt.s32.totalorder %s14, 1
      %s198 = scalar_select %p197, %s14, 1
      %s199 = scalar_lea.vmem %s2, %s198
      %p200 = scmp.lt.s32.totalorder %s14, 1
      %s201 = scalar_select %p200, %s14, 1
      %s202 = smul.addr %s201, 113
      %s203 = smul.addr %s202, 4
      %s204 = scalar_lea.vmem %s3, %s203
      %v206 = vld [vmem:[%s191] sm:$0xf]
      %v207 = vld [vmem:[%s191 + $0x4] sm:$0xf]
      %v208 = vld [vmem:[%s191 + $0x8] sm:$0xf]
      %v209 = vld [vmem:[%s191 + $0xc] sm:$0xf]
      %v210 = vld [vmem:[%s191 + $0x10] sm:$0xf]
      %v211 = vld [vmem:[%s191 + $0x14] sm:$0xf]
      %v212 = vld [vmem:[%s191 + $0x18] sm:$0xf]
      %v213 = vld [vmem:[%s191 + $0x1c] sm:$0xf]
      %v214 = vld [vmem:[%s191 + $0x20] sm:$0xf]
      %v215 = vld [vmem:[%s191 + $0x24] sm:$0xf]
      %v216 = vld [vmem:[%s191 + $0x28] sm:$0xf]
      %v217 = vld [vmem:[%s191 + $0x2c] sm:$0xf]
      %v218 = vld [vmem:[%s191 + $0x30] sm:$0xf]
      %v219 = vld [vmem:[%s191 + $0x34] sm:$0xf]
      %v220 = vld [vmem:[%s191 + $0x38] sm:$0xf]
      %v221 = vld [vmem:[%s191 + $0x3c] sm:$0xf]
      %v222 = vld [vmem:[%s191 + $0x40] sm:$0xf]
      %v223 = vld [vmem:[%s191 + $0x44] sm:$0xf]
      %v224 = vld [vmem:[%s191 + $0x48] sm:$0xf]
      %v225 = vld [vmem:[%s191 + $0x4c] sm:$0xf]
      %v226 = vld [vmem:[%s191 + $0x50] sm:$0xf]
      %v227 = vld [vmem:[%s191 + $0x54] sm:$0xf]
      %v228 = vld [vmem:[%s191 + $0x58] sm:$0xf]
      %v229 = vld [vmem:[%s191 + $0x5c] sm:$0xf]
      %v230 = vld [vmem:[%s191 + $0x60] sm:$0xf]
      %v231 = vld [vmem:[%s191 + $0x64] sm:$0xf]
      %v232 = vld [vmem:[%s191 + $0x68] sm:$0xf]
      %v233 = vld [vmem:[%s191 + $0x6c] sm:$0xf]
      %v234 = vld [vmem:[%s191 + $0x70] sm:$0xf]
      %v235 = vld [vmem:[%s191 + $0x74] sm:$0xf]
      %v236 = vld [vmem:[%s191 + $0x78] sm:$0xf]
      %v237 = vld [vmem:[%s191 + $0x7c] sm:$0xf]
      %v238 = vld [vmem:[%s191 + $0x80] sm:$0xf]
      %v239 = vld [vmem:[%s191 + $0x84] sm:$0xf]
      %v240 = vld [vmem:[%s191 + $0x88] sm:$0xf]
      %v241 = vld [vmem:[%s191 + $0x8c] sm:$0xf]
      %v242 = vld [vmem:[%s191 + $0x90] sm:$0xf]
      %v243 = vld [vmem:[%s191 + $0x94] sm:$0xf]
      %v244 = vld [vmem:[%s191 + $0x98] sm:$0xf]
      %v245 = vld [vmem:[%s191 + $0x9c] sm:$0xf]
      %v246 = vld [vmem:[%s191 + $0xa0] sm:$0xf]
      %v247 = vld [vmem:[%s191 + $0xa4] sm:$0xf]
      %v248 = vld [vmem:[%s191 + $0xa8] sm:$0xf]
      %v249 = vld [vmem:[%s191 + $0xac] sm:$0xf]
      %v250 = vld [vmem:[%s191 + $0xb0] sm:$0xf]
      %v251 = vld [vmem:[%s191 + $0xb4] sm:$0xf]
      %v252 = vld [vmem:[%s191 + $0xb8] sm:$0xf]
      %v253 = vld [vmem:[%s191 + $0xbc] sm:$0xf]
      %v254 = vld [vmem:[%s191 + $0xc0] sm:$0xf]
      %v255 = vld [vmem:[%s191 + $0xc4] sm:$0xf]
      %v256 = vld [vmem:[%s191 + $0xc8] sm:$0xf]
      %v257 = vld [vmem:[%s191 + $0xcc] sm:$0xf]
      %v258 = vld [vmem:[%s191 + $0xd0] sm:$0xf]
      %v259 = vld [vmem:[%s191 + $0xd4] sm:$0xf]
      %v260 = vld [vmem:[%s191 + $0xd8] sm:$0xf]
      %v261 = vld [vmem:[%s191 + $0xdc] sm:$0xf]
      %v262 = vld [vmem:[%s191 + $0xe0] sm:$0xf]
      %v263 = vld [vmem:[%s191 + $0xe4] sm:$0xf]
      %v264 = vld [vmem:[%s191 + $0xe8] sm:$0xf]
      %v265 = vld [vmem:[%s191 + $0xec] sm:$0xf]
      %v266 = vld [vmem:[%s191 + $0xf0] sm:$0xf]
      %v267 = vld [vmem:[%s191 + $0xf4] sm:$0xf]
      %v268 = vld [vmem:[%s191 + $0xf8] sm:$0xf]
      %v269 = vld [vmem:[%s191 + $0xfc] sm:$0xf]
      %v270 = vld [vmem:[%s191 + $0x100] sm:$0xf]
      %v271 = vld [vmem:[%s191 + $0x104] sm:$0xf]
      %v272 = vld [vmem:[%s191 + $0x108] sm:$0xf]
      %v273 = vld [vmem:[%s191 + $0x10c] sm:$0xf]
      %v274 = vld [vmem:[%s191 + $0x110] sm:$0xf]
      %v275 = vld [vmem:[%s191 + $0x114] sm:$0xf]
      %v276 = vld [vmem:[%s191 + $0x118] sm:$0xf]
      %v277 = vld [vmem:[%s191 + $0x11c] sm:$0xf]
      %v278 = vld [vmem:[%s191 + $0x120] sm:$0xf]
      %v279 = vld [vmem:[%s191 + $0x124] sm:$0xf]
      %v280 = vld [vmem:[%s191 + $0x128] sm:$0xf]
      %v281 = vld [vmem:[%s191 + $0x12c] sm:$0xf]
      %v282 = vld [vmem:[%s191 + $0x130] sm:$0xf]
      %v283 = vld [vmem:[%s191 + $0x134] sm:$0xf]
      %v284 = vld [vmem:[%s191 + $0x138] sm:$0xf]
      %v285 = vld [vmem:[%s191 + $0x13c] sm:$0xf]
      %v286 = vld [vmem:[%s191 + $0x140] sm:$0xf]
      %v287 = vld [vmem:[%s191 + $0x144] sm:$0xf]
      %v288 = vld [vmem:[%s191 + $0x148] sm:$0xf]
      %v289 = vld [vmem:[%s191 + $0x14c] sm:$0xf]
      %v290 = vld [vmem:[%s191 + $0x150] sm:$0xf]
      %v291 = vld [vmem:[%s191 + $0x154] sm:$0xf]
      %v292 = vld [vmem:[%s191 + $0x158] sm:$0xf]
      %v293 = vld [vmem:[%s191 + $0x15c] sm:$0xf]
      %v294 = vld [vmem:[%s191 + $0x160] sm:$0xf]
      %v295 = vld [vmem:[%s191 + $0x164] sm:$0xf]
      %v296 = vld [vmem:[%s191 + $0x168] sm:$0xf]
      %v297 = vld [vmem:[%s191 + $0x16c] sm:$0xf]
      %v298 = vld [vmem:[%s191 + $0x170] sm:$0xf]
      %v299 = vld [vmem:[%s191 + $0x174] sm:$0xf]
      %v300 = vld [vmem:[%s191 + $0x178] sm:$0xf]
      %v301 = vld [vmem:[%s191 + $0x17c] sm:$0xf]
      %v302 = vld [vmem:[%s191 + $0x180] sm:$0xf]
      %v303 = vld [vmem:[%s191 + $0x184] sm:$0xf]
      %v304 = vld [vmem:[%s191 + $0x188] sm:$0xf]
      %v305 = vld [vmem:[%s191 + $0x18c] sm:$0xf]
      %v306 = vld [vmem:[%s191 + $0x190] sm:$0xf]
      %v307 = vld [vmem:[%s191 + $0x194] sm:$0xf]
      %v308 = vld [vmem:[%s191 + $0x198] sm:$0xf]
      %v309 = vld [vmem:[%s191 + $0x19c] sm:$0xf]
      %v310 = vld [vmem:[%s191 + $0x1a0] sm:$0xf]
      %v311 = vld [vmem:[%s191 + $0x1a4] sm:$0xf]
      %v312 = vld [vmem:[%s191 + $0x1a8] sm:$0xf]
      %v313 = vld [vmem:[%s191 + $0x1ac] sm:$0xf]
      %v314 = vld [vmem:[%s191 + $0x1b0] sm:$0xf]
      %v315 = vld [vmem:[%s191 + $0x1b4] sm:$0xf]
      %v316 = vld [vmem:[%s191 + $0x1b8] sm:$0xf]
      %v317 = vld [vmem:[%s191 + $0x1bc] sm:$0xf]
      %v318 = vld [vmem:[%s191 + $0x1c0] sm:$0x3]
      %v319 = vld [vmem:[%s196] sm:$0xf]
      %v320 = vld [vmem:[%s196 + $0x4] sm:$0xf]
      %v321 = vld [vmem:[%s196 + $0x8] sm:$0xf]
      %v322 = vld [vmem:[%s196 + $0xc] sm:$0xf]
      %v323 = vld [vmem:[%s196 + $0x10] sm:$0xf]
      %v324 = vld [vmem:[%s196 + $0x14] sm:$0xf]
      %v325 = vld [vmem:[%s196 + $0x18] sm:$0xf]
      %v326 = vld [vmem:[%s196 + $0x1c] sm:$0xf]
      %v327 = vld [vmem:[%s199] sm:$0x1]
      %v329 = vperm.slane %v327, 0
      %v444 = vunpack.c.l.b16 %v206
      %v445 = vunpack.c.l.b16 %v207
      %v446 = vunpack.c.l.b16 %v208
      %v447 = vunpack.c.l.b16 %v209
      %v448 = vunpack.c.l.b16 %v210
      %v449 = vunpack.c.l.b16 %v211
      %v450 = vunpack.c.l.b16 %v212
      %v451 = vunpack.c.l.b16 %v213
      %v452 = vunpack.c.l.b16 %v214
      %v453 = vunpack.c.l.b16 %v215
      %v454 = vunpack.c.l.b16 %v216
      %v455 = vunpack.c.l.b16 %v217
      %v456 = vunpack.c.l.b16 %v218
      %v457 = vunpack.c.l.b16 %v219
      %v458 = vunpack.c.l.b16 %v220
      %v459 = vunpack.c.l.b16 %v221
      %v460 = vunpack.c.l.b16 %v222
      %v461 = vunpack.c.l.b16 %v223
      %v462 = vunpack.c.l.b16 %v224
      %v463 = vunpack.c.l.b16 %v225
      %v464 = vunpack.c.l.b16 %v226
      %v465 = vunpack.c.l.b16 %v227
      %v466 = vunpack.c.l.b16 %v228
      %v467 = vunpack.c.l.b16 %v229
      %v468 = vunpack.c.l.b16 %v230
      %v469 = vunpack.c.l.b16 %v231
      %v470 = vunpack.c.l.b16 %v232
      %v471 = vunpack.c.l.b16 %v233
      %v472 = vunpack.c.l.b16 %v234
      %v473 = vunpack.c.l.b16 %v235
      %v474 = vunpack.c.l.b16 %v236
      %v475 = vunpack.c.l.b16 %v237
      %v476 = vunpack.c.l.b16 %v238
      %v477 = vunpack.c.l.b16 %v239
      %v478 = vunpack.c.l.b16 %v240
      %v479 = vunpack.c.l.b16 %v241
      %v480 = vunpack.c.l.b16 %v242
      %v481 = vunpack.c.l.b16 %v243
      %v482 = vunpack.c.l.b16 %v244
      %v483 = vunpack.c.l.b16 %v245
      %v484 = vunpack.c.l.b16 %v246
      %v485 = vunpack.c.l.b16 %v247
      %v486 = vunpack.c.l.b16 %v248
      %v487 = vunpack.c.l.b16 %v249
      %v488 = vunpack.c.l.b16 %v250
      %v489 = vunpack.c.l.b16 %v251
      %v490 = vunpack.c.l.b16 %v252
      %v491 = vunpack.c.l.b16 %v253
      %v492 = vunpack.c.l.b16 %v254
      %v493 = vunpack.c.l.b16 %v255
      %v494 = vunpack.c.l.b16 %v256
      %v495 = vunpack.c.l.b16 %v257
      %v496 = vunpack.c.l.b16 %v258
      %v497 = vunpack.c.l.b16 %v259
      %v498 = vunpack.c.l.b16 %v260
      %v499 = vunpack.c.l.b16 %v261
      %v500 = vunpack.c.l.b16 %v262
      %v501 = vunpack.c.l.b16 %v263
      %v502 = vunpack.c.l.b16 %v264
      %v503 = vunpack.c.l.b16 %v265
      %v504 = vunpack.c.l.b16 %v266
      %v505 = vunpack.c.l.b16 %v267
      %v506 = vunpack.c.l.b16 %v268
      %v507 = vunpack.c.l.b16 %v269
      %v508 = vunpack.c.l.b16 %v270
      %v509 = vunpack.c.l.b16 %v271
      %v510 = vunpack.c.l.b16 %v272
      %v511 = vunpack.c.l.b16 %v273
      %v512 = vunpack.c.l.b16 %v274
      %v513 = vunpack.c.l.b16 %v275
      %v514 = vunpack.c.l.b16 %v276
      %v515 = vunpack.c.l.b16 %v277
      %v516 = vunpack.c.l.b16 %v278
      %v517 = vunpack.c.l.b16 %v279
      %v518 = vunpack.c.l.b16 %v280
      %v519 = vunpack.c.l.b16 %v281
      %v520 = vunpack.c.l.b16 %v282
      %v521 = vunpack.c.l.b16 %v283
      %v522 = vunpack.c.l.b16 %v284
      %v523 = vunpack.c.l.b16 %v285
      %v524 = vunpack.c.l.b16 %v286
      %v525 = vunpack.c.l.b16 %v287
      %v526 = vunpack.c.l.b16 %v288
      %v527 = vunpack.c.l.b16 %v289
      %v528 = vunpack.c.l.b16 %v290
      %v529 = vunpack.c.l.b16 %v291
      %v530 = vunpack.c.l.b16 %v292
      %v531 = vunpack.c.l.b16 %v293
      %v532 = vunpack.c.l.b16 %v294
      %v533 = vunpack.c.l.b16 %v295
      %v534 = vunpack.c.l.b16 %v296
      %v535 = vunpack.c.l.b16 %v297
      %v536 = vunpack.c.l.b16 %v298
      %v537 = vunpack.c.l.b16 %v299
      %v538 = vunpack.c.l.b16 %v300
      %v539 = vunpack.c.l.b16 %v301
      %v540 = vunpack.c.l.b16 %v302
      %v541 = vunpack.c.l.b16 %v303
      %v542 = vunpack.c.l.b16 %v304
      %v543 = vunpack.c.l.b16 %v305
      %v544 = vunpack.c.l.b16 %v306
      %v545 = vunpack.c.l.b16 %v307
      %v546 = vunpack.c.l.b16 %v308
      %v547 = vunpack.c.l.b16 %v309
      %v548 = vunpack.c.l.b16 %v310
      %v549 = vunpack.c.l.b16 %v311
      %v550 = vunpack.c.l.b16 %v312
      %v551 = vunpack.c.l.b16 %v313
      %v552 = vunpack.c.l.b16 %v314
      %v553 = vunpack.c.l.b16 %v315
      %v554 = vunpack.c.l.b16 %v316
      %v555 = vunpack.c.l.b16 %v317
      %v556 = vunpack.c.l.b16 %v318
      %v557 = vpack.c.b16 %v445, %v444
      %v558 = vpack.c.b16 %v447, %v446
      %v559 = vpack.c.b16 %v449, %v448
      %v560 = vpack.c.b16 %v451, %v450
      %v561 = vpack.c.b16 %v453, %v452
      %v562 = vpack.c.b16 %v455, %v454
      %v563 = vpack.c.b16 %v457, %v456
      %v564 = vpack.c.b16 %v459, %v458
      %v565 = vpack.c.b16 %v461, %v460
      %v566 = vpack.c.b16 %v463, %v462
      %v567 = vpack.c.b16 %v465, %v464
      %v568 = vpack.c.b16 %v467, %v466
      %v569 = vpack.c.b16 %v469, %v468
      %v570 = vpack.c.b16 %v471, %v470
      %v571 = vpack.c.b16 %v473, %v472
      %v572 = vpack.c.b16 %v475, %v474
      %v573 = vpack.c.b16 %v477, %v476
      %v574 = vpack.c.b16 %v479, %v478
      %v575 = vpack.c.b16 %v481, %v480
      %v576 = vpack.c.b16 %v483, %v482
      %v577 = vpack.c.b16 %v485, %v484
      %v578 = vpack.c.b16 %v487, %v486
      %v579 = vpack.c.b16 %v489, %v488
      %v580 = vpack.c.b16 %v491, %v490
      %v581 = vpack.c.b16 %v493, %v492
      %v582 = vpack.c.b16 %v495, %v494
      %v583 = vpack.c.b16 %v497, %v496
      %v584 = vpack.c.b16 %v499, %v498
      %v585 = vpack.c.b16 %v501, %v500
      %v586 = vpack.c.b16 %v503, %v502
      %v587 = vpack.c.b16 %v505, %v504
      %v588 = vpack.c.b16 %v507, %v506
      %v589 = vpack.c.b16 %v509, %v508
      %v590 = vpack.c.b16 %v511, %v510
      %v591 = vpack.c.b16 %v513, %v512
      %v592 = vpack.c.b16 %v515, %v514
      %v593 = vpack.c.b16 %v517, %v516
      %v594 = vpack.c.b16 %v519, %v518
      %v595 = vpack.c.b16 %v521, %v520
      %v596 = vpack.c.b16 %v523, %v522
      %v597 = vpack.c.b16 %v525, %v524
      %v598 = vpack.c.b16 %v527, %v526
      %v599 = vpack.c.b16 %v529, %v528
      %v600 = vpack.c.b16 %v531, %v530
      %v601 = vpack.c.b16 %v533, %v532
      %v602 = vpack.c.b16 %v535, %v534
      %v603 = vpack.c.b16 %v537, %v536
      %v604 = vpack.c.b16 %v539, %v538
      %v605 = vpack.c.b16 %v541, %v540
      %v606 = vpack.c.b16 %v543, %v542
      %v607 = vpack.c.b16 %v545, %v544
      %v608 = vpack.c.b16 %v547, %v546
      %v609 = vpack.c.b16 %v549, %v548
      %v610 = vpack.c.b16 %v551, %v550
      %v611 = vpack.c.b16 %v553, %v552
      %v612 = vpack.c.b16 %v555, %v554
      %v613 = vpack.c.b16 %v556, %v556
      %v622 = vunpack.c.l.b16 %v319
      %v623 = vunpack.c.l.b16 %v320
      %v624 = vunpack.c.l.b16 %v321
      %v625 = vunpack.c.l.b16 %v322
      %v626 = vunpack.c.l.b16 %v323
      %v627 = vunpack.c.l.b16 %v324
      %v628 = vunpack.c.l.b16 %v325
      %v629 = vunpack.c.l.b16 %v326
      %v630 = vpack.c.b16 %v623, %v622
      %v631 = vpack.c.b16 %v625, %v624
      %v632 = vpack.c.b16 %v627, %v626
      %v633 = vpack.c.b16 %v629, %v628
      %vm638 = vcmask 523264
      %v640 = vsel %vm638, %v557, 0
      %v643 = vsel %vm638, %v558, 0
      %v646 = vsel %vm638, %v559, 0
      %v649 = vsel %vm638, %v560, 0
      %v652 = vsel %vm638, %v561, 0
      %v655 = vsel %vm638, %v562, 0
      %v658 = vsel %vm638, %v563, 0
      %v661 = vsel %vm638, %v564, 0
      %v664 = vsel %vm638, %v565, 0
      %v667 = vsel %vm638, %v566, 0
      %v670 = vsel %vm638, %v567, 0
      %v673 = vsel %vm638, %v568, 0
      %v676 = vsel %vm638, %v569, 0
      %v679 = vsel %vm638, %v570, 0
      %v682 = vsel %vm638, %v571, 0
      %v685 = vsel %vm638, %v572, 0
      %v688 = vsel %vm638, %v573, 0
      %v691 = vsel %vm638, %v574, 0
      %v694 = vsel %vm638, %v575, 0
      %v697 = vsel %vm638, %v576, 0
      %v700 = vsel %vm638, %v577, 0
      %v703 = vsel %vm638, %v578, 0
      %v706 = vsel %vm638, %v579, 0
      %v709 = vsel %vm638, %v580, 0
      %v712 = vsel %vm638, %v581, 0
      %v715 = vsel %vm638, %v582, 0
      %v718 = vsel %vm638, %v583, 0
      %v721 = vsel %vm638, %v584, 0
      %v724 = vsel %vm638, %v585, 0
      %v727 = vsel %vm638, %v586, 0
      %v730 = vsel %vm638, %v587, 0
      %v733 = vsel %vm638, %v588, 0
      %v736 = vsel %vm638, %v589, 0
      %v739 = vsel %vm638, %v590, 0
      %v742 = vsel %vm638, %v591, 0
      %v745 = vsel %vm638, %v592, 0
      %v748 = vsel %vm638, %v593, 0
      %v751 = vsel %vm638, %v594, 0
      %v754 = vsel %vm638, %v595, 0
      %v757 = vsel %vm638, %v596, 0
      %v760 = vsel %vm638, %v597, 0
      %v763 = vsel %vm638, %v598, 0
      %v766 = vsel %vm638, %v599, 0
      %v769 = vsel %vm638, %v600, 0
      %v772 = vsel %vm638, %v601, 0
      %v775 = vsel %vm638, %v602, 0
      %v778 = vsel %vm638, %v603, 0
      %v781 = vsel %vm638, %v604, 0
      %v784 = vsel %vm638, %v605, 0
      %v787 = vsel %vm638, %v606, 0
      %v790 = vsel %vm638, %v607, 0
      %v793 = vsel %vm638, %v608, 0
      %v796 = vsel %vm638, %v609, 0
      %v799 = vsel %vm638, %v610, 0
      %v802 = vsel %vm638, %v611, 0
      %v805 = vsel %vm638, %v612, 0
      %v808 = vsel %vm638, %v613, 0
      %810 = vmatpush.bf16.msra.mxu0 0
      %811 = vmatpush.bf16.msra.mxu0 0
      %812 = vmatpush.bf16.msra.mxu0 0
      %813 = vmatpush.bf16.msra.mxu0 0
      %814 = vmatpush.bf16.msra.mxu0 %v633
      %815 = vmatpush.bf16.msra.mxu0 %v632
      %816 = vmatpush.bf16.msra.mxu0 %v631
      %817 = vmatpush.bf16.msra.mxu0 %v630
      %818 = vmatmul.bf16.gmra.mxu0 %v640
      %v819 = vpop.f32.mrf.mxu0
      %v820 = vadd.f32 %v329, %v819
      %v821 = vpop.f32.mrf.mxu0
      %v822 = vadd.f32 %v329, %v821
      %823 = vmatmul.bf16.gmra.mxu0 %v643
      %v824 = vpop.f32.mrf.mxu0
      %v825 = vadd.f32 %v329, %v824
      %v826 = vpop.f32.mrf.mxu0
      %v827 = vadd.f32 %v329, %v826
      %828 = vmatmul.bf16.gmra.mxu0 %v646
      %v829 = vpop.f32.mrf.mxu0
      %v830 = vadd.f32 %v329, %v829
      %v831 = vpop.f32.mrf.mxu0
      %v832 = vadd.f32 %v329, %v831
      %833 = vmatmul.bf16.gmra.mxu0 %v649
      %v834 = vpop.f32.mrf.mxu0
      %v835 = vadd.f32 %v329, %v834
      %v836 = vpop.f32.mrf.mxu0
      %v837 = vadd.f32 %v329, %v836
      %838 = vmatmul.bf16.gmra.mxu0 %v652
      %v839 = vpop.f32.mrf.mxu0
      %v840 = vadd.f32 %v329, %v839
      %v841 = vpop.f32.mrf.mxu0
      %v842 = vadd.f32 %v329, %v841
      %843 = vmatmul.bf16.gmra.mxu0 %v655
      %v844 = vpop.f32.mrf.mxu0
      %v845 = vadd.f32 %v329, %v844
      %v846 = vpop.f32.mrf.mxu0
      %v847 = vadd.f32 %v329, %v846
      %848 = vmatmul.bf16.gmra.mxu0 %v658
      %v849 = vpop.f32.mrf.mxu0
      %v850 = vadd.f32 %v329, %v849
      %v851 = vpop.f32.mrf.mxu0
      %v852 = vadd.f32 %v329, %v851
      %853 = vmatmul.bf16.gmra.mxu0 %v661
      %v854 = vpop.f32.mrf.mxu0
      %v855 = vadd.f32 %v329, %v854
      %v856 = vpop.f32.mrf.mxu0
      %v857 = vadd.f32 %v329, %v856
      %858 = vmatmul.bf16.gmra.mxu0 %v664
      %v859 = vpop.f32.mrf.mxu0
      %v860 = vadd.f32 %v329, %v859
      %v861 = vpop.f32.mrf.mxu0
      %v862 = vadd.f32 %v329, %v861
      %863 = vmatmul.bf16.gmra.mxu0 %v667
      %v864 = vpop.f32.mrf.mxu0
      %v865 = vadd.f32 %v329, %v864
      %v866 = vpop.f32.mrf.mxu0
      %v867 = vadd.f32 %v329, %v866
      %868 = vmatmul.bf16.gmra.mxu0 %v670
      %v869 = vpop.f32.mrf.mxu0
      %v870 = vadd.f32 %v329, %v869
      %v871 = vpop.f32.mrf.mxu0
      %v872 = vadd.f32 %v329, %v871
      %873 = vmatmul.bf16.gmra.mxu0 %v673
      %v874 = vpop.f32.mrf.mxu0
      %v875 = vadd.f32 %v329, %v874
      %v876 = vpop.f32.mrf.mxu0
      %v877 = vadd.f32 %v329, %v876
      %878 = vmatmul.bf16.gmra.mxu0 %v676
      %v879 = vpop.f32.mrf.mxu0
      %v880 = vadd.f32 %v329, %v879
      %v881 = vpop.f32.mrf.mxu0
      %v882 = vadd.f32 %v329, %v881
      %883 = vmatmul.bf16.gmra.mxu0 %v679
      %v884 = vpop.f32.mrf.mxu0
      %v885 = vadd.f32 %v329, %v884
      %v886 = vpop.f32.mrf.mxu0
      %v887 = vadd.f32 %v329, %v886
      %888 = vmatmul.bf16.gmra.mxu0 %v682
      %v889 = vpop.f32.mrf.mxu0
      %v890 = vadd.f32 %v329, %v889
      %v891 = vpop.f32.mrf.mxu0
      %v892 = vadd.f32 %v329, %v891
      %893 = vmatmul.bf16.gmra.mxu0 %v685
      %v894 = vpop.f32.mrf.mxu0
      %v895 = vadd.f32 %v329, %v894
      %v896 = vpop.f32.mrf.mxu0
      %v897 = vadd.f32 %v329, %v896
      %898 = vmatmul.bf16.gmra.mxu0 %v688
      %v899 = vpop.f32.mrf.mxu0
      %v900 = vadd.f32 %v329, %v899
      %v901 = vpop.f32.mrf.mxu0
      %v902 = vadd.f32 %v329, %v901
      %903 = vmatmul.bf16.gmra.mxu0 %v691
      %v904 = vpop.f32.mrf.mxu0
      %v905 = vadd.f32 %v329, %v904
      %v906 = vpop.f32.mrf.mxu0
      %v907 = vadd.f32 %v329, %v906
      %908 = vmatmul.bf16.gmra.mxu0 %v694
      %v909 = vpop.f32.mrf.mxu0
      %v910 = vadd.f32 %v329, %v909
      %v911 = vpop.f32.mrf.mxu0
      %v912 = vadd.f32 %v329, %v911
      %913 = vmatmul.bf16.gmra.mxu0 %v697
      %v914 = vpop.f32.mrf.mxu0
      %v915 = vadd.f32 %v329, %v914
      %v916 = vpop.f32.mrf.mxu0
      %v917 = vadd.f32 %v329, %v916
      %918 = vmatmul.bf16.gmra.mxu0 %v700
      %v919 = vpop.f32.mrf.mxu0
      %v920 = vadd.f32 %v329, %v919
      %v921 = vpop.f32.mrf.mxu0
      %v922 = vadd.f32 %v329, %v921
      %923 = vmatmul.bf16.gmra.mxu0 %v703
      %v924 = vpop.f32.mrf.mxu0
      %v925 = vadd.f32 %v329, %v924
      %v926 = vpop.f32.mrf.mxu0
      %v927 = vadd.f32 %v329, %v926
      %928 = vmatmul.bf16.gmra.mxu0 %v706
      %v929 = vpop.f32.mrf.mxu0
      %v930 = vadd.f32 %v329, %v929
      %v931 = vpop.f32.mrf.mxu0
      %v932 = vadd.f32 %v329, %v931
      %933 = vmatmul.bf16.gmra.mxu0 %v709
      %v934 = vpop.f32.mrf.mxu0
      %v935 = vadd.f32 %v329, %v934
      %v936 = vpop.f32.mrf.mxu0
      %v937 = vadd.f32 %v329, %v936
      %938 = vmatmul.bf16.gmra.mxu0 %v712
      %v939 = vpop.f32.mrf.mxu0
      %v940 = vadd.f32 %v329, %v939
      %v941 = vpop.f32.mrf.mxu0
      %v942 = vadd.f32 %v329, %v941
      %943 = vmatmul.bf16.gmra.mxu0 %v715
      %v944 = vpop.f32.mrf.mxu0
      %v945 = vadd.f32 %v329, %v944
      %v946 = vpop.f32.mrf.mxu0
      %v947 = vadd.f32 %v329, %v946
      %948 = vmatmul.bf16.gmra.mxu0 %v718
      %v949 = vpop.f32.mrf.mxu0
      %v950 = vadd.f32 %v329, %v949
      %v951 = vpop.f32.mrf.mxu0
      %v952 = vadd.f32 %v329, %v951
      %953 = vmatmul.bf16.gmra.mxu0 %v721
      %v954 = vpop.f32.mrf.mxu0
      %v955 = vadd.f32 %v329, %v954
      %v956 = vpop.f32.mrf.mxu0
      %v957 = vadd.f32 %v329, %v956
      %958 = vmatmul.bf16.gmra.mxu0 %v724
      %v959 = vpop.f32.mrf.mxu0
      %v960 = vadd.f32 %v329, %v959
      %v961 = vpop.f32.mrf.mxu0
      %v962 = vadd.f32 %v329, %v961
      %963 = vmatmul.bf16.gmra.mxu0 %v727
      %v964 = vpop.f32.mrf.mxu0
      %v965 = vadd.f32 %v329, %v964
      %v966 = vpop.f32.mrf.mxu0
      %v967 = vadd.f32 %v329, %v966
      %968 = vmatmul.bf16.gmra.mxu0 %v730
      %v969 = vpop.f32.mrf.mxu0
      %v970 = vadd.f32 %v329, %v969
      %v971 = vpop.f32.mrf.mxu0
      %v972 = vadd.f32 %v329, %v971
      %973 = vmatmul.bf16.gmra.mxu0 %v733
      %v974 = vpop.f32.mrf.mxu0
      %v975 = vadd.f32 %v329, %v974
      %v976 = vpop.f32.mrf.mxu0
      %v977 = vadd.f32 %v329, %v976
      %978 = vmatmul.bf16.gmra.mxu0 %v736
      %v979 = vpop.f32.mrf.mxu0
      %v980 = vadd.f32 %v329, %v979
      %v981 = vpop.f32.mrf.mxu0
      %v982 = vadd.f32 %v329, %v981
      %983 = vmatmul.bf16.gmra.mxu0 %v739
      %v984 = vpop.f32.mrf.mxu0
      %v985 = vadd.f32 %v329, %v984
      %v986 = vpop.f32.mrf.mxu0
      %v987 = vadd.f32 %v329, %v986
      %988 = vmatmul.bf16.gmra.mxu0 %v742
      %v989 = vpop.f32.mrf.mxu0
      %v990 = vadd.f32 %v329, %v989
      %v991 = vpop.f32.mrf.mxu0
      %v992 = vadd.f32 %v329, %v991
      %993 = vmatmul.bf16.gmra.mxu0 %v745
      %v994 = vpop.f32.mrf.mxu0
      %v995 = vadd.f32 %v329, %v994
      %v996 = vpop.f32.mrf.mxu0
      %v997 = vadd.f32 %v329, %v996
      %998 = vmatmul.bf16.gmra.mxu0 %v748
      %v999 = vpop.f32.mrf.mxu0
      %v1000 = vadd.f32 %v329, %v999
      %v1001 = vpop.f32.mrf.mxu0
      %v1002 = vadd.f32 %v329, %v1001
      %1003 = vmatmul.bf16.gmra.mxu0 %v751
      %v1004 = vpop.f32.mrf.mxu0
      %v1005 = vadd.f32 %v329, %v1004
      %v1006 = vpop.f32.mrf.mxu0
      %v1007 = vadd.f32 %v329, %v1006
      %1008 = vmatmul.bf16.gmra.mxu0 %v754
      %v1009 = vpop.f32.mrf.mxu0
      %v1010 = vadd.f32 %v329, %v1009
      %v1011 = vpop.f32.mrf.mxu0
      %v1012 = vadd.f32 %v329, %v1011
      %1013 = vmatmul.bf16.gmra.mxu0 %v757
      %v1014 = vpop.f32.mrf.mxu0
      %v1015 = vadd.f32 %v329, %v1014
      %v1016 = vpop.f32.mrf.mxu0
      %v1017 = vadd.f32 %v329, %v1016
      %1018 = vmatmul.bf16.gmra.mxu0 %v760
      %v1019 = vpop.f32.mrf.mxu0
      %v1020 = vadd.f32 %v329, %v1019
      %v1021 = vpop.f32.mrf.mxu0
      %v1022 = vadd.f32 %v329, %v1021
      %1023 = vmatmul.bf16.gmra.mxu0 %v763
      %v1024 = vpop.f32.mrf.mxu0
      %v1025 = vadd.f32 %v329, %v1024
      %v1026 = vpop.f32.mrf.mxu0
      %v1027 = vadd.f32 %v329, %v1026
      %1028 = vmatmul.bf16.gmra.mxu0 %v766
      %v1029 = vpop.f32.mrf.mxu0
      %v1030 = vadd.f32 %v329, %v1029
      %v1031 = vpop.f32.mrf.mxu0
      %v1032 = vadd.f32 %v329, %v1031
      %1033 = vmatmul.bf16.gmra.mxu0 %v769
      %v1034 = vpop.f32.mrf.mxu0
      %v1035 = vadd.f32 %v329, %v1034
      %v1036 = vpop.f32.mrf.mxu0
      %v1037 = vadd.f32 %v329, %v1036
      %1038 = vmatmul.bf16.gmra.mxu0 %v772
      %v1039 = vpop.f32.mrf.mxu0
      %v1040 = vadd.f32 %v329, %v1039
      %v1041 = vpop.f32.mrf.mxu0
      %v1042 = vadd.f32 %v329, %v1041
      %1043 = vmatmul.bf16.gmra.mxu0 %v775
      %v1044 = vpop.f32.mrf.mxu0
      %v1045 = vadd.f32 %v329, %v1044
      %v1046 = vpop.f32.mrf.mxu0
      %v1047 = vadd.f32 %v329, %v1046
      %1048 = vmatmul.bf16.gmra.mxu0 %v778
      %v1049 = vpop.f32.mrf.mxu0
      %v1050 = vadd.f32 %v329, %v1049
      %v1051 = vpop.f32.mrf.mxu0
      %v1052 = vadd.f32 %v329, %v1051
      %1053 = vmatmul.bf16.gmra.mxu0 %v781
      %v1054 = vpop.f32.mrf.mxu0
      %v1055 = vadd.f32 %v329, %v1054
      %v1056 = vpop.f32.mrf.mxu0
      %v1057 = vadd.f32 %v329, %v1056
      %1058 = vmatmul.bf16.gmra.mxu0 %v784
      %v1059 = vpop.f32.mrf.mxu0
      %v1060 = vadd.f32 %v329, %v1059
      %v1061 = vpop.f32.mrf.mxu0
      %v1062 = vadd.f32 %v329, %v1061
      %1063 = vmatmul.bf16.gmra.mxu0 %v787
      %v1064 = vpop.f32.mrf.mxu0
      %v1065 = vadd.f32 %v329, %v1064
      %v1066 = vpop.f32.mrf.mxu0
      %v1067 = vadd.f32 %v329, %v1066
      %1068 = vmatmul.bf16.gmra.mxu0 %v790
      %v1069 = vpop.f32.mrf.mxu0
      %v1070 = vadd.f32 %v329, %v1069
      %v1071 = vpop.f32.mrf.mxu0
      %v1072 = vadd.f32 %v329, %v1071
      %1073 = vmatmul.bf16.gmra.mxu0 %v793
      %v1074 = vpop.f32.mrf.mxu0
      %v1075 = vadd.f32 %v329, %v1074
      %v1076 = vpop.f32.mrf.mxu0
      %v1077 = vadd.f32 %v329, %v1076
      %1078 = vmatmul.bf16.gmra.mxu0 %v796
      %v1079 = vpop.f32.mrf.mxu0
      %v1080 = vadd.f32 %v329, %v1079
      %v1081 = vpop.f32.mrf.mxu0
      %v1082 = vadd.f32 %v329, %v1081
      %1083 = vmatmul.bf16.gmra.mxu0 %v799
      %v1084 = vpop.f32.mrf.mxu0
      %v1085 = vadd.f32 %v329, %v1084
      %v1086 = vpop.f32.mrf.mxu0
      %v1087 = vadd.f32 %v329, %v1086
      %1088 = vmatmul.bf16.gmra.mxu0 %v802
      %v1089 = vpop.f32.mrf.mxu0
      %v1090 = vadd.f32 %v329, %v1089
      %v1091 = vpop.f32.mrf.mxu0
      %v1092 = vadd.f32 %v329, %v1091
      %1093 = vmatmul.bf16.gmra.mxu0 %v805
      %v1094 = vpop.f32.mrf.mxu0
      %v1095 = vadd.f32 %v329, %v1094
      %v1096 = vpop.f32.mrf.mxu0
      %v1097 = vadd.f32 %v329, %v1096
      %1098 = vmatmul.bf16.gmra.mxu0 %v808
      %v1099 = vpop.f32.mrf.mxu0
      %v1100 = vadd.f32 %v329, %v1099
      %v1101 = vpop.f32.mrf.mxu0
      %1102 = vdwg.mxu0
      %v1103 = vmax.f32 %v820, 0.0
      %v1104 = vmax.f32 %v822, 0.0
      %v1105 = vmax.f32 %v825, 0.0
      %v1106 = vmax.f32 %v827, 0.0
      %v1107 = vmax.f32 %v830, 0.0
      %v1108 = vmax.f32 %v832, 0.0
      %v1109 = vmax.f32 %v835, 0.0
      %v1110 = vmax.f32 %v837, 0.0
      %v1111 = vmax.f32 %v840, 0.0
      %v1112 = vmax.f32 %v842, 0.0
      %v1113 = vmax.f32 %v845, 0.0
      %v1114 = vmax.f32 %v847, 0.0
      %v1115 = vmax.f32 %v850, 0.0
      %v1116 = vmax.f32 %v852, 0.0
      %v1117 = vmax.f32 %v855, 0.0
      %v1118 = vmax.f32 %v857, 0.0
      %v1119 = vmax.f32 %v860, 0.0
      %v1120 = vmax.f32 %v862, 0.0
      %v1121 = vmax.f32 %v865, 0.0
      %v1122 = vmax.f32 %v867, 0.0
      %v1123 = vmax.f32 %v870, 0.0
      %v1124 = vmax.f32 %v872, 0.0
      %v1125 = vmax.f32 %v875, 0.0
      %v1126 = vmax.f32 %v877, 0.0
      %v1127 = vmax.f32 %v880, 0.0
      %v1128 = vmax.f32 %v882, 0.0
      %v1129 = vmax.f32 %v885, 0.0
      %v1130 = vmax.f32 %v887, 0.0
      %v1131 = vmax.f32 %v890, 0.0
      %v1132 = vmax.f32 %v892, 0.0
      %v1133 = vmax.f32 %v895, 0.0
      %v1134 = vmax.f32 %v897, 0.0
      %v1135 = vmax.f32 %v900, 0.0
      %v1136 = vmax.f32 %v902, 0.0
      %v1137 = vmax.f32 %v905, 0.0
      %v1138 = vmax.f32 %v907, 0.0
      %v1139 = vmax.f32 %v910, 0.0
      %v1140 = vmax.f32 %v912, 0.0
      %v1141 = vmax.f32 %v915, 0.0
      %v1142 = vmax.f32 %v917, 0.0
      %v1143 = vmax.f32 %v920, 0.0
      %v1144 = vmax.f32 %v922, 0.0
      %v1145 = vmax.f32 %v925, 0.0
      %v1146 = vmax.f32 %v927, 0.0
      %v1147 = vmax.f32 %v930, 0.0
      %v1148 = vmax.f32 %v932, 0.0
      %v1149 = vmax.f32 %v935, 0.0
      %v1150 = vmax.f32 %v937, 0.0
      %v1151 = vmax.f32 %v940, 0.0
      %v1152 = vmax.f32 %v942, 0.0
      %v1153 = vmax.f32 %v945, 0.0
      %v1154 = vmax.f32 %v947, 0.0
      %v1155 = vmax.f32 %v950, 0.0
      %v1156 = vmax.f32 %v952, 0.0
      %v1157 = vmax.f32 %v955, 0.0
      %v1158 = vmax.f32 %v957, 0.0
      %v1159 = vmax.f32 %v960, 0.0
      %v1160 = vmax.f32 %v962, 0.0
      %v1161 = vmax.f32 %v965, 0.0
      %v1162 = vmax.f32 %v967, 0.0
      %v1163 = vmax.f32 %v970, 0.0
      %v1164 = vmax.f32 %v972, 0.0
      %v1165 = vmax.f32 %v975, 0.0
      %v1166 = vmax.f32 %v977, 0.0
      %v1167 = vmax.f32 %v980, 0.0
      %v1168 = vmax.f32 %v982, 0.0
      %v1169 = vmax.f32 %v985, 0.0
      %v1170 = vmax.f32 %v987, 0.0
      %v1171 = vmax.f32 %v990, 0.0
      %v1172 = vmax.f32 %v992, 0.0
      %v1173 = vmax.f32 %v995, 0.0
      %v1174 = vmax.f32 %v997, 0.0
      %v1175 = vmax.f32 %v1000, 0.0
      %v1176 = vmax.f32 %v1002, 0.0
      %v1177 = vmax.f32 %v1005, 0.0
      %v1178 = vmax.f32 %v1007, 0.0
      %v1179 = vmax.f32 %v1010, 0.0
      %v1180 = vmax.f32 %v1012, 0.0
      %v1181 = vmax.f32 %v1015, 0.0
      %v1182 = vmax.f32 %v1017, 0.0
      %v1183 = vmax.f32 %v1020, 0.0
      %v1184 = vmax.f32 %v1022, 0.0
      %v1185 = vmax.f32 %v1025, 0.0
      %v1186 = vmax.f32 %v1027, 0.0
      %v1187 = vmax.f32 %v1030, 0.0
      %v1188 = vmax.f32 %v1032, 0.0
      %v1189 = vmax.f32 %v1035, 0.0
      %v1190 = vmax.f32 %v1037, 0.0
      %v1191 = vmax.f32 %v1040, 0.0
      %v1192 = vmax.f32 %v1042, 0.0
      %v1193 = vmax.f32 %v1045, 0.0
      %v1194 = vmax.f32 %v1047, 0.0
      %v1195 = vmax.f32 %v1050, 0.0
      %v1196 = vmax.f32 %v1052, 0.0
      %v1197 = vmax.f32 %v1055, 0.0
      %v1198 = vmax.f32 %v1057, 0.0
      %v1199 = vmax.f32 %v1060, 0.0
      %v1200 = vmax.f32 %v1062, 0.0
      %v1201 = vmax.f32 %v1065, 0.0
      %v1202 = vmax.f32 %v1067, 0.0
      %v1203 = vmax.f32 %v1070, 0.0
      %v1204 = vmax.f32 %v1072, 0.0
      %v1205 = vmax.f32 %v1075, 0.0
      %v1206 = vmax.f32 %v1077, 0.0
      %v1207 = vmax.f32 %v1080, 0.0
      %v1208 = vmax.f32 %v1082, 0.0
      %v1209 = vmax.f32 %v1085, 0.0
      %v1210 = vmax.f32 %v1087, 0.0
      %v1211 = vmax.f32 %v1090, 0.0
      %v1212 = vmax.f32 %v1092, 0.0
      %v1213 = vmax.f32 %v1095, 0.0
      %v1214 = vmax.f32 %v1097, 0.0
      %v1215 = vmax.f32 %v1100, 0.0
      %v1216 = vpack.c.bf16 %v1103, %v1103
      %v1217 = vpack.c.bf16 %v1104, %v1104
      %v1218 = vpack.c.bf16 %v1105, %v1105
      %v1219 = vpack.c.bf16 %v1106, %v1106
      %v1220 = vpack.c.bf16 %v1107, %v1107
      %v1221 = vpack.c.bf16 %v1108, %v1108
      %v1222 = vpack.c.bf16 %v1109, %v1109
      %v1223 = vpack.c.bf16 %v1110, %v1110
      %v1224 = vpack.c.bf16 %v1111, %v1111
      %v1225 = vpack.c.bf16 %v1112, %v1112
      %v1226 = vpack.c.bf16 %v1113, %v1113
      %v1227 = vpack.c.bf16 %v1114, %v1114
      %v1228 = vpack.c.bf16 %v1115, %v1115
      %v1229 = vpack.c.bf16 %v1116, %v1116
      %v1230 = vpack.c.bf16 %v1117, %v1117
      %v1231 = vpack.c.bf16 %v1118, %v1118
      %v1232 = vpack.c.bf16 %v1119, %v1119
      %v1233 = vpack.c.bf16 %v1120, %v1120
      %v1234 = vpack.c.bf16 %v1121, %v1121
      %v1235 = vpack.c.bf16 %v1122, %v1122
      %v1236 = vpack.c.bf16 %v1123, %v1123
      %v1237 = vpack.c.bf16 %v1124, %v1124
      %v1238 = vpack.c.bf16 %v1125, %v1125
      %v1239 = vpack.c.bf16 %v1126, %v1126
      %v1240 = vpack.c.bf16 %v1127, %v1127
      %v1241 = vpack.c.bf16 %v1128, %v1128
      %v1242 = vpack.c.bf16 %v1129, %v1129
      %v1243 = vpack.c.bf16 %v1130, %v1130
      %v1244 = vpack.c.bf16 %v1131, %v1131
      %v1245 = vpack.c.bf16 %v1132, %v1132
      %v1246 = vpack.c.bf16 %v1133, %v1133
      %v1247 = vpack.c.bf16 %v1134, %v1134
      %v1248 = vpack.c.bf16 %v1135, %v1135
      %v1249 = vpack.c.bf16 %v1136, %v1136
      %v1250 = vpack.c.bf16 %v1137, %v1137
      %v1251 = vpack.c.bf16 %v1138, %v1138
      %v1252 = vpack.c.bf16 %v1139, %v1139
      %v1253 = vpack.c.bf16 %v1140, %v1140
      %v1254 = vpack.c.bf16 %v1141, %v1141
      %v1255 = vpack.c.bf16 %v1142, %v1142
      %v1256 = vpack.c.bf16 %v1143, %v1143
      %v1257 = vpack.c.bf16 %v1144, %v1144
      %v1258 = vpack.c.bf16 %v1145, %v1145
      %v1259 = vpack.c.bf16 %v1146, %v1146
      %v1260 = vpack.c.bf16 %v1147, %v1147
      %v1261 = vpack.c.bf16 %v1148, %v1148
      %v1262 = vpack.c.bf16 %v1149, %v1149
      %v1263 = vpack.c.bf16 %v1150, %v1150
      %v1264 = vpack.c.bf16 %v1151, %v1151
      %v1265 = vpack.c.bf16 %v1152, %v1152
      %v1266 = vpack.c.bf16 %v1153, %v1153
      %v1267 = vpack.c.bf16 %v1154, %v1154
      %v1268 = vpack.c.bf16 %v1155, %v1155
      %v1269 = vpack.c.bf16 %v1156, %v1156
      %v1270 = vpack.c.bf16 %v1157, %v1157
      %v1271 = vpack.c.bf16 %v1158, %v1158
      %v1272 = vpack.c.bf16 %v1159, %v1159
      %v1273 = vpack.c.bf16 %v1160, %v1160
      %v1274 = vpack.c.bf16 %v1161, %v1161
      %v1275 = vpack.c.bf16 %v1162, %v1162
      %v1276 = vpack.c.bf16 %v1163, %v1163
      %v1277 = vpack.c.bf16 %v1164, %v1164
      %v1278 = vpack.c.bf16 %v1165, %v1165
      %v1279 = vpack.c.bf16 %v1166, %v1166
      %v1280 = vpack.c.bf16 %v1167, %v1167
      %v1281 = vpack.c.bf16 %v1168, %v1168
      %v1282 = vpack.c.bf16 %v1169, %v1169
      %v1283 = vpack.c.bf16 %v1170, %v1170
      %v1284 = vpack.c.bf16 %v1171, %v1171
      %v1285 = vpack.c.bf16 %v1172, %v1172
      %v1286 = vpack.c.bf16 %v1173, %v1173
      %v1287 = vpack.c.bf16 %v1174, %v1174
      %v1288 = vpack.c.bf16 %v1175, %v1175
      %v1289 = vpack.c.bf16 %v1176, %v1176
      %v1290 = vpack.c.bf16 %v1177, %v1177
      %v1291 = vpack.c.bf16 %v1178, %v1178
      %v1292 = vpack.c.bf16 %v1179, %v1179
      %v1293 = vpack.c.bf16 %v1180, %v1180
      %v1294 = vpack.c.bf16 %v1181, %v1181
      %v1295 = vpack.c.bf16 %v1182, %v1182
      %v1296 = vpack.c.bf16 %v1183, %v1183
      %v1297 = vpack.c.bf16 %v1184, %v1184
      %v1298 = vpack.c.bf16 %v1185, %v1185
      %v1299 = vpack.c.bf16 %v1186, %v1186
      %v1300 = vpack.c.bf16 %v1187, %v1187
      %v1301 = vpack.c.bf16 %v1188, %v1188
      %v1302 = vpack.c.bf16 %v1189, %v1189
      %v1303 = vpack.c.bf16 %v1190, %v1190
      %v1304 = vpack.c.bf16 %v1191, %v1191
      %v1305 = vpack.c.bf16 %v1192, %v1192
      %v1306 = vpack.c.bf16 %v1193, %v1193
      %v1307 = vpack.c.bf16 %v1194, %v1194
      %v1308 = vpack.c.bf16 %v1195, %v1195
      %v1309 = vpack.c.bf16 %v1196, %v1196
      %v1310 = vpack.c.bf16 %v1197, %v1197
      %v1311 = vpack.c.bf16 %v1198, %v1198
      %v1312 = vpack.c.bf16 %v1199, %v1199
      %v1313 = vpack.c.bf16 %v1200, %v1200
      %v1314 = vpack.c.bf16 %v1201, %v1201
      %v1315 = vpack.c.bf16 %v1202, %v1202
      %v1316 = vpack.c.bf16 %v1203, %v1203
      %v1317 = vpack.c.bf16 %v1204, %v1204
      %v1318 = vpack.c.bf16 %v1205, %v1205
      %v1319 = vpack.c.bf16 %v1206, %v1206
      %v1320 = vpack.c.bf16 %v1207, %v1207
      %v1321 = vpack.c.bf16 %v1208, %v1208
      %v1322 = vpack.c.bf16 %v1209, %v1209
      %v1323 = vpack.c.bf16 %v1210, %v1210
      %v1324 = vpack.c.bf16 %v1211, %v1211
      %v1325 = vpack.c.bf16 %v1212, %v1212
      %v1326 = vpack.c.bf16 %v1213, %v1213
      %v1327 = vpack.c.bf16 %v1214, %v1214
      %v1328 = vpack.c.bf16 %v1215, %v1215
      %vm1329 = vcmask 257024
      %1330 = vst.msk [vmem:[%s204] sm:$0xf] %vm1329, %v1216
      %1331 = vst.msk [vmem:[%s204 + $0x4] sm:$0xf] %vm1329, %v1217
      %1332 = vst.msk [vmem:[%s204 + $0x8] sm:$0xf] %vm1329, %v1218
      %1333 = vst.msk [vmem:[%s204 + $0xc] sm:$0xf] %vm1329, %v1219
      %1334 = vst.msk [vmem:[%s204 + $0x10] sm:$0xf] %vm1329, %v1220
      %1335 = vst.msk [vmem:[%s204 + $0x14] sm:$0xf] %vm1329, %v1221
      %1336 = vst.msk [vmem:[%s204 + $0x18] sm:$0xf] %vm1329, %v1222
      %1337 = vst.msk [vmem:[%s204 + $0x1c] sm:$0xf] %vm1329, %v1223
      %1338 = vst.msk [vmem:[%s204 + $0x20] sm:$0xf] %vm1329, %v1224
      %1339 = vst.msk [vmem:[%s204 + $0x24] sm:$0xf] %vm1329, %v1225
      %1340 = vst.msk [vmem:[%s204 + $0x28] sm:$0xf] %vm1329, %v1226
      %1341 = vst.msk [vmem:[%s204 + $0x2c] sm:$0xf] %vm1329, %v1227
      %1342 = vst.msk [vmem:[%s204 + $0x30] sm:$0xf] %vm1329, %v1228
      %1343 = vst.msk [vmem:[%s204 + $0x34] sm:$0xf] %vm1329, %v1229
      %1344 = vst.msk [vmem:[%s204 + $0x38] sm:$0xf] %vm1329, %v1230
      %1345 = vst.msk [vmem:[%s204 + $0x3c] sm:$0xf] %vm1329, %v1231
      %1346 = vst.msk [vmem:[%s204 + $0x40] sm:$0xf] %vm1329, %v1232
      %1347 = vst.msk [vmem:[%s204 + $0x44] sm:$0xf] %vm1329, %v1233
      %1348 = vst.msk [vmem:[%s204 + $0x48] sm:$0xf] %vm1329, %v1234
      %1349 = vst.msk [vmem:[%s204 + $0x4c] sm:$0xf] %vm1329, %v1235
      %1350 = vst.msk [vmem:[%s204 + $0x50] sm:$0xf] %vm1329, %v1236
      %1351 = vst.msk [vmem:[%s204 + $0x54] sm:$0xf] %vm1329, %v1237
      %1352 = vst.msk [vmem:[%s204 + $0x58] sm:$0xf] %vm1329, %v1238
      %1353 = vst.msk [vmem:[%s204 + $0x5c] sm:$0xf] %vm1329, %v1239
      %1354 = vst.msk [vmem:[%s204 + $0x60] sm:$0xf] %vm1329, %v1240
      %1355 = vst.msk [vmem:[%s204 + $0x64] sm:$0xf] %vm1329, %v1241
      %1356 = vst.msk [vmem:[%s204 + $0x68] sm:$0xf] %vm1329, %v1242
      %1357 = vst.msk [vmem:[%s204 + $0x6c] sm:$0xf] %vm1329, %v1243
      %1358 = vst.msk [vmem:[%s204 + $0x70] sm:$0xf] %vm1329, %v1244
      %1359 = vst.msk [vmem:[%s204 + $0x74] sm:$0xf] %vm1329, %v1245
      %1360 = vst.msk [vmem:[%s204 + $0x78] sm:$0xf] %vm1329, %v1246
      %1361 = vst.msk [vmem:[%s204 + $0x7c] sm:$0xf] %vm1329, %v1247
      %1362 = vst.msk [vmem:[%s204 + $0x80] sm:$0xf] %vm1329, %v1248
      %1363 = vst.msk [vmem:[%s204 + $0x84] sm:$0xf] %vm1329, %v1249
      %1364 = vst.msk [vmem:[%s204 + $0x88] sm:$0xf] %vm1329, %v1250
      %1365 = vst.msk [vmem:[%s204 + $0x8c] sm:$0xf] %vm1329, %v1251
      %1366 = vst.msk [vmem:[%s204 + $0x90] sm:$0xf] %vm1329, %v1252
      %1367 = vst.msk [vmem:[%s204 + $0x94] sm:$0xf] %vm1329, %v1253
      %1368 = vst.msk [vmem:[%s204 + $0x98] sm:$0xf] %vm1329, %v1254
      %1369 = vst.msk [vmem:[%s204 + $0x9c] sm:$0xf] %vm1329, %v1255
      %1370 = vst.msk [vmem:[%s204 + $0xa0] sm:$0xf] %vm1329, %v1256
      %1371 = vst.msk [vmem:[%s204 + $0xa4] sm:$0xf] %vm1329, %v1257
      %1372 = vst.msk [vmem:[%s204 + $0xa8] sm:$0xf] %vm1329, %v1258
      %1373 = vst.msk [vmem:[%s204 + $0xac] sm:$0xf] %vm1329, %v1259
      %1374 = vst.msk [vmem:[%s204 + $0xb0] sm:$0xf] %vm1329, %v1260
      %1375 = vst.msk [vmem:[%s204 + $0xb4] sm:$0xf] %vm1329, %v1261
      %1376 = vst.msk [vmem:[%s204 + $0xb8] sm:$0xf] %vm1329, %v1262
      %1377 = vst.msk [vmem:[%s204 + $0xbc] sm:$0xf] %vm1329, %v1263
      %1378 = vst.msk [vmem:[%s204 + $0xc0] sm:$0xf] %vm1329, %v1264
      %1379 = vst.msk [vmem:[%s204 + $0xc4] sm:$0xf] %vm1329, %v1265
      %1380 = vst.msk [vmem:[%s204 + $0xc8] sm:$0xf] %vm1329, %v1266
      %1381 = vst.msk [vmem:[%s204 + $0xcc] sm:$0xf] %vm1329, %v1267
      %1382 = vst.msk [vmem:[%s204 + $0xd0] sm:$0xf] %vm1329, %v1268
      %1383 = vst.msk [vmem:[%s204 + $0xd4] sm:$0xf] %vm1329, %v1269
      %1384 = vst.msk [vmem:[%s204 + $0xd8] sm:$0xf] %vm1329, %v1270
      %1385 = vst.msk [vmem:[%s204 + $0xdc] sm:$0xf] %vm1329, %v1271
      %1386 = vst.msk [vmem:[%s204 + $0xe0] sm:$0xf] %vm1329, %v1272
      %1387 = vst.msk [vmem:[%s204 + $0xe4] sm:$0xf] %vm1329, %v1273
      %1388 = vst.msk [vmem:[%s204 + $0xe8] sm:$0xf] %vm1329, %v1274
      %1389 = vst.msk [vmem:[%s204 + $0xec] sm:$0xf] %vm1329, %v1275
      %1390 = vst.msk [vmem:[%s204 + $0xf0] sm:$0xf] %vm1329, %v1276
      %1391 = vst.msk [vmem:[%s204 + $0xf4] sm:$0xf] %vm1329, %v1277
      %1392 = vst.msk [vmem:[%s204 + $0xf8] sm:$0xf] %vm1329, %v1278
      %1393 = vst.msk [vmem:[%s204 + $0xfc] sm:$0xf] %vm1329, %v1279
      %1394 = vst.msk [vmem:[%s204 + $0x100] sm:$0xf] %vm1329, %v1280
      %1395 = vst.msk [vmem:[%s204 + $0x104] sm:$0xf] %vm1329, %v1281
      %1396 = vst.msk [vmem:[%s204 + $0x108] sm:$0xf] %vm1329, %v1282
      %1397 = vst.msk [vmem:[%s204 + $0x10c] sm:$0xf] %vm1329, %v1283
      %1398 = vst.msk [vmem:[%s204 + $0x110] sm:$0xf] %vm1329, %v1284
      %1399 = vst.msk [vmem:[%s204 + $0x114] sm:$0xf] %vm1329, %v1285
      %1400 = vst.msk [vmem:[%s204 + $0x118] sm:$0xf] %vm1329, %v1286
      %1401 = vst.msk [vmem:[%s204 + $0x11c] sm:$0xf] %vm1329, %v1287
      %1402 = vst.msk [vmem:[%s204 + $0x120] sm:$0xf] %vm1329, %v1288
      %1403 = vst.msk [vmem:[%s204 + $0x124] sm:$0xf] %vm1329, %v1289
      %1404 = vst.msk [vmem:[%s204 + $0x128] sm:$0xf] %vm1329, %v1290
      %1405 = vst.msk [vmem:[%s204 + $0x12c] sm:$0xf] %vm1329, %v1291
      %1406 = vst.msk [vmem:[%s204 + $0x130] sm:$0xf] %vm1329, %v1292
      %1407 = vst.msk [vmem:[%s204 + $0x134] sm:$0xf] %vm1329, %v1293
      %1408 = vst.msk [vmem:[%s204 + $0x138] sm:$0xf] %vm1329, %v1294
      %1409 = vst.msk [vmem:[%s204 + $0x13c] sm:$0xf] %vm1329, %v1295
      %1410 = vst.msk [vmem:[%s204 + $0x140] sm:$0xf] %vm1329, %v1296
      %1411 = vst.msk [vmem:[%s204 + $0x144] sm:$0xf] %vm1329, %v1297
      %1412 = vst.msk [vmem:[%s204 + $0x148] sm:$0xf] %vm1329, %v1298
      %1413 = vst.msk [vmem:[%s204 + $0x14c] sm:$0xf] %vm1329, %v1299
      %1414 = vst.msk [vmem:[%s204 + $0x150] sm:$0xf] %vm1329, %v1300
      %1415 = vst.msk [vmem:[%s204 + $0x154] sm:$0xf] %vm1329, %v1301
      %1416 = vst.msk [vmem:[%s204 + $0x158] sm:$0xf] %vm1329, %v1302
      %1417 = vst.msk [vmem:[%s204 + $0x15c] sm:$0xf] %vm1329, %v1303
      %1418 = vst.msk [vmem:[%s204 + $0x160] sm:$0xf] %vm1329, %v1304
      %1419 = vst.msk [vmem:[%s204 + $0x164] sm:$0xf] %vm1329, %v1305
      %1420 = vst.msk [vmem:[%s204 + $0x168] sm:$0xf] %vm1329, %v1306
      %1421 = vst.msk [vmem:[%s204 + $0x16c] sm:$0xf] %vm1329, %v1307
      %1422 = vst.msk [vmem:[%s204 + $0x170] sm:$0xf] %vm1329, %v1308
      %1423 = vst.msk [vmem:[%s204 + $0x174] sm:$0xf] %vm1329, %v1309
      %1424 = vst.msk [vmem:[%s204 + $0x178] sm:$0xf] %vm1329, %v1310
      %1425 = vst.msk [vmem:[%s204 + $0x17c] sm:$0xf] %vm1329, %v1311
      %1426 = vst.msk [vmem:[%s204 + $0x180] sm:$0xf] %vm1329, %v1312
      %1427 = vst.msk [vmem:[%s204 + $0x184] sm:$0xf] %vm1329, %v1313
      %1428 = vst.msk [vmem:[%s204 + $0x188] sm:$0xf] %vm1329, %v1314
      %1429 = vst.msk [vmem:[%s204 + $0x18c] sm:$0xf] %vm1329, %v1315
      %1430 = vst.msk [vmem:[%s204 + $0x190] sm:$0xf] %vm1329, %v1316
      %1431 = vst.msk [vmem:[%s204 + $0x194] sm:$0xf] %vm1329, %v1317
      %1432 = vst.msk [vmem:[%s204 + $0x198] sm:$0xf] %vm1329, %v1318
      %1433 = vst.msk [vmem:[%s204 + $0x19c] sm:$0xf] %vm1329, %v1319
      %1434 = vst.msk [vmem:[%s204 + $0x1a0] sm:$0xf] %vm1329, %v1320
      %1435 = vst.msk [vmem:[%s204 + $0x1a4] sm:$0xf] %vm1329, %v1321
      %1436 = vst.msk [vmem:[%s204 + $0x1a8] sm:$0xf] %vm1329, %v1322
      %1437 = vst.msk [vmem:[%s204 + $0x1ac] sm:$0xf] %vm1329, %v1323
      %1438 = vst.msk [vmem:[%s204 + $0x1b0] sm:$0xf] %vm1329, %v1324
      %1439 = vst.msk [vmem:[%s204 + $0x1b4] sm:$0xf] %vm1329, %v1325
      %1440 = vst.msk [vmem:[%s204 + $0x1b8] sm:$0xf] %vm1329, %v1326
      %1441 = vst.msk [vmem:[%s204 + $0x1bc] sm:$0xf] %vm1329, %v1327
      %vm1442 = vcmask 254976
      %1443 = vst.msk [vmem:[%s204 + $0x1c0] sm:$0x3] %vm1442, %v1328
      %p1444 = scmp.lt.s32.totalorder %s14, 1
      %s1445 = scalar_select %p1444, %s14, 1
      %s1446 = smul.addr %s1445, 113
      %s1447 = smul.addr %s1446, 4
      %s1448 = scalar_lea.vmem %s3, %s1447
      // Predicated region
      $region33: #{forward.4} parent=31 // pred_check
        %p1449 = pneg %p110
      $region34: #{forward.4} parent=31 // pred_check_branch
        %1451 = sbr.rel (%p1449) target = $region36
      $region35: #{forward.4} parent=31 // pred_region
        _
      $region36: #{forward.4} parent=31 // pred_fallthru
        _
    $region32: #{forward.4} parent=5 // pred_fallthru
      _
    %p1452 = scmp.le.s32.totalorder 2, %s9
    // Predicated region
    $region37: #{forward.4} parent=5 // pred_check
      %p1453 = pneg %p1452
    $region38: #{forward.4} parent=5 // pred_check_branch
      %1455 = sbr.rel (%p1453) target = $region40
    $region39: #{forward.4} parent=5 // pred_region
      %s1456 = ssub.s32 %s9, 2
      // Predicated region
      $region41: #{forward.4} parent=39 // pred_check
        %p1457 = pneg %p116
      $region42: #{forward.4} parent=39 // pred_check_branch
        %1459 = sbr.rel (%p1457) target = $region44
      $region43: #{forward.4} parent=39 // pred_region
        %p1460 = scmp.lt.s32.totalorder %s15, 1
        %s1461 = scalar_select %p1460, %s15, 1
        %s1462 = smul.addr %s1461, 113
        %s1463 = smul.addr %s1462, 4
        %s1464 = scalar_lea.vmem %s3, %s1463
      $region44: #{forward.4} parent=39 // pred_fallthru
        _
    $region40: #{forward.4} parent=5 // pred_fallthru
      _
  $region6: #{forward.4} parent=0 // loop_footer
    %s13 = sadd.s32 1, %s9
  $region7: #{forward.4} parent=0 // loop_footer_branch
    %8 = sbr.rel target = $region3
  $region8: #{forward.4} parent=0 // loop_exit
    _

// kernel: forward.5
$region0: #{forward.5}
  #allocation0 [shape = 'u32[]', space=smem, size = 0x4, offset = 0x4, fixed_abs, tag = 'smem constant byte address 0x4 - core index']
  #allocation1 [shape = 'u32[72,128]{1,0:T(1,128)}', space=vmem, size = 0x9000, scoped, tag = 'internal scratch']
  %s0 = inlined_call_operand.vmem [shape: bf16[2,144,512], index: 0, kind: input, shape index: {}]
  %s1 = inlined_call_operand.vmem [shape: bf16[2,512,64], index: 1, kind: input, shape index: {}]
  %s2 = inlined_call_operand.vmem [shape: f32[2,1,64], index: 2, kind: input, shape index: {}]
  %s3 = inlined_call_operand.vmem [shape: bf16[2,144,64], index: 3, kind: output, shape index: {}]
  %s4 = sld [smem:[#allocation0]]
  $region45: #{forward.5} parent=0
    _
  %s6 = ssub.s32 1, %s4
  %s7 = scalar_select 0, %s6, %s4
  loop: start=0, step=1, limit=4
  $region2: #{forward.5} parent=0 // loop_pre_header
    _
  $region3: #{forward.5} parent=0 // loop_header
    %s9 = sphi 0, %s13
    %p10 = scmp.ge.s32.totalorder %s9, 4
    %s19 = sphi 0, %s21
    %s22 = sphi 0, %s19
    %s23 = sphi 0, %s22
    %s39 = sphi 0, %s23
    %s45 = sphi 0, %s47
    %s48 = sphi 0, %s45
    %s49 = sphi 0, %s48
    %s65 = sphi 0, %s49
    %s71 = sphi 0, %s73
    %s74 = sphi 0, %s71
    %s75 = sphi 0, %s74
    %s91 = sphi 0, %s75
    %s97 = sphi 0, %s99
    %s100 = sphi 0, %s97
    %s101 = sphi 0, %s100
    %s117 = sphi 0, %s101
  $region4: #{forward.5} parent=0 // loop_header_branch
    %12 = sbr.rel (%p10) target = $region8
  $region5: #{forward.5} parent=0 // loop_body
    %s14 = ssub.s32 %s9, 1
    %s15 = ssub.s32 %s9, 2
    %s16 = sadd.s32 %s9, 1
    %s17 = ssub.s32 %s9, %s16
    %p18 = scmp.eq.s32.totalorder %s17, 0
    %s20 = sadd.s32 %s19, 1
    %s21 = scalar_select %p18, %s19, %s20
    %p24 = pneg %p18
    %p25 = scmp.eq.s32.totalorder %s9, 1
    %p26 = por %p24, %p25
    %p27 = scmp.ne.s32.totalorder %s19, %s22
    %p28 = scmp.eq.s32.totalorder %s9, 0
    %p29 = por %p27, %p28
    %p30 = scmp.ne.s32.totalorder %s19, %s22
    %p31 = scmp.eq.s32.totalorder %s14, 1
    %p32 = por %p30, %p31
    %p33 = scmp.ne.s32.totalorder %s22, %s23
    %p34 = scmp.eq.s32.totalorder %s14, 0
    %p35 = por %p33, %p34
    %p36 = scmp.ne.s32.totalorder %s22, %s23
    %p37 = scmp.eq.s32.totalorder %s15, 1
    %p38 = por %p36, %p37
    %p40 = scmp.ne.s32.totalorder %s23, %s39
    %p41 = scmp.eq.s32.totalorder %s15, 0
    %p42 = por %p40, %p41
    %s43 = ssub.s32 %s9, %s16
    %p44 = scmp.eq.s32.totalorder %s43, 0
    %s46 = sadd.s32 %s45, 1
    %s47 = scalar_select %p44, %s45, %s46
    %p50 = pneg %p44
    %p51 = scmp.eq.s32.totalorder %s9, 1
    %p52 = por %p50, %p51
    %p53 = scmp.ne.s32.totalorder %s45, %s48
    %p54 = scmp.eq.s32.totalorder %s9, 0
    %p55 = por %p53, %p54
    %p56 = scmp.ne.s32.totalorder %s45, %s48
    %p57 = scmp.eq.s32.totalorder %s14, 1
    %p58 = por %p56, %p57
    %p59 = scmp.ne.s32.totalorder %s48, %s49
    %p60 = scmp.eq.s32.totalorder %s14, 0
    %p61 = por %p59, %p60
    %p62 = scmp.ne.s32.totalorder %s48, %s49
    %p63 = scmp.eq.s32.totalorder %s15, 1
    %p64 = por %p62, %p63
    %p66 = scmp.ne.s32.totalorder %s49, %s65
    %p67 = scmp.eq.s32.totalorder %s15, 0
    %p68 = por %p66, %p67
    %s69 = ssub.s32 %s9, %s16
    %p70 = scmp.eq.s32.totalorder %s69, 0
    %s72 = sadd.s32 %s71, 1
    %s73 = scalar_select %p70, %s71, %s72
    %p76 = pneg %p70
    %p77 = scmp.eq.s32.totalorder %s9, 1
    %p78 = por %p76, %p77
    %p79 = scmp.ne.s32.totalorder %s71, %s74
    %p80 = scmp.eq.s32.totalorder %s9, 0
    %p81 = por %p79, %p80
    %p82 = scmp.ne.s32.totalorder %s71, %s74
    %p83 = scmp.eq.s32.totalorder %s14, 1
    %p84 = por %p82, %p83
    %p85 = scmp.ne.s32.totalorder %s74, %s75
    %p86 = scmp.eq.s32.totalorder %s14, 0
    %p87 = por %p85, %p86
    %p88 = scmp.ne.s32.totalorder %s74, %s75
    %p89 = scmp.eq.s32.totalorder %s15, 1
    %p90 = por %p88, %p89
    %p92 = scmp.ne.s32.totalorder %s75, %s91
    %p93 = scmp.eq.s32.totalorder %s15, 0
    %p94 = por %p92, %p93
    %s95 = ssub.s32 %s9, %s16
    %p96 = scmp.eq.s32.totalorder %s95, 0
    %s98 = sadd.s32 %s97, 1
    %s99 = scalar_select %p96, %s97, %s98
    %p102 = pneg %p96
    %p103 = scmp.eq.s32.totalorder %s9, 1
    %p104 = por %p102, %p103
    %p105 = scmp.ne.s32.totalorder %s97, %s100
    %p106 = scmp.eq.s32.totalorder %s9, 0
    %p107 = por %p105, %p106
    %p108 = scmp.ne.s32.totalorder %s97, %s100
    %p109 = scmp.eq.s32.totalorder %s14, 1
    %p110 = por %p108, %p109
    %p111 = scmp.ne.s32.totalorder %s100, %s101
    %p112 = scmp.eq.s32.totalorder %s14, 0
    %p113 = por %p111, %p112
    %p114 = scmp.ne.s32.totalorder %s100, %s101
    %p115 = scmp.eq.s32.totalorder %s15, 1
    %p116 = por %p114, %p115
    %p118 = scmp.ne.s32.totalorder %s101, %s117
    %p119 = scmp.eq.s32.totalorder %s15, 0
    %p120 = por %p118, %p119
    %p121 = scmp.le.s32.totalorder 1, %s9
    %p122 = scmp.lt.s32.totalorder %s9, 3
    %p123 = pnand %p121, %p122
    %p124 = pneg %p123
    // Predicated region
    $region9: #{forward.5} parent=5 // pred_check
      _
    $region10: #{forward.5} parent=5 // pred_check_branch
      %126 = sbr.rel (%p123) target = $region12
    $region11: #{forward.5} parent=5 // pred_region
      %s127 = ssub.s32 %s9, 1
    $region12: #{forward.5} parent=5 // pred_fallthru
      _
    %p128 = scmp.lt.s32.totalorder %s9, 2
    // Predicated region
    $region13: #{forward.5} parent=5 // pred_check
      %p129 = pneg %p128
    $region14: #{forward.5} parent=5 // pred_check_branch
      %131 = sbr.rel (%p129) target = $region16
    $region15: #{forward.5} parent=5 // pred_region
      // Predicated region
      $region17: #{forward.5} parent=15 // pred_check
        %p132 = pneg %p29
      $region18: #{forward.5} parent=15 // pred_check_branch
        %134 = sbr.rel (%p132) target = $region20
      $region19: #{forward.5} parent=15 // pred_region
        %p135 = scmp.lt.s32.totalorder %s9, 1
        %s136 = scalar_select %p135, %s9, 1
        %s137 = smul.addr %s136, 72
        %s138 = smul.addr %s137, 4
        %s139 = scalar_lea.vmem %s0, %s138
      $region20: #{forward.5} parent=15 // pred_fallthru
        _
      // Predicated region
      $region21: #{forward.5} parent=15 // pred_check
        %p140 = pneg %p55
      $region22: #{forward.5} parent=15 // pred_check_branch
        %142 = sbr.rel (%p140) target = $region24
      $region23: #{forward.5} parent=15 // pred_region
        %p143 = scmp.lt.s32.totalorder %s9, 1
        %s144 = scalar_select %p143, %s9, 1
        %s145 = smul.addr %s144, 64
        %s146 = smul.addr %s145, 4
        %s147 = scalar_lea.vmem %s1, %s146
      $region24: #{forward.5} parent=15 // pred_fallthru
        _
      // Predicated region
      $region25: #{forward.5} parent=15 // pred_check
        %p148 = pneg %p81
      $region26: #{forward.5} parent=15 // pred_check_branch
        %150 = sbr.rel (%p148) target = $region28
      $region27: #{forward.5} parent=15 // pred_region
        %p151 = scmp.lt.s32.totalorder %s9, 1
        %s152 = scalar_select %p151, %s9, 1
        %s153 = scalar_lea.vmem %s2, %s152
      $region28: #{forward.5} parent=15 // pred_fallthru
        _
    $region16: #{forward.5} parent=5 // pred_fallthru
      _
    %p154 = scmp.le.s32.totalorder 1, %s9
    %p155 = scmp.lt.s32.totalorder %s9, 3
    %p156 = pnand %p154, %p155
    %p157 = pneg %p156
    // Predicated region
    $region29: #{forward.5} parent=5 // pred_check
      _
    $region30: #{forward.5} parent=5 // pred_check_branch
      %159 = sbr.rel (%p156) target = $region32
    $region31: #{forward.5} parent=5 // pred_region
      %s160 = ssub.s32 %s9, 1
      %p161 = scmp.lt.s32.totalorder %s14, 1
      %s162 = scalar_select %p161, %s14, 1
      %s163 = smul.addr %s162, 72
      %s164 = smul.addr %s163, 4
      %s165 = scalar_lea.vmem %s0, %s164
      %p166 = pneg %p35
      %p167 = pneg %p32
      %p168 = scmp.lt.s32.totalorder %s14, 1
      %s169 = scalar_select %p168, %s14, 1
      %s170 = smul.addr %s169, 64
      %s171 = smul.addr %s170, 4
      %s172 = scalar_lea.vmem %s1, %s171
      %p173 = pneg %p61
      %p174 = pneg %p58
      %p175 = scmp.lt.s32.totalorder %s14, 1
      %s176 = scalar_select %p175, %s14, 1
      %s177 = scalar_lea.vmem %s2, %s176
      %p178 = pneg %p87
      %p179 = pneg %p84
      %p180 = pneg %p113
      %p181 = pneg %p110
      %p182 = scmp.lt.s32.totalorder %s14, 1
      %s183 = scalar_select %p182, %s14, 1
      %s184 = smul.addr %s183, 18
      %s185 = smul.addr %s184, 4
      %s186 = scalar_lea.vmem %s3, %s185
      %p187 = scmp.lt.s32.totalorder %s14, 1
      %s188 = scalar_select %p187, %s14, 1
      %s189 = smul.addr %s188, 72
      %s190 = smul.addr %s189, 4
      %s191 = scalar_lea.vmem %s0, %s190
      %p192 = scmp.lt.s32.totalorder %s14, 1
      %s193 = scalar_select %p192, %s14, 1
      %s194 = smul.addr %s193, 64
      %s195 = smul.addr %s194, 4
      %s196 = scalar_lea.vmem %s1, %s195
      %p197 = scmp.lt.s32.totalorder %s14, 1
      %s198 = scalar_select %p197, %s14, 1
      %s199 = scalar_lea.vmem %s2, %s198
      %p200 = scmp.lt.s32.totalorder %s14, 1
      %s201 = scalar_select %p200, %s14, 1
      %s202 = smul.addr %s201, 18
      %s203 = smul.addr %s202, 4
      %s204 = scalar_lea.vmem %s3, %s203
      %v205 = vld [vmem:[%s191] sm:$0xff]
      %v206 = vld [vmem:[%s191 + $0x8] sm:$0xff]
      %v207 = vld [vmem:[%s191 + $0x10] sm:$0xff]
      %v208 = vld [vmem:[%s191 + $0x18] sm:$0xff]
      %v209 = vld [vmem:[%s191 + $0x20] sm:$0xff]
      %v210 = vld [vmem:[%s191 + $0x28] sm:$0xff]
      %v211 = vld [vmem:[%s191 + $0x30] sm:$0xff]
      %v212 = vld [vmem:[%s191 + $0x38] sm:$0xff]
      %v213 = vld [vmem:[%s191 + $0x40] sm:$0xff]
      %v214 = vld [vmem:[%s191 + $0x48] sm:$0xff]
      %v215 = vld [vmem:[%s191 + $0x50] sm:$0xff]
      %v216 = vld [vmem:[%s191 + $0x58] sm:$0xff]
      %v217 = vld [vmem:[%s191 + $0x60] sm:$0xff]
      %v218 = vld [vmem:[%s191 + $0x68] sm:$0xff]
      %v219 = vld [vmem:[%s191 + $0x70] sm:$0xff]
      %v220 = vld [vmem:[%s191 + $0x78] sm:$0xff]
      %v221 = vld [vmem:[%s191 + $0x80] sm:$0xff]
      %v222 = vld [vmem:[%s191 + $0x88] sm:$0xff]
      %v223 = vld [vmem:[%s191 + $0x90] sm:$0xff]
      %v224 = vld [vmem:[%s191 + $0x98] sm:$0xff]
      %v225 = vld [vmem:[%s191 + $0xa0] sm:$0xff]
      %v226 = vld [vmem:[%s191 + $0xa8] sm:$0xff]
      %v227 = vld [vmem:[%s191 + $0xb0] sm:$0xff]
      %v228 = vld [vmem:[%s191 + $0xb8] sm:$0xff]
      %v229 = vld [vmem:[%s191 + $0xc0] sm:$0xff]
      %v230 = vld [vmem:[%s191 + $0xc8] sm:$0xff]
      %v231 = vld [vmem:[%s191 + $0xd0] sm:$0xff]
      %v232 = vld [vmem:[%s191 + $0xd8] sm:$0xff]
      %v233 = vld [vmem:[%s191 + $0xe0] sm:$0xff]
      %v234 = vld [vmem:[%s191 + $0xe8] sm:$0xff]
      %v235 = vld [vmem:[%s191 + $0xf0] sm:$0xff]
      %v236 = vld [vmem:[%s191 + $0xf8] sm:$0xff]
      %v237 = vld [vmem:[%s191 + $0x100] sm:$0xff]
      %v238 = vld [vmem:[%s191 + $0x108] sm:$0xff]
      %v239 = vld [vmem:[%s191 + $0x110] sm:$0xff]
      %v240 = vld [vmem:[%s191 + $0x118] sm:$0xff]
      %v241 = vld [vmem:[%s196] sm:$0xf]
      %v242 = vld [vmem:[%s196 + $0x4] sm:$0xf]
      %v243 = vld [vmem:[%s196 + $0x8] sm:$0xf]
      %v244 = vld [vmem:[%s196 + $0xc] sm:$0xf]
      %v245 = vld [vmem:[%s196 + $0x10] sm:$0xf]
      %v246 = vld [vmem:[%s196 + $0x14] sm:$0xf]
      %v247 = vld [vmem:[%s196 + $0x18] sm:$0xf]
      %v248 = vld [vmem:[%s196 + $0x1c] sm:$0xf]
      %v249 = vld [vmem:[%s196 + $0x20] sm:$0xf]
      %v250 = vld [vmem:[%s196 + $0x24] sm:$0xf]
      %v251 = vld [vmem:[%s196 + $0x28] sm:$0xf]
      %v252 = vld [vmem:[%s196 + $0x2c] sm:$0xf]
      %v253 = vld [vmem:[%s196 + $0x30] sm:$0xf]
      %v254 = vld [vmem:[%s196 + $0x34] sm:$0xf]
      %v255 = vld [vmem:[%s196 + $0x38] sm:$0xf]
      %v256 = vld [vmem:[%s196 + $0x3c] sm:$0xf]
      %v257 = vld [vmem:[%s196 + $0x40] sm:$0xf]
      %v258 = vld [vmem:[%s196 + $0x44] sm:$0xf]
      %v259 = vld [vmem:[%s196 + $0x48] sm:$0xf]
      %v260 = vld [vmem:[%s196 + $0x4c] sm:$0xf]
      %v261 = vld [vmem:[%s196 + $0x50] sm:$0xf]
      %v262 = vld [vmem:[%s196 + $0x54] sm:$0xf]
      %v263 = vld [vmem:[%s196 + $0x58] sm:$0xf]
      %v264 = vld [vmem:[%s196 + $0x5c] sm:$0xf]
      %v265 = vld [vmem:[%s196 + $0x60] sm:$0xf]
      %v266 = vld [vmem:[%s196 + $0x64] sm:$0xf]
      %v267 = vld [vmem:[%s196 + $0x68] sm:$0xf]
      %v268 = vld [vmem:[%s196 + $0x6c] sm:$0xf]
      %v269 = vld [vmem:[%s196 + $0x70] sm:$0xf]
      %v270 = vld [vmem:[%s196 + $0x74] sm:$0xf]
      %v271 = vld [vmem:[%s196 + $0x78] sm:$0xf]
      %v272 = vld [vmem:[%s196 + $0x7c] sm:$0xf]
      %v273 = vld [vmem:[%s196 + $0x80] sm:$0xf]
      %v274 = vld [vmem:[%s196 + $0x84] sm:$0xf]
      %v275 = vld [vmem:[%s196 + $0x88] sm:$0xf]
      %v276 = vld [vmem:[%s196 + $0x8c] sm:$0xf]
      %v277 = vld [vmem:[%s196 + $0x90] sm:$0xf]
      %v278 = vld [vmem:[%s196 + $0x94] sm:$0xf]
      %v279 = vld [vmem:[%s196 + $0x98] sm:$0xf]
      %v280 = vld [vmem:[%s196 + $0x9c] sm:$0xf]
      %v281 = vld [vmem:[%s196 + $0xa0] sm:$0xf]
      %v282 = vld [vmem:[%s196 + $0xa4] sm:$0xf]
      %v283 = vld [vmem:[%s196 + $0xa8] sm:$0xf]
      %v284 = vld [vmem:[%s196 + $0xac] sm:$0xf]
      %v285 = vld [vmem:[%s196 + $0xb0] sm:$0xf]
      %v286 = vld [vmem:[%s196 + $0xb4] sm:$0xf]
      %v287 = vld [vmem:[%s196 + $0xb8] sm:$0xf]
      %v288 = vld [vmem:[%s196 + $0xbc] sm:$0xf]
      %v289 = vld [vmem:[%s196 + $0xc0] sm:$0xf]
      %v290 = vld [vmem:[%s196 + $0xc4] sm:$0xf]
      %v291 = vld [vmem:[%s196 + $0xc8] sm:$0xf]
      %v292 = vld [vmem:[%s196 + $0xcc] sm:$0xf]
      %v293 = vld [vmem:[%s196 + $0xd0] sm:$0xf]
      %v294 = vld [vmem:[%s196 + $0xd4] sm:$0xf]
      %v295 = vld [vmem:[%s196 + $0xd8] sm:$0xf]
      %v296 = vld [vmem:[%s196 + $0xdc] sm:$0xf]
      %v297 = vld [vmem:[%s196 + $0xe0] sm:$0xf]
      %v298 = vld [vmem:[%s196 + $0xe4] sm:$0xf]
      %v299 = vld [vmem:[%s196 + $0xe8] sm:$0xf]
      %v300 = vld [vmem:[%s196 + $0xec] sm:$0xf]
      %v301 = vld [vmem:[%s196 + $0xf0] sm:$0xf]
      %v302 = vld [vmem:[%s196 + $0xf4] sm:$0xf]
      %v303 = vld [vmem:[%s196 + $0xf8] sm:$0xf]
      %v304 = vld [vmem:[%s196 + $0xfc] sm:$0xf]
      %v305 = vld [vmem:[%s199] sm:$0x1]
      %v307 = vperm.slane %v305, 0
      %v345 = vunpack.c.l.b16 %v205
      %v346 = vunpack.c.h.b16 %v205
      %v347 = vunpack.c.l.b16 %v206
      %v348 = vunpack.c.h.b16 %v206
      %v349 = vunpack.c.l.b16 %v207
      %v350 = vunpack.c.h.b16 %v207
      %v351 = vunpack.c.l.b16 %v208
      %v352 = vunpack.c.h.b16 %v208
      %v353 = vunpack.c.l.b16 %v209
      %v354 = vunpack.c.h.b16 %v209
      %v355 = vunpack.c.l.b16 %v210
      %v356 = vunpack.c.h.b16 %v210
      %v357 = vunpack.c.l.b16 %v211
      %v358 = vunpack.c.h.b16 %v211
      %v359 = vunpack.c.l.b16 %v212
      %v360 = vunpack.c.h.b16 %v212
      %v361 = vunpack.c.l.b16 %v213
      %v362 = vunpack.c.h.b16 %v213
      %v363 = vunpack.c.l.b16 %v214
      %v364 = vunpack.c.h.b16 %v214
      %v365 = vunpack.c.l.b16 %v215
      %v366 = vunpack.c.h.b16 %v215
      %v367 = vunpack.c.l.b16 %v216
      %v368 = vunpack.c.h.b16 %v216
      %v369 = vunpack.c.l.b16 %v217
      %v370 = vunpack.c.h.b16 %v217
      %v371 = vunpack.c.l.b16 %v218
      %v372 = vunpack.c.h.b16 %v218
      %v373 = vunpack.c.l.b16 %v219
      %v374 = vunpack.c.h.b16 %v219
      %v375 = vunpack.c.l.b16 %v220
      %v376 = vunpack.c.h.b16 %v220
      %v377 = vunpack.c.l.b16 %v221
      %v378 = vunpack.c.h.b16 %v221
      %v379 = vunpack.c.l.b16 %v222
      %v380 = vunpack.c.h.b16 %v222
      %v381 = vunpack.c.l.b16 %v223
      %v382 = vunpack.c.h.b16 %v223
      %v383 = vunpack.c.l.b16 %v224
      %v384 = vunpack.c.h.b16 %v224
      %v385 = vunpack.c.l.b16 %v225
      %v386 = vunpack.c.h.b16 %v225
      %v387 = vunpack.c.l.b16 %v226
      %v388 = vunpack.c.h.b16 %v226
      %v389 = vunpack.c.l.b16 %v227
      %v390 = vunpack.c.h.b16 %v227
      %v391 = vunpack.c.l.b16 %v228
      %v392 = vunpack.c.h.b16 %v228
      %v393 = vunpack.c.l.b16 %v229
      %v394 = vunpack.c.h.b16 %v229
      %v395 = vunpack.c.l.b16 %v230
      %v396 = vunpack.c.h.b16 %v230
      %v397 = vunpack.c.l.b16 %v231
      %v398 = vunpack.c.h.b16 %v231
      %v399 = vunpack.c.l.b16 %v232
      %v400 = vunpack.c.h.b16 %v232
      %v401 = vunpack.c.l.b16 %v233
      %v402 = vunpack.c.h.b16 %v233
      %v403 = vunpack.c.l.b16 %v234
      %v404 = vunpack.c.h.b16 %v234
      %v405 = vunpack.c.l.b16 %v235
      %v406 = vunpack.c.h.b16 %v235
      %v407 = vunpack.c.l.b16 %v236
      %v408 = vunpack.c.h.b16 %v236
      %v409 = vunpack.c.l.b16 %v237
      %v410 = vunpack.c.h.b16 %v237
      %v411 = vunpack.c.l.b16 %v238
      %v412 = vunpack.c.h.b16 %v238
      %v413 = vunpack.c.l.b16 %v239
      %v414 = vunpack.c.h.b16 %v239
      %v415 = vunpack.c.l.b16 %v240
      %v416 = vunpack.c.h.b16 %v240
      %v417 = vpack.c.b16 %v349, %v345
      %v418 = vpack.c.b16 %v350, %v346
      %v419 = vpack.c.b16 %v351, %v347
      %v420 = vpack.c.b16 %v352, %v348
      %v421 = vpack.c.b16 %v357, %v353
      %v422 = vpack.c.b16 %v358, %v354
      %v423 = vpack.c.b16 %v359, %v355
      %v424 = vpack.c.b16 %v360, %v356
      %v425 = vpack.c.b16 %v365, %v361
      %v426 = vpack.c.b16 %v366, %v362
      %v427 = vpack.c.b16 %v367, %v363
      %v428 = vpack.c.b16 %v368, %v364
      %v429 = vpack.c.b16 %v373, %v369
      %v430 = vpack.c.b16 %v374, %v370
      %v431 = vpack.c.b16 %v375, %v371
      %v432 = vpack.c.b16 %v376, %v372
      %v433 = vpack.c.b16 %v381, %v377
      %v434 = vpack.c.b16 %v382, %v378
      %v435 = vpack.c.b16 %v383, %v379
      %v436 = vpack.c.b16 %v384, %v380
      %v437 = vpack.c.b16 %v389, %v385
      %v438 = vpack.c.b16 %v390, %v386
      %v439 = vpack.c.b16 %v391, %v387
      %v440 = vpack.c.b16 %v392, %v388
      %v441 = vpack.c.b16 %v397, %v393
      %v442 = vpack.c.b16 %v398, %v394
      %v443 = vpack.c.b16 %v399, %v395
      %v444 = vpack.c.b16 %v400, %v396
      %v445 = vpack.c.b16 %v405, %v401
      %v446 = vpack.c.b16 %v406, %v402
      %v447 = vpack.c.b16 %v407, %v403
      %v448 = vpack.c.b16 %v408, %v404
      %v449 = vpack.c.b16 %v413, %v409
      %v450 = vpack.c.b16 %v414, %v410
      %v451 = vpack.c.b16 %v415, %v411
      %v452 = vpack.c.b16 %v416, %v412
      %v553 = vunpack.c.l.b16 %v241
      %v554 = vunpack.c.l.b16 %v242
      %v555 = vunpack.c.l.b16 %v243
      %v556 = vunpack.c.l.b16 %v244
      %v557 = vunpack.c.l.b16 %v245
      %v558 = vunpack.c.l.b16 %v246
      %v559 = vunpack.c.l.b16 %v247
      %v560 = vunpack.c.l.b16 %v248
      %v561 = vunpack.c.l.b16 %v249
      %v562 = vunpack.c.l.b16 %v250
      %v563 = vunpack.c.l.b16 %v251
      %v564 = vunpack.c.l.b16 %v252
      %v565 = vunpack.c.l.b16 %v253
      %v566 = vunpack.c.l.b16 %v254
      %v567 = vunpack.c.l.b16 %v255
      %v568 = vunpack.c.l.b16 %v256
      %v569 = vunpack.c.l.b16 %v257
      %v570 = vunpack.c.l.b16 %v258
      %v571 = vunpack.c.l.b16 %v259
      %v572 = vunpack.c.l.b16 %v260
      %v573 = vunpack.c.l.b16 %v261
      %v574 = vunpack.c.l.b16 %v262
      %v575 = vunpack.c.l.b16 %v263
      %v576 = vunpack.c.l.b16 %v264
      %v577 = vunpack.c.l.b16 %v265
      %v578 = vunpack.c.l.b16 %v266
      %v579 = vunpack.c.l.b16 %v267
      %v580 = vunpack.c.l.b16 %v268
      %v581 = vunpack.c.l.b16 %v269
      %v582 = vunpack.c.l.b16 %v270
      %v583 = vunpack.c.l.b16 %v271
      %v584 = vunpack.c.l.b16 %v272
      %v585 = vunpack.c.l.b16 %v273
      %v586 = vunpack.c.l.b16 %v274
      %v587 = vunpack.c.l.b16 %v275
      %v588 = vunpack.c.l.b16 %v276
      %v589 = vunpack.c.l.b16 %v277
      %v590 = vunpack.c.l.b16 %v278
      %v591 = vunpack.c.l.b16 %v279
      %v592 = vunpack.c.l.b16 %v280
      %v593 = vunpack.c.l.b16 %v281
      %v594 = vunpack.c.l.b16 %v282
      %v595 = vunpack.c.l.b16 %v283
      %v596 = vunpack.c.l.b16 %v284
      %v597 = vunpack.c.l.b16 %v285
      %v598 = vunpack.c.l.b16 %v286
      %v599 = vunpack.c.l.b16 %v287
      %v600 = vunpack.c.l.b16 %v288
      %v601 = vunpack.c.l.b16 %v289
      %v602 = vunpack.c.l.b16 %v290
      %v603 = vunpack.c.l.b16 %v291
      %v604 = vunpack.c.l.b16 %v292
      %v605 = vunpack.c.l.b16 %v293
      %v606 = vunpack.c.l.b16 %v294
      %v607 = vunpack.c.l.b16 %v295
      %v608 = vunpack.c.l.b16 %v296
      %v609 = vunpack.c.l.b16 %v297
      %v610 = vunpack.c.l.b16 %v298
      %v611 = vunpack.c.l.b16 %v299
      %v612 = vunpack.c.l.b16 %v300
      %v613 = vunpack.c.l.b16 %v301
      %v614 = vunpack.c.l.b16 %v302
      %v615 = vunpack.c.l.b16 %v303
      %v616 = vunpack.c.l.b16 %v304
      %v617 = vpack.c.b16 %v554, %v553
      %v618 = vpack.c.b16 %v556, %v555
      %v619 = vpack.c.b16 %v558, %v557
      %v620 = vpack.c.b16 %v560, %v559
      %v621 = vpack.c.b16 %v562, %v561
      %v622 = vpack.c.b16 %v564, %v563
      %v623 = vpack.c.b16 %v566, %v565
      %v624 = vpack.c.b16 %v568, %v567
      %v625 = vpack.c.b16 %v570, %v569
      %v626 = vpack.c.b16 %v572, %v571
      %v627 = vpack.c.b16 %v574, %v573
      %v628 = vpack.c.b16 %v576, %v575
      %v629 = vpack.c.b16 %v578, %v577
      %v630 = vpack.c.b16 %v580, %v579
      %v631 = vpack.c.b16 %v582, %v581
      %v632 = vpack.c.b16 %v584, %v583
      %v633 = vpack.c.b16 %v586, %v585
      %v634 = vpack.c.b16 %v588, %v587
      %v635 = vpack.c.b16 %v590, %v589
      %v636 = vpack.c.b16 %v592, %v591
      %v637 = vpack.c.b16 %v594, %v593
      %v638 = vpack.c.b16 %v596, %v595
      %v639 = vpack.c.b16 %v598, %v597
      %v640 = vpack.c.b16 %v600, %v599
      %v641 = vpack.c.b16 %v602, %v601
      %v642 = vpack.c.b16 %v604, %v603
      %v643 = vpack.c.b16 %v606, %v605
      %v644 = vpack.c.b16 %v608, %v607
      %v645 = vpack.c.b16 %v610, %v609
      %v646 = vpack.c.b16 %v612, %v611
      %v647 = vpack.c.b16 %v614, %v613
      %v648 = vpack.c.b16 %v616, %v615
      %681 = vmatpush.bf16.msra.mxu0 %v624
      %682 = vmatpush.bf16.msra.mxu0 %v623
      %683 = vmatpush.bf16.msra.mxu0 %v622
      %684 = vmatpush.bf16.msra.mxu0 %v621
      %685 = vmatpush.bf16.msra.mxu0 %v620
      %686 = vmatpush.bf16.msra.mxu0 %v619
      %687 = vmatpush.bf16.msra.mxu0 %v618
      %688 = vmatpush.bf16.msra.mxu0 %v617
      %689 = vmatmul.bf16.gmra.mxu0 %v417
      %v690 = vpop.f32.mrf.mxu0
      %v691 = vadd.f32 %v307, %v690
      %v692 = vpop.f32.mrf.mxu0
      %v693 = vadd.f32 %v307, %v692
      %694 = vmatmul.bf16.gmra.mxu0 %v421
      %v695 = vpop.f32.mrf.mxu0
      %v696 = vadd.f32 %v307, %v695
      %v697 = vpop.f32.mrf.mxu0
      %v698 = vadd.f32 %v307, %v697
      %699 = vmatmul.bf16.gmra.mxu0 %v425
      %v700 = vpop.f32.mrf.mxu0
      %v701 = vadd.f32 %v307, %v700
      %v702 = vpop.f32.mrf.mxu0
      %v703 = vadd.f32 %v307, %v702
      %704 = vmatmul.bf16.gmra.mxu0 %v429
      %v705 = vpop.f32.mrf.mxu0
      %v706 = vadd.f32 %v307, %v705
      %v707 = vpop.f32.mrf.mxu0
      %v708 = vadd.f32 %v307, %v707
      %709 = vmatmul.bf16.gmra.mxu0 %v433
      %v710 = vpop.f32.mrf.mxu0
      %v711 = vadd.f32 %v307, %v710
      %v712 = vpop.f32.mrf.mxu0
      %v713 = vadd.f32 %v307, %v712
      %714 = vmatmul.bf16.gmra.mxu0 %v437
      %v715 = vpop.f32.mrf.mxu0
      %v716 = vadd.f32 %v307, %v715
      %v717 = vpop.f32.mrf.mxu0
      %v718 = vadd.f32 %v307, %v717
      %719 = vmatmul.bf16.gmra.mxu0 %v441
      %v720 = vpop.f32.mrf.mxu0
      %v721 = vadd.f32 %v307, %v720
      %v722 = vpop.f32.mrf.mxu0
      %v723 = vadd.f32 %v307, %v722
      %724 = vmatmul.bf16.gmra.mxu0 %v445
      %v725 = vpop.f32.mrf.mxu0
      %v726 = vadd.f32 %v307, %v725
      %v727 = vpop.f32.mrf.mxu0
      %v728 = vadd.f32 %v307, %v727
      %729 = vmatmul.bf16.gmra.mxu0 %v449
      %v730 = vpop.f32.mrf.mxu0
      %v731 = vadd.f32 %v307, %v730
      %v732 = vpop.f32.mrf.mxu0
      %v733 = vadd.f32 %v307, %v732
      %734 = vdwg.mxu0
      %735 = vmatpush.bf16.msra.mxu0 %v632
      %736 = vmatpush.bf16.msra.mxu0 %v631
      %737 = vmatpush.bf16.msra.mxu0 %v630
      %738 = vmatpush.bf16.msra.mxu0 %v629
      %739 = vmatpush.bf16.msra.mxu0 %v628
      %740 = vmatpush.bf16.msra.mxu0 %v627
      %741 = vmatpush.bf16.msra.mxu0 %v626
      %742 = vmatpush.bf16.msra.mxu0 %v625
      %743 = vmatmul.bf16.gmra.mxu0 %v418
      %v744 = vpop.f32.mrf.mxu0
      %v745 = vadd.f32 %v691, %v744
      %v746 = vpop.f32.mrf.mxu0
      %v747 = vadd.f32 %v693, %v746
      %748 = vmatmul.bf16.gmra.mxu0 %v422
      %v749 = vpop.f32.mrf.mxu0
      %v750 = vadd.f32 %v696, %v749
      %v751 = vpop.f32.mrf.mxu0
      %v752 = vadd.f32 %v698, %v751
      %753 = vmatmul.bf16.gmra.mxu0 %v426
      %v754 = vpop.f32.mrf.mxu0
      %v755 = vadd.f32 %v701, %v754
      %v756 = vpop.f32.mrf.mxu0
      %v757 = vadd.f32 %v703, %v756
      %758 = vmatmul.bf16.gmra.mxu0 %v430
      %v759 = vpop.f32.mrf.mxu0
      %v760 = vadd.f32 %v706, %v759
      %v761 = vpop.f32.mrf.mxu0
      %v762 = vadd.f32 %v708, %v761
      %763 = vmatmul.bf16.gmra.mxu0 %v434
      %v764 = vpop.f32.mrf.mxu0
      %v765 = vadd.f32 %v711, %v764
      %v766 = vpop.f32.mrf.mxu0
      %v767 = vadd.f32 %v713, %v766
      %768 = vmatmul.bf16.gmra.mxu0 %v438
      %v769 = vpop.f32.mrf.mxu0
      %v770 = vadd.f32 %v716, %v769
      %v771 = vpop.f32.mrf.mxu0
      %v772 = vadd.f32 %v718, %v771
      %773 = vmatmul.bf16.gmra.mxu0 %v442
      %v774 = vpop.f32.mrf.mxu0
      %v775 = vadd.f32 %v721, %v774
      %v776 = vpop.f32.mrf.mxu0
      %v777 = vadd.f32 %v723, %v776
      %778 = vmatmul.bf16.gmra.mxu0 %v446
      %v779 = vpop.f32.mrf.mxu0
      %v780 = vadd.f32 %v726, %v779
      %v781 = vpop.f32.mrf.mxu0
      %v782 = vadd.f32 %v728, %v781
      %783 = vmatmul.bf16.gmra.mxu0 %v450
      %v784 = vpop.f32.mrf.mxu0
      %v785 = vadd.f32 %v731, %v784
      %v786 = vpop.f32.mrf.mxu0
      %v787 = vadd.f32 %v733, %v786
      %788 = vdwg.mxu0
      %789 = vmatpush.bf16.msra.mxu0 %v640
      %790 = vmatpush.bf16.msra.mxu0 %v639
      %791 = vmatpush.bf16.msra.mxu0 %v638
      %792 = vmatpush.bf16.msra.mxu0 %v637
      %793 = vmatpush.bf16.msra.mxu0 %v636
      %794 = vmatpush.bf16.msra.mxu0 %v635
      %795 = vmatpush.bf16.msra.mxu0 %v634
      %796 = vmatpush.bf16.msra.mxu0 %v633
      %797 = vmatmul.bf16.gmra.mxu0 %v419
      %v798 = vpop.f32.mrf.mxu0
      %v799 = vadd.f32 %v745, %v798
      %v800 = vpop.f32.mrf.mxu0
      %v801 = vadd.f32 %v747, %v800
      %802 = vmatmul.bf16.gmra.mxu0 %v423
      %v803 = vpop.f32.mrf.mxu0
      %v804 = vadd.f32 %v750, %v803
      %v805 = vpop.f32.mrf.mxu0
      %v806 = vadd.f32 %v752, %v805
      %807 = vmatmul.bf16.gmra.mxu0 %v427
      %v808 = vpop.f32.mrf.mxu0
      %v809 = vadd.f32 %v755, %v808
      %v810 = vpop.f32.mrf.mxu0
      %v811 = vadd.f32 %v757, %v810
      %812 = vmatmul.bf16.gmra.mxu0 %v431
      %v813 = vpop.f32.mrf.mxu0
      %v814 = vadd.f32 %v760, %v813
      %v815 = vpop.f32.mrf.mxu0
      %v816 = vadd.f32 %v762, %v815
      %817 = vmatmul.bf16.gmra.mxu0 %v435
      %v818 = vpop.f32.mrf.mxu0
      %v819 = vadd.f32 %v765, %v818
      %v820 = vpop.f32.mrf.mxu0
      %v821 = vadd.f32 %v767, %v820
      %822 = vmatmul.bf16.gmra.mxu0 %v439
      %v823 = vpop.f32.mrf.mxu0
      %v824 = vadd.f32 %v770, %v823
      %v825 = vpop.f32.mrf.mxu0
      %v826 = vadd.f32 %v772, %v825
      %827 = vmatmul.bf16.gmra.mxu0 %v443
      %v828 = vpop.f32.mrf.mxu0
      %v829 = vadd.f32 %v775, %v828
      %v830 = vpop.f32.mrf.mxu0
      %v831 = vadd.f32 %v777, %v830
      %832 = vmatmul.bf16.gmra.mxu0 %v447
      %v833 = vpop.f32.mrf.mxu0
      %v834 = vadd.f32 %v780, %v833
      %v835 = vpop.f32.mrf.mxu0
      %v836 = vadd.f32 %v782, %v835
      %837 = vmatmul.bf16.gmra.mxu0 %v451
      %v838 = vpop.f32.mrf.mxu0
      %v839 = vadd.f32 %v785, %v838
      %v840 = vpop.f32.mrf.mxu0
      %v841 = vadd.f32 %v787, %v840
      %842 = vdwg.mxu0
      %843 = vmatpush.bf16.msra.mxu0 %v648
      %844 = vmatpush.bf16.msra.mxu0 %v647
      %845 = vmatpush.bf16.msra.mxu0 %v646
      %846 = vmatpush.bf16.msra.mxu0 %v645
      %847 = vmatpush.bf16.msra.mxu0 %v644
      %848 = vmatpush.bf16.msra.mxu0 %v643
      %849 = vmatpush.bf16.msra.mxu0 %v642
      %850 = vmatpush.bf16.msra.mxu0 %v641
      %851 = vmatmul.bf16.gmra.mxu0 %v420
      %v852 = vpop.f32.mrf.mxu0
      %v853 = vadd.f32 %v799, %v852
      %v854 = vpop.f32.mrf.mxu0
      %v855 = vadd.f32 %v801, %v854
      %856 = vmatmul.bf16.gmra.mxu0 %v424
      %v857 = vpop.f32.mrf.mxu0
      %v858 = vadd.f32 %v804, %v857
      %v859 = vpop.f32.mrf.mxu0
      %v860 = vadd.f32 %v806, %v859
      %861 = vmatmul.bf16.gmra.mxu0 %v428
      %v862 = vpop.f32.mrf.mxu0
      %v863 = vadd.f32 %v809, %v862
      %v864 = vpop.f32.mrf.mxu0
      %v865 = vadd.f32 %v811, %v864
      %866 = vmatmul.bf16.gmra.mxu0 %v432
      %v867 = vpop.f32.mrf.mxu0
      %v868 = vadd.f32 %v814, %v867
      %v869 = vpop.f32.mrf.mxu0
      %v870 = vadd.f32 %v816, %v869
      %871 = vmatmul.bf16.gmra.mxu0 %v436
      %v872 = vpop.f32.mrf.mxu0
      %v873 = vadd.f32 %v819, %v872
      %v874 = vpop.f32.mrf.mxu0
      %v875 = vadd.f32 %v821, %v874
      %876 = vmatmul.bf16.gmra.mxu0 %v440
      %v877 = vpop.f32.mrf.mxu0
      %v878 = vadd.f32 %v824, %v877
      %v879 = vpop.f32.mrf.mxu0
      %v880 = vadd.f32 %v826, %v879
      %881 = vmatmul.bf16.gmra.mxu0 %v444
      %v882 = vpop.f32.mrf.mxu0
      %v883 = vadd.f32 %v829, %v882
      %v884 = vpop.f32.mrf.mxu0
      %v885 = vadd.f32 %v831, %v884
      %886 = vmatmul.bf16.gmra.mxu0 %v448
      %v887 = vpop.f32.mrf.mxu0
      %v888 = vadd.f32 %v834, %v887
      %v889 = vpop.f32.mrf.mxu0
      %v890 = vadd.f32 %v836, %v889
      %891 = vmatmul.bf16.gmra.mxu0 %v452
      %v892 = vpop.f32.mrf.mxu0
      %v893 = vadd.f32 %v839, %v892
      %v894 = vpop.f32.mrf.mxu0
      %v895 = vadd.f32 %v841, %v894
      %896 = vdwg.mxu0
      %v897 = vmax.f32 %v853, 0.0
      %v898 = vmax.f32 %v855, 0.0
      %v899 = vmax.f32 %v858, 0.0
      %v900 = vmax.f32 %v860, 0.0
      %v901 = vmax.f32 %v863, 0.0
      %v902 = vmax.f32 %v865, 0.0
      %v903 = vmax.f32 %v868, 0.0
      %v904 = vmax.f32 %v870, 0.0
      %v905 = vmax.f32 %v873, 0.0
      %v906 = vmax.f32 %v875, 0.0
      %v907 = vmax.f32 %v878, 0.0
      %v908 = vmax.f32 %v880, 0.0
      %v909 = vmax.f32 %v883, 0.0
      %v910 = vmax.f32 %v885, 0.0
      %v911 = vmax.f32 %v888, 0.0
      %v912 = vmax.f32 %v890, 0.0
      %v913 = vmax.f32 %v893, 0.0
      %v914 = vmax.f32 %v895, 0.0
      %v915 = vpack.c.bf16 %v897, %v897
      %v916 = vpack.c.bf16 %v898, %v898
      %v917 = vpack.c.bf16 %v899, %v899
      %v918 = vpack.c.bf16 %v900, %v900
      %v919 = vpack.c.bf16 %v901, %v901
      %v920 = vpack.c.bf16 %v902, %v902
      %v921 = vpack.c.bf16 %v903, %v903
      %v922 = vpack.c.bf16 %v904, %v904
      %v923 = vpack.c.bf16 %v905, %v905
      %v924 = vpack.c.bf16 %v906, %v906
      %v925 = vpack.c.bf16 %v907, %v907
      %v926 = vpack.c.bf16 %v908, %v908
      %v927 = vpack.c.bf16 %v909, %v909
      %v928 = vpack.c.bf16 %v910, %v910
      %v929 = vpack.c.bf16 %v911, %v911
      %v930 = vpack.c.bf16 %v912, %v912
      %v931 = vpack.c.bf16 %v913, %v913
      %v932 = vpack.c.bf16 %v914, %v914
      %vm933 = vcmask 519168
      %934 = vst.msk [vmem:[%s204] sm:$0xf] %vm933, %v915
      %935 = vst.msk [vmem:[%s204 + $0x4] sm:$0xf] %vm933, %v916
      %936 = vst.msk [vmem:[%s204 + $0x8] sm:$0xf] %vm933, %v917
      %937 = vst.msk [vmem:[%s204 + $0xc] sm:$0xf] %vm933, %v918
      %938 = vst.msk [vmem:[%s204 + $0x10] sm:$0xf] %vm933, %v919
      %939 = vst.msk [vmem:[%s204 + $0x14] sm:$0xf] %vm933, %v920
      %940 = vst.msk [vmem:[%s204 + $0x18] sm:$0xf] %vm933, %v921
      %941 = vst.msk [vmem:[%s204 + $0x1c] sm:$0xf] %vm933, %v922
      %942 = vst.msk [vmem:[%s204 + $0x20] sm:$0xf] %vm933, %v923
      %943 = vst.msk [vmem:[%s204 + $0x24] sm:$0xf] %vm933, %v924
      %944 = vst.msk [vmem:[%s204 + $0x28] sm:$0xf] %vm933, %v925
      %945 = vst.msk [vmem:[%s204 + $0x2c] sm:$0xf] %vm933, %v926
      %946 = vst.msk [vmem:[%s204 + $0x30] sm:$0xf] %vm933, %v927
      %947 = vst.msk [vmem:[%s204 + $0x34] sm:$0xf] %vm933, %v928
      %948 = vst.msk [vmem:[%s204 + $0x38] sm:$0xf] %vm933, %v929
      %949 = vst.msk [vmem:[%s204 + $0x3c] sm:$0xf] %vm933, %v930
      %950 = vst.msk [vmem:[%s204 + $0x40] sm:$0xf] %vm933, %v931
      %951 = vst.msk [vmem:[%s204 + $0x44] sm:$0xf] %vm933, %v932
      %p952 = scmp.lt.s32.totalorder %s14, 1
      %s953 = scalar_select %p952, %s14, 1
      %s954 = smul.addr %s953, 18
      %s955 = smul.addr %s954, 4
      %s956 = scalar_lea.vmem %s3, %s955
      // Predicated region
      $region33: #{forward.5} parent=31 // pred_check
        %p957 = pneg %p110
      $region34: #{forward.5} parent=31 // pred_check_branch
        %959 = sbr.rel (%p957) target = $region36
      $region35: #{forward.5} parent=31 // pred_region
        _
      $region36: #{forward.5} parent=31 // pred_fallthru
        _
    $region32: #{forward.5} parent=5 // pred_fallthru
      _
    %p960 = scmp.le.s32.totalorder 2, %s9
    // Predicated region
    $region37: #{forward.5} parent=5 // pred_check
      %p961 = pneg %p960
    $region38: #{forward.5} parent=5 // pred_check_branch
      %963 = sbr.rel (%p961) target = $region40
    $region39: #{forward.5} parent=5 // pred_region
      %s964 = ssub.s32 %s9, 2
      // Predicated region
      $region41: #{forward.5} parent=39 // pred_check
        %p965 = pneg %p116
      $region42: #{forward.5} parent=39 // pred_check_branch
        %967 = sbr.rel (%p965) target = $region44
      $region43: #{forward.5} parent=39 // pred_region
        %p968 = scmp.lt.s32.totalorder %s15, 1
        %s969 = scalar_select %p968, %s15, 1
        %s970 = smul.addr %s969, 18
        %s971 = smul.addr %s970, 4
        %s972 = scalar_lea.vmem %s3, %s971
      $region44: #{forward.5} parent=39 // pred_fallthru
        _
    $region40: #{forward.5} parent=5 // pred_fallthru
      _
  $region6: #{forward.5} parent=0 // loop_footer
    %s13 = sadd.s32 1, %s9
  $region7: #{forward.5} parent=0 // loop_footer_branch
    %8 = sbr.rel target = $region3
  $region8: #{forward.5} parent=0 // loop_exit
    _

// kernel: squeeze.2
$region0: #{squeeze.2}
  %s0 = inlined_call_operand.vmem [shape: bf16[1,64,64], index: 0, kind: input, shape index: {}]
  %s1 = inlined_call_operand.vmem [shape: bf16[4,1024], index: 1, kind: output, shape index: {}]
  $region1: #{squeeze.2} parent=0
    #allocation0 [shape = 'u8[32768]{0}', space=vmem, size = 0x8000, scoped, tag = 'scoped mem for output reshape']
    #allocation1 [shape = 'u8[32768]{0}', space=vmem, size = 0x8000, scoped, tag = 'scoped mem for input reshape']
    %s3 = ssub.s32 256, 1
    %s4 = scalar_lea.vmem %s0, 28
    %s5 = sshrl.u32 %s3, 1
    %s6 = sor.u32 %s3, %s5
    %s7 = sand.u32 %s6, 85
    %s8 = sshrl.u32 %s7, 1
    %s9 = sor.u32 %s7, %s8
    %s10 = sand.u32 51, %s9
    %s11 = sshrl.u32 %s10, 2
    %s12 = sor.u32 %s10, %s11
    %s13 = sand.u32 15, %s12
    %v14 = vld [vmem:[%s4] sm:%s13]
    %v15 = vunpack.c.l.bf16 %v14
    %v16 = vunpack.c.h.bf16 %v14
    %s17 = scalar_lea.vmem [#allocation1], 56
    %18 = vst [vmem:[%s17] sm:%s3] %v15
    %s19 = scalar_lea.vmem %s0, 24
    %s20 = sshrl.u32 %s3, 1
    %s21 = sor.u32 %s3, %s20
    %s22 = sand.u32 %s21, 85
    %s23 = sshrl.u32 %s22, 1
    %s24 = sor.u32 %s22, %s23
    %s25 = sand.u32 51, %s24
    %s26 = sshrl.u32 %s25, 2
    %s27 = sor.u32 %s25, %s26
    %s28 = sand.u32 15, %s27
    %v29 = vld [vmem:[%s19] sm:%s28]
    %v30 = vunpack.c.l.bf16 %v29
    %v31 = vunpack.c.h.bf16 %v29
    %s32 = scalar_lea.vmem [#allocation1], 48
    %33 = vst [vmem:[%s32] sm:%s3] %v30
    %s34 = scalar_lea.vmem %s0, 20
    %s35 = sshrl.u32 %s3, 1
    %s36 = sor.u32 %s3, %s35
    %s37 = sand.u32 %s36, 85
    %s38 = sshrl.u32 %s37, 1
    %s39 = sor.u32 %s37, %s38
    %s40 = sand.u32 51, %s39
    %s41 = sshrl.u32 %s40, 2
    %s42 = sor.u32 %s40, %s41
    %s43 = sand.u32 15, %s42
    %v44 = vld [vmem:[%s34] sm:%s43]
    %v45 = vunpack.c.l.bf16 %v44
    %v46 = vunpack.c.h.bf16 %v44
    %s47 = scalar_lea.vmem [#allocation1], 40
    %48 = vst [vmem:[%s47] sm:%s3] %v45
    %s49 = scalar_lea.vmem %s0, 16
    %s50 = sshrl.u32 %s3, 1
    %s51 = sor.u32 %s3, %s50
    %s52 = sand.u32 %s51, 85
    %s53 = sshrl.u32 %s52, 1
    %s54 = sor.u32 %s52, %s53
    %s55 = sand.u32 51, %s54
    %s56 = sshrl.u32 %s55, 2
    %s57 = sor.u32 %s55, %s56
    %s58 = sand.u32 15, %s57
    %v59 = vld [vmem:[%s49] sm:%s58]
    %v60 = vunpack.c.l.bf16 %v59
    %v61 = vunpack.c.h.bf16 %v59
    %s62 = scalar_lea.vmem [#allocation1], 32
    %63 = vst [vmem:[%s62] sm:%s3] %v60
    %s64 = scalar_lea.vmem %s0, 12
    %s65 = sshrl.u32 %s3, 1
    %s66 = sor.u32 %s3, %s65
    %s67 = sand.u32 %s66, 85
    %s68 = sshrl.u32 %s67, 1
    %s69 = sor.u32 %s67, %s68
    %s70 = sand.u32 51, %s69
    %s71 = sshrl.u32 %s70, 2
    %s72 = sor.u32 %s70, %s71
    %s73 = sand.u32 15, %s72
    %v74 = vld [vmem:[%s64] sm:%s73]
    %v75 = vunpack.c.l.bf16 %v74
    %v76 = vunpack.c.h.bf16 %v74
    %s77 = scalar_lea.vmem [#allocation1], 24
    %78 = vst [vmem:[%s77] sm:%s3] %v75
    %s79 = scalar_lea.vmem %s0, 8
    %s80 = sshrl.u32 %s3, 1
    %s81 = sor.u32 %s3, %s80
    %s82 = sand.u32 %s81, 85
    %s83 = sshrl.u32 %s82, 1
    %s84 = sor.u32 %s82, %s83
    %s85 = sand.u32 51, %s84
    %s86 = sshrl.u32 %s85, 2
    %s87 = sor.u32 %s85, %s86
    %s88 = sand.u32 15, %s87
    %v89 = vld [vmem:[%s79] sm:%s88]
    %v90 = vunpack.c.l.bf16 %v89
    %v91 = vunpack.c.h.bf16 %v89
    %s92 = scalar_lea.vmem [#allocation1], 16
    %93 = vst [vmem:[%s92] sm:%s3] %v90
    %s94 = scalar_lea.vmem %s0, 4
    %s95 = sshrl.u32 %s3, 1
    %s96 = sor.u32 %s3, %s95
    %s97 = sand.u32 %s96, 85
    %s98 = sshrl.u32 %s97, 1
    %s99 = sor.u32 %s97, %s98
    %s100 = sand.u32 51, %s99
    %s101 = sshrl.u32 %s100, 2
    %s102 = sor.u32 %s100, %s101
    %s103 = sand.u32 15, %s102
    %v104 = vld [vmem:[%s94] sm:%s103]
    %v105 = vunpack.c.l.bf16 %v104
    %v106 = vunpack.c.h.bf16 %v104
    %s107 = scalar_lea.vmem [#allocation1], 8
    %108 = vst [vmem:[%s107] sm:%s3] %v105
    %s109 = sshrl.u32 %s3, 1
    %s110 = sor.u32 %s3, %s109
    %s111 = sand.u32 %s110, 85
    %s112 = sshrl.u32 %s111, 1
    %s113 = sor.u32 %s111, %s112
    %s114 = sand.u32 51, %s113
    %s115 = sshrl.u32 %s114, 2
    %s116 = sor.u32 %s114, %s115
    %s117 = sand.u32 15, %s116
    %v118 = vld [vmem:[%s0] sm:%s117]
    %v119 = vunpack.c.l.bf16 %v118
    %v120 = vunpack.c.h.bf16 %v118
    %121 = vst [vmem:[#allocation1] sm:%s3] %v119
    %v122 = vld [vmem:[#allocation1] ss:$2 sm:$0xff]
    %vm123 = vcmask 523264
    %124 = vst.msk [vmem:[#allocation0] ss:$8 sm:$0xf] %vm123, %v122
    %125 = vst.msk [vmem:[#allocation0] ss:$8 sm:$0xf0] %vm123, %v122
    %s126 = scalar_lea.vmem [#allocation1], 16
    %v127 = vld [vmem:[%s126] ss:$2 sm:$0xff]
    %vm128 = vcmask 523264
    %s129 = scalar_lea.vmem [#allocation0], 1
    %130 = vst.msk [vmem:[%s129] ss:$8 sm:$0xf] %vm128, %v127
    %s131 = scalar_lea.vmem [#allocation0], 1
    %132 = vst.msk [vmem:[%s131] ss:$8 sm:$0xf0] %vm128, %v127
    %s133 = scalar_lea.vmem [#allocation1], 32
    %v134 = vld [vmem:[%s133] ss:$2 sm:$0xff]
    %vm135 = vcmask 523264
    %s136 = scalar_lea.vmem [#allocation0], 2
    %137 = vst.msk [vmem:[%s136] ss:$8 sm:$0xf] %vm135, %v134
    %s138 = scalar_lea.vmem [#allocation0], 2
    %139 = vst.msk [vmem:[%s138] ss:$8 sm:$0xf0] %vm135, %v134
    %s140 = scalar_lea.vmem [#allocation1], 48
    %v141 = vld [vmem:[%s140] ss:$2 sm:$0xff]
    %vm142 = vcmask 523264
    %s143 = scalar_lea.vmem [#allocation0], 3
    %144 = vst.msk [vmem:[%s143] ss:$8 sm:$0xf] %vm142, %v141
    %s145 = scalar_lea.vmem [#allocation0], 3
    %146 = vst.msk [vmem:[%s145] ss:$8 sm:$0xf0] %vm142, %v141
    %s147 = scalar_lea.vmem [#allocation1], 1
    %s148 = smov 3
    %v149 = vld [vmem:[%s147] ss:$16 sm:%s148]
    %s150 = scalar_lea.vmem [#allocation1], 1
    %s151 = smov 12
    %v152 = vld [vmem:[%s150] ss:$16 sm:%s151]
    %vm153 = vcmask 1043458
    %v154 = vsel %vm153, %v152, %v149
    %s155 = scalar_lea.vmem [#allocation1], 4294967235
    %s156 = smov 48
    %v157 = vld [vmem:[%s155] ss:$16 sm:%s156]
    %vm158 = vcmask 1045508
    %v159 = vsel %vm158, %v157, %v154
    %s160 = scalar_lea.vmem [#allocation1], 4294967235
    %s161 = smov 192
    %v162 = vld [vmem:[%s160] ss:$16 sm:%s161]
    %vm163 = vcmask 1047558
    %v164 = vsel %vm163, %v162, %v159
    %165 = vrot.lane.b32.xlu0 %v164, 64
    %v166 = vpop.permute.xlu0 %165
    %vm167 = vcmask 1048064
    %168 = vst.msk [vmem:[#allocation0] sm:$0xf] %vm167, %v166
    %s169 = scalar_lea.vmem [#allocation0], 4
    %170 = vst.msk [vmem:[%s169] sm:$0xf0] %vm167, %v166
    %s171 = scalar_lea.vmem [#allocation1], 9
    %s172 = smov 3
    %v173 = vld [vmem:[%s171] ss:$16 sm:%s172]
    %s174 = scalar_lea.vmem [#allocation1], 9
    %s175 = smov 12
    %v176 = vld [vmem:[%s174] ss:$16 sm:%s175]
    %vm177 = vcmask 1043458
    %v178 = vsel %vm177, %v176, %v173
    %s179 = scalar_lea.vmem [#allocation1], 4294967243
    %s180 = smov 48
    %v181 = vld [vmem:[%s179] ss:$16 sm:%s180]
    %vm182 = vcmask 1045508
    %v183 = vsel %vm182, %v181, %v178
    %s184 = scalar_lea.vmem [#allocation1], 4294967243
    %s185 = smov 192
    %v186 = vld [vmem:[%s184] ss:$16 sm:%s185]
    %vm187 = vcmask 1047558
    %v188 = vsel %vm187, %v186, %v183
    %189 = vrot.lane.b32.xlu0 %v188, 64
    %v190 = vpop.permute.xlu0 %189
    %vm191 = vcmask 1048064
    %s192 = scalar_lea.vmem [#allocation0], 32
    %193 = vst.msk [vmem:[%s192] sm:$0xf] %vm191, %v190
    %s194 = scalar_lea.vmem [#allocation0], 36
    %195 = vst.msk [vmem:[%s194] sm:$0xf0] %vm191, %v190
    %s196 = scalar_lea.vmem [#allocation1], 5
    %s197 = smov 3
    %v198 = vld [vmem:[%s196] ss:$16 sm:%s197]
    %s199 = scalar_lea.vmem [#allocation1], 5
    %s200 = smov 12
    %v201 = vld [vmem:[%s199] ss:$16 sm:%s200]
    %vm202 = vcmask 1043458
    %v203 = vsel %vm202, %v201, %v198
    %s204 = scalar_lea.vmem [#allocation1], 4294967239
    %s205 = smov 48
    %v206 = vld [vmem:[%s204] ss:$16 sm:%s205]
    %vm207 = vcmask 1045508
    %v208 = vsel %vm207, %v206, %v203
    %s209 = scalar_lea.vmem [#allocation1], 4294967239
    %s210 = smov 192
    %v211 = vld [vmem:[%s209] ss:$16 sm:%s210]
    %vm212 = vcmask 1047558
    %v213 = vsel %vm212, %v211, %v208
    %214 = vrot.lane.b32.xlu0 %v213, 64
    %v215 = vpop.permute.xlu0 %214
    %vm216 = vcmask 1048064
    %s217 = scalar_lea.vmem [#allocation0], 16
    %218 = vst.msk [vmem:[%s217] sm:$0xf] %vm216, %v215
    %s219 = scalar_lea.vmem [#allocation0], 20
    %220 = vst.msk [vmem:[%s219] sm:$0xf0] %vm216, %v215
    %s221 = scalar_lea.vmem [#allocation1], 13
    %s222 = smov 3
    %v223 = vld [vmem:[%s221] ss:$16 sm:%s222]
    %s224 = scalar_lea.vmem [#allocation1], 13
    %s225 = smov 12
    %v226 = vld [vmem:[%s224] ss:$16 sm:%s225]
    %vm227 = vcmask 1043458
    %v228 = vsel %vm227, %v226, %v223
    %s229 = scalar_lea.vmem [#allocation1], 4294967247
    %s230 = smov 48
    %v231 = vld [vmem:[%s229] ss:$16 sm:%s230]
    %vm232 = vcmask 1045508
    %v233 = vsel %vm232, %v231, %v228
    %s234 = scalar_lea.vmem [#allocation1], 4294967247
    %s235 = smov 192
    %v236 = vld [vmem:[%s234] ss:$16 sm:%s235]
    %vm237 = vcmask 1047558
    %v238 = vsel %vm237, %v236, %v233
    %239 = vrot.lane.b32.xlu0 %v238, 64
    %v240 = vpop.permute.xlu0 %239
    %vm241 = vcmask 1048064
    %s242 = scalar_lea.vmem [#allocation0], 48
    %243 = vst.msk [vmem:[%s242] sm:$0xf] %vm241, %v240
    %s244 = scalar_lea.vmem [#allocation0], 52
    %245 = vst.msk [vmem:[%s244] sm:$0xf0] %vm241, %v240
    %s247 = ssub.s32 16, 1
    %v248 = vld [vmem:[#allocation0] sm:%s247]
    %v249 = vpack.c.bf16 0.0, %v248
    %s251 = ssub.s32 4, 1
    %252 = vst [vmem:[%s1] sm:%s251] %v249
    %s253 = scalar_lea.vmem [#allocation0], 8
    %v254 = vld [vmem:[%s253] sm:%s247]
    %v255 = vpack.c.bf16 0.0, %v254
    %s257 = ssub.s32 4, 1
    %s258 = scalar_lea.vmem %s1, 2
    %259 = vst [vmem:[%s258] sm:%s257] %v255
    %s260 = scalar_lea.vmem [#allocation0], 16
    %v261 = vld [vmem:[%s260] sm:%s247]
    %v262 = vpack.c.bf16 0.0, %v261
    %s264 = ssub.s32 4, 1
    %s265 = scalar_lea.vmem %s1, 4
    %266 = vst [vmem:[%s265] sm:%s264] %v262
    %s267 = scalar_lea.vmem [#allocation0], 24
    %v268 = vld [vmem:[%s267] sm:%s247]
    %v269 = vpack.c.bf16 0.0, %v268
    %s271 = ssub.s32 4, 1
    %s272 = scalar_lea.vmem %s1, 6
    %273 = vst [vmem:[%s272] sm:%s271] %v269
    %s274 = scalar_lea.vmem [#allocation0], 32
    %v275 = vld [vmem:[%s274] sm:%s247]
    %v276 = vpack.c.bf16 0.0, %v275
    %s278 = ssub.s32 4, 1
    %s279 = scalar_lea.vmem %s1, 8
    %280 = vst [vmem:[%s279] sm:%s278] %v276
    %s281 = scalar_lea.vmem [#allocation0], 40
    %v282 = vld [vmem:[%s281] sm:%s247]
    %v283 = vpack.c.bf16 0.0, %v282
    %s285 = ssub.s32 4, 1
    %s286 = scalar_lea.vmem %s1, 10
    %287 = vst [vmem:[%s286] sm:%s285] %v283
    %s288 = scalar_lea.vmem [#allocation0], 48
    %v289 = vld [vmem:[%s288] sm:%s247]
    %v290 = vpack.c.bf16 0.0, %v289
    %s292 = ssub.s32 4, 1
    %s293 = scalar_lea.vmem %s1, 12
    %294 = vst [vmem:[%s293] sm:%s292] %v290
    %s295 = scalar_lea.vmem [#allocation0], 56
    %v296 = vld [vmem:[%s295] sm:%s247]
    %v297 = vpack.c.bf16 0.0, %v296
    %s299 = ssub.s32 4, 1
    %s300 = scalar_lea.vmem %s1, 14
    %301 = vst [vmem:[%s300] sm:%s299] %v297

// kernel: forward.6
$region0: #{forward.6}
  #allocation0 [shape = 'u32[]', space=smem, size = 0x4, offset = 0x4, fixed_abs, tag = 'smem constant byte address 0x4 - core index']
  #allocation1 [shape = 'u32[72,128]{1,0:T(1,128)}', space=vmem, size = 0x9000, scoped, tag = 'internal scratch']
  %s0 = inlined_call_operand.vmem [shape: bf16[2,64,576], index: 0, kind: input, shape index: {}]
  %s1 = inlined_call_operand.vmem [shape: bf16[2,576,64], index: 1, kind: input, shape index: {}]
  %s2 = inlined_call_operand.vmem [shape: f32[2,1,64], index: 2, kind: input, shape index: {}]
  %s3 = inlined_call_operand.vmem [shape: bf16[2,64,64], index: 3, kind: output, shape index: {}]
  %s4 = sld [smem:[#allocation0]]
  $region45: #{forward.6} parent=0
    _
  %s6 = ssub.s32 1, %s4
  %s7 = scalar_select 0, %s6, %s4
  loop: start=0, step=1, limit=4
  $region2: #{forward.6} parent=0 // loop_pre_header
    _
  $region3: #{forward.6} parent=0 // loop_header
    %s9 = sphi 0, %s13
    %p10 = scmp.ge.s32.totalorder %s9, 4
    %s19 = sphi 0, %s21
    %s22 = sphi 0, %s19
    %s23 = sphi 0, %s22
    %s39 = sphi 0, %s23
    %s45 = sphi 0, %s47
    %s48 = sphi 0, %s45
    %s49 = sphi 0, %s48
    %s65 = sphi 0, %s49
    %s71 = sphi 0, %s73
    %s74 = sphi 0, %s71
    %s75 = sphi 0, %s74
    %s91 = sphi 0, %s75
    %s97 = sphi 0, %s99
    %s100 = sphi 0, %s97
    %s101 = sphi 0, %s100
    %s117 = sphi 0, %s101
  $region4: #{forward.6} parent=0 // loop_header_branch
    %12 = sbr.rel (%p10) target = $region8
  $region5: #{forward.6} parent=0 // loop_body
    %s14 = ssub.s32 %s9, 1
    %s15 = ssub.s32 %s9, 2
    %s16 = sadd.s32 %s9, 1
    %s17 = ssub.s32 %s9, %s16
    %p18 = scmp.eq.s32.totalorder %s17, 0
    %s20 = sadd.s32 %s19, 1
    %s21 = scalar_select %p18, %s19, %s20
    %p24 = pneg %p18
    %p25 = scmp.eq.s32.totalorder %s9, 1
    %p26 = por %p24, %p25
    %p27 = scmp.ne.s32.totalorder %s19, %s22
    %p28 = scmp.eq.s32.totalorder %s9, 0
    %p29 = por %p27, %p28
    %p30 = scmp.ne.s32.totalorder %s19, %s22
    %p31 = scmp.eq.s32.totalorder %s14, 1
    %p32 = por %p30, %p31
    %p33 = scmp.ne.s32.totalorder %s22, %s23
    %p34 = scmp.eq.s32.totalorder %s14, 0
    %p35 = por %p33, %p34
    %p36 = scmp.ne.s32.totalorder %s22, %s23
    %p37 = scmp.eq.s32.totalorder %s15, 1
    %p38 = por %p36, %p37
    %p40 = scmp.ne.s32.totalorder %s23, %s39
    %p41 = scmp.eq.s32.totalorder %s15, 0
    %p42 = por %p40, %p41
    %s43 = ssub.s32 %s9, %s16
    %p44 = scmp.eq.s32.totalorder %s43, 0
    %s46 = sadd.s32 %s45, 1
    %s47 = scalar_select %p44, %s45, %s46
    %p50 = pneg %p44
    %p51 = scmp.eq.s32.totalorder %s9, 1
    %p52 = por %p50, %p51
    %p53 = scmp.ne.s32.totalorder %s45, %s48
    %p54 = scmp.eq.s32.totalorder %s9, 0
    %p55 = por %p53, %p54
    %p56 = scmp.ne.s32.totalorder %s45, %s48
    %p57 = scmp.eq.s32.totalorder %s14, 1
    %p58 = por %p56, %p57
    %p59 = scmp.ne.s32.totalorder %s48, %s49
    %p60 = scmp.eq.s32.totalorder %s14, 0
    %p61 = por %p59, %p60
    %p62 = scmp.ne.s32.totalorder %s48, %s49
    %p63 = scmp.eq.s32.totalorder %s15, 1
    %p64 = por %p62, %p63
    %p66 = scmp.ne.s32.totalorder %s49, %s65
    %p67 = scmp.eq.s32.totalorder %s15, 0
    %p68 = por %p66, %p67
    %s69 = ssub.s32 %s9, %s16
    %p70 = scmp.eq.s32.totalorder %s69, 0
    %s72 = sadd.s32 %s71, 1
    %s73 = scalar_select %p70, %s71, %s72
    %p76 = pneg %p70
    %p77 = scmp.eq.s32.totalorder %s9, 1
    %p78 = por %p76, %p77
    %p79 = scmp.ne.s32.totalorder %s71, %s74
    %p80 = scmp.eq.s32.totalorder %s9, 0
    %p81 = por %p79, %p80
    %p82 = scmp.ne.s32.totalorder %s71, %s74
    %p83 = scmp.eq.s32.totalorder %s14, 1
    %p84 = por %p82, %p83
    %p85 = scmp.ne.s32.totalorder %s74, %s75
    %p86 = scmp.eq.s32.totalorder %s14, 0
    %p87 = por %p85, %p86
    %p88 = scmp.ne.s32.totalorder %s74, %s75
    %p89 = scmp.eq.s32.totalorder %s15, 1
    %p90 = por %p88, %p89
    %p92 = scmp.ne.s32.totalorder %s75, %s91
    %p93 = scmp.eq.s32.totalorder %s15, 0
    %p94 = por %p92, %p93
    %s95 = ssub.s32 %s9, %s16
    %p96 = scmp.eq.s32.totalorder %s95, 0
    %s98 = sadd.s32 %s97, 1
    %s99 = scalar_select %p96, %s97, %s98
    %p102 = pneg %p96
    %p103 = scmp.eq.s32.totalorder %s9, 1
    %p104 = por %p102, %p103
    %p105 = scmp.ne.s32.totalorder %s97, %s100
    %p106 = scmp.eq.s32.totalorder %s9, 0
    %p107 = por %p105, %p106
    %p108 = scmp.ne.s32.totalorder %s97, %s100
    %p109 = scmp.eq.s32.totalorder %s14, 1
    %p110 = por %p108, %p109
    %p111 = scmp.ne.s32.totalorder %s100, %s101
    %p112 = scmp.eq.s32.totalorder %s14, 0
    %p113 = por %p111, %p112
    %p114 = scmp.ne.s32.totalorder %s100, %s101
    %p115 = scmp.eq.s32.totalorder %s15, 1
    %p116 = por %p114, %p115
    %p118 = scmp.ne.s32.totalorder %s101, %s117
    %p119 = scmp.eq.s32.totalorder %s15, 0
    %p120 = por %p118, %p119
    %p121 = scmp.le.s32.totalorder 1, %s9
    %p122 = scmp.lt.s32.totalorder %s9, 3
    %p123 = pnand %p121, %p122
    %p124 = pneg %p123
    // Predicated region
    $region9: #{forward.6} parent=5 // pred_check
      _
    $region10: #{forward.6} parent=5 // pred_check_branch
      %126 = sbr.rel (%p123) target = $region12
    $region11: #{forward.6} parent=5 // pred_region
      %s127 = ssub.s32 %s9, 1
    $region12: #{forward.6} parent=5 // pred_fallthru
      _
    %p128 = scmp.lt.s32.totalorder %s9, 2
    // Predicated region
    $region13: #{forward.6} parent=5 // pred_check
      %p129 = pneg %p128
    $region14: #{forward.6} parent=5 // pred_check_branch
      %131 = sbr.rel (%p129) target = $region16
    $region15: #{forward.6} parent=5 // pred_region
      // Predicated region
      $region17: #{forward.6} parent=15 // pred_check
        %p132 = pneg %p29
      $region18: #{forward.6} parent=15 // pred_check_branch
        %134 = sbr.rel (%p132) target = $region20
      $region19: #{forward.6} parent=15 // pred_region
        %p135 = scmp.lt.s32.totalorder %s9, 1
        %s136 = scalar_select %p135, %s9, 1
        %s137 = smul.addr %s136, 40
        %s138 = smul.addr %s137, 4
        %s139 = scalar_lea.vmem %s0, %s138
      $region20: #{forward.6} parent=15 // pred_fallthru
        _
      // Predicated region
      $region21: #{forward.6} parent=15 // pred_check
        %p140 = pneg %p55
      $region22: #{forward.6} parent=15 // pred_check_branch
        %142 = sbr.rel (%p140) target = $region24
      $region23: #{forward.6} parent=15 // pred_region
        %p143 = scmp.lt.s32.totalorder %s9, 1
        %s144 = scalar_select %p143, %s9, 1
        %s145 = smul.addr %s144, 72
        %s146 = smul.addr %s145, 4
        %s147 = scalar_lea.vmem %s1, %s146
      $region24: #{forward.6} parent=15 // pred_fallthru
        _
      // Predicated region
      $region25: #{forward.6} parent=15 // pred_check
        %p148 = pneg %p81
      $region26: #{forward.6} parent=15 // pred_check_branch
        %150 = sbr.rel (%p148) target = $region28
      $region27: #{forward.6} parent=15 // pred_region
        %p151 = scmp.lt.s32.totalorder %s9, 1
        %s152 = scalar_select %p151, %s9, 1
        %s153 = scalar_lea.vmem %s2, %s152
      $region28: #{forward.6} parent=15 // pred_fallthru
        _
    $region16: #{forward.6} parent=5 // pred_fallthru
      _
    %p154 = scmp.le.s32.totalorder 1, %s9
    %p155 = scmp.lt.s32.totalorder %s9, 3
    %p156 = pnand %p154, %p155
    %p157 = pneg %p156
    // Predicated region
    $region29: #{forward.6} parent=5 // pred_check
      _
    $region30: #{forward.6} parent=5 // pred_check_branch
      %159 = sbr.rel (%p156) target = $region32
    $region31: #{forward.6} parent=5 // pred_region
      %s160 = ssub.s32 %s9, 1
      %p161 = scmp.lt.s32.totalorder %s14, 1
      %s162 = scalar_select %p161, %s14, 1
      %s163 = smul.addr %s162, 40
      %s164 = smul.addr %s163, 4
      %s165 = scalar_lea.vmem %s0, %s164
      %p166 = pneg %p35
      %p167 = pneg %p32
      %p168 = scmp.lt.s32.totalorder %s14, 1
      %s169 = scalar_select %p168, %s14, 1
      %s170 = smul.addr %s169, 72
      %s171 = smul.addr %s170, 4
      %s172 = scalar_lea.vmem %s1, %s171
      %p173 = pneg %p61
      %p174 = pneg %p58
      %p175 = scmp.lt.s32.totalorder %s14, 1
      %s176 = scalar_select %p175, %s14, 1
      %s177 = scalar_lea.vmem %s2, %s176
      %p178 = pneg %p87
      %p179 = pneg %p84
      %p180 = pneg %p113
      %p181 = pneg %p110
      %p182 = scmp.lt.s32.totalorder %s14, 1
      %s183 = scalar_select %p182, %s14, 1
      %s184 = smul.addr %s183, 8
      %s185 = smul.addr %s184, 4
      %s186 = scalar_lea.vmem %s3, %s185
      %p187 = scmp.lt.s32.totalorder %s14, 1
      %s188 = scalar_select %p187, %s14, 1
      %s189 = smul.addr %s188, 40
      %s190 = smul.addr %s189, 4
      %s191 = scalar_lea.vmem %s0, %s190
      %p192 = scmp.lt.s32.totalorder %s14, 1
      %s193 = scalar_select %p192, %s14, 1
      %s194 = smul.addr %s193, 72
      %s195 = smul.addr %s194, 4
      %s196 = scalar_lea.vmem %s1, %s195
      %p197 = scmp.lt.s32.totalorder %s14, 1
      %s198 = scalar_select %p197, %s14, 1
      %s199 = scalar_lea.vmem %s2, %s198
      %p200 = scmp.lt.s32.totalorder %s14, 1
      %s201 = scalar_select %p200, %s14, 1
      %s202 = smul.addr %s201, 8
      %s203 = smul.addr %s202, 4
      %s204 = scalar_lea.vmem %s3, %s203
      %v206 = vld [vmem:[%s191] sm:$0xff]
      %v207 = vld [vmem:[%s191 + $0x8] sm:$0xff]
      %v208 = vld [vmem:[%s191 + $0x10] sm:$0xf]
      %v209 = vld [vmem:[%s191 + $0x14] sm:$0xff]
      %v210 = vld [vmem:[%s191 + $0x1c] sm:$0xff]
      %v211 = vld [vmem:[%s191 + $0x24] sm:$0xf]
      %v212 = vld [vmem:[%s191 + $0x28] sm:$0xff]
      %v213 = vld [vmem:[%s191 + $0x30] sm:$0xff]
      %v214 = vld [vmem:[%s191 + $0x38] sm:$0xf]
      %v215 = vld [vmem:[%s191 + $0x3c] sm:$0xff]
      %v216 = vld [vmem:[%s191 + $0x44] sm:$0xff]
      %v217 = vld [vmem:[%s191 + $0x4c] sm:$0xf]
      %v218 = vld [vmem:[%s191 + $0x50] sm:$0xff]
      %v219 = vld [vmem:[%s191 + $0x58] sm:$0xff]
      %v220 = vld [vmem:[%s191 + $0x60] sm:$0xf]
      %v221 = vld [vmem:[%s191 + $0x64] sm:$0xff]
      %v222 = vld [vmem:[%s191 + $0x6c] sm:$0xff]
      %v223 = vld [vmem:[%s191 + $0x74] sm:$0xf]
      %v224 = vld [vmem:[%s191 + $0x78] sm:$0xff]
      %v225 = vld [vmem:[%s191 + $0x80] sm:$0xff]
      %v226 = vld [vmem:[%s191 + $0x88] sm:$0xf]
      %v227 = vld [vmem:[%s191 + $0x8c] sm:$0xff]
      %v228 = vld [vmem:[%s191 + $0x94] sm:$0xff]
      %v229 = vld [vmem:[%s191 + $0x9c] sm:$0xf]
      %v230 = vld [vmem:[%s196] sm:$0xf]
      %v231 = vld [vmem:[%s196 + $0x4] sm:$0xf]
      %v232 = vld [vmem:[%s196 + $0x8] sm:$0xf]
      %v233 = vld [vmem:[%s196 + $0xc] sm:$0xf]
      %v234 = vld [vmem:[%s196 + $0x10] sm:$0xf]
      %v235 = vld [vmem:[%s196 + $0x14] sm:$0xf]
      %v236 = vld [vmem:[%s196 + $0x18] sm:$0xf]
      %v237 = vld [vmem:[%s196 + $0x1c] sm:$0xf]
      %v238 = vld [vmem:[%s196 + $0x20] sm:$0xf]
      %v239 = vld [vmem:[%s196 + $0x24] sm:$0xf]
      %v240 = vld [vmem:[%s196 + $0x28] sm:$0xf]
      %v241 = vld [vmem:[%s196 + $0x2c] sm:$0xf]
      %v242 = vld [vmem:[%s196 + $0x30] sm:$0xf]
      %v243 = vld [vmem:[%s196 + $0x34] sm:$0xf]
      %v244 = vld [vmem:[%s196 + $0x38] sm:$0xf]
      %v245 = vld [vmem:[%s196 + $0x3c] sm:$0xf]
      %v246 = vld [vmem:[%s196 + $0x40] sm:$0xf]
      %v247 = vld [vmem:[%s196 + $0x44] sm:$0xf]
      %v248 = vld [vmem:[%s196 + $0x48] sm:$0xf]
      %v249 = vld [vmem:[%s196 + $0x4c] sm:$0xf]
      %v250 = vld [vmem:[%s196 + $0x50] sm:$0xf]
      %v251 = vld [vmem:[%s196 + $0x54] sm:$0xf]
      %v252 = vld [vmem:[%s196 + $0x58] sm:$0xf]
      %v253 = vld [vmem:[%s196 + $0x5c] sm:$0xf]
      %v254 = vld [vmem:[%s196 + $0x60] sm:$0xf]
      %v255 = vld [vmem:[%s196 + $0x64] sm:$0xf]
      %v256 = vld [vmem:[%s196 + $0x68] sm:$0xf]
      %v257 = vld [vmem:[%s196 + $0x6c] sm:$0xf]
      %v258 = vld [vmem:[%s196 + $0x70] sm:$0xf]
      %v259 = vld [vmem:[%s196 + $0x74] sm:$0xf]
      %v260 = vld [vmem:[%s196 + $0x78] sm:$0xf]
      %v261 = vld [vmem:[%s196 + $0x7c] sm:$0xf]
      %v262 = vld [vmem:[%s196 + $0x80] sm:$0xf]
      %v263 = vld [vmem:[%s196 + $0x84] sm:$0xf]
      %v264 = vld [vmem:[%s196 + $0x88] sm:$0xf]
      %v265 = vld [vmem:[%s196 + $0x8c] sm:$0xf]
      %v266 = vld [vmem:[%s196 + $0x90] sm:$0xf]
      %v267 = vld [vmem:[%s196 + $0x94] sm:$0xf]
      %v268 = vld [vmem:[%s196 + $0x98] sm:$0xf]
      %v269 = vld [vmem:[%s196 + $0x9c] sm:$0xf]
      %v270 = vld [vmem:[%s196 + $0xa0] sm:$0xf]
      %v271 = vld [vmem:[%s196 + $0xa4] sm:$0xf]
      %v272 = vld [vmem:[%s196 + $0xa8] sm:$0xf]
      %v273 = vld [vmem:[%s196 + $0xac] sm:$0xf]
      %v274 = vld [vmem:[%s196 + $0xb0] sm:$0xf]
      %v275 = vld [vmem:[%s196 + $0xb4] sm:$0xf]
      %v276 = vld [vmem:[%s196 + $0xb8] sm:$0xf]
      %v277 = vld [vmem:[%s196 + $0xbc] sm:$0xf]
      %v278 = vld [vmem:[%s196 + $0xc0] sm:$0xf]
      %v279 = vld [vmem:[%s196 + $0xc4] sm:$0xf]
      %v280 = vld [vmem:[%s196 + $0xc8] sm:$0xf]
      %v281 = vld [vmem:[%s196 + $0xcc] sm:$0xf]
      %v282 = vld [vmem:[%s196 + $0xd0] sm:$0xf]
      %v283 = vld [vmem:[%s196 + $0xd4] sm:$0xf]
      %v284 = vld [vmem:[%s196 + $0xd8] sm:$0xf]
      %v285 = vld [vmem:[%s196 + $0xdc] sm:$0xf]
      %v286 = vld [vmem:[%s196 + $0xe0] sm:$0xf]
      %v287 = vld [vmem:[%s196 + $0xe4] sm:$0xf]
      %v288 = vld [vmem:[%s196 + $0xe8] sm:$0xf]
      %v289 = vld [vmem:[%s196 + $0xec] sm:$0xf]
      %v290 = vld [vmem:[%s196 + $0xf0] sm:$0xf]
      %v291 = vld [vmem:[%s196 + $0xf4] sm:$0xf]
      %v292 = vld [vmem:[%s196 + $0xf8] sm:$0xf]
      %v293 = vld [vmem:[%s196 + $0xfc] sm:$0xf]
      %v294 = vld [vmem:[%s196 + $0x100] sm:$0xf]
      %v295 = vld [vmem:[%s196 + $0x104] sm:$0xf]
      %v296 = vld [vmem:[%s196 + $0x108] sm:$0xf]
      %v297 = vld [vmem:[%s196 + $0x10c] sm:$0xf]
      %v298 = vld [vmem:[%s196 + $0x110] sm:$0xf]
      %v299 = vld [vmem:[%s196 + $0x114] sm:$0xf]
      %v300 = vld [vmem:[%s196 + $0x118] sm:$0xf]
      %v301 = vld [vmem:[%s196 + $0x11c] sm:$0xf]
      %v302 = vld [vmem:[%s199] sm:$0x1]
      %v304 = vperm.slane %v302, 0
      %v330 = vunpack.c.l.b16 %v206
      %v331 = vunpack.c.h.b16 %v206
      %v332 = vunpack.c.l.b16 %v207
      %v333 = vunpack.c.h.b16 %v207
      %v334 = vunpack.c.l.b16 %v208
      %v335 = vunpack.c.l.b16 %v209
      %v336 = vunpack.c.h.b16 %v209
      %v337 = vunpack.c.l.b16 %v210
      %v338 = vunpack.c.h.b16 %v210
      %v339 = vunpack.c.l.b16 %v211
      %v340 = vunpack.c.l.b16 %v212
      %v341 = vunpack.c.h.b16 %v212
      %v342 = vunpack.c.l.b16 %v213
      %v343 = vunpack.c.h.b16 %v213
      %v344 = vunpack.c.l.b16 %v214
      %v345 = vunpack.c.l.b16 %v215
      %v346 = vunpack.c.h.b16 %v215
      %v347 = vunpack.c.l.b16 %v216
      %v348 = vunpack.c.h.b16 %v216
      %v349 = vunpack.c.l.b16 %v217
      %v350 = vunpack.c.l.b16 %v218
      %v351 = vunpack.c.h.b16 %v218
      %v352 = vunpack.c.l.b16 %v219
      %v353 = vunpack.c.h.b16 %v219
      %v354 = vunpack.c.l.b16 %v220
      %v355 = vunpack.c.l.b16 %v221
      %v356 = vunpack.c.h.b16 %v221
      %v357 = vunpack.c.l.b16 %v222
      %v358 = vunpack.c.h.b16 %v222
      %v359 = vunpack.c.l.b16 %v223
      %v360 = vunpack.c.l.b16 %v224
      %v361 = vunpack.c.h.b16 %v224
      %v362 = vunpack.c.l.b16 %v225
      %v363 = vunpack.c.h.b16 %v225
      %v364 = vunpack.c.l.b16 %v226
      %v365 = vunpack.c.l.b16 %v227
      %v366 = vunpack.c.h.b16 %v227
      %v367 = vunpack.c.l.b16 %v228
      %v368 = vunpack.c.h.b16 %v228
      %v369 = vunpack.c.l.b16 %v229
      %v370 = vpack.c.b16 %v335, %v330
      %v371 = vpack.c.b16 %v336, %v331
      %v372 = vpack.c.b16 %v337, %v332
      %v373 = vpack.c.b16 %v338, %v333
      %v374 = vpack.c.b16 %v339, %v334
      %v375 = vpack.c.b16 %v345, %v340
      %v376 = vpack.c.b16 %v346, %v341
      %v377 = vpack.c.b16 %v347, %v342
      %v378 = vpack.c.b16 %v348, %v343
      %v379 = vpack.c.b16 %v349, %v344
      %v380 = vpack.c.b16 %v355, %v350
      %v381 = vpack.c.b16 %v356, %v351
      %v382 = vpack.c.b16 %v357, %v352
      %v383 = vpack.c.b16 %v358, %v353
      %v384 = vpack.c.b16 %v359, %v354
      %v385 = vpack.c.b16 %v365, %v360
      %v386 = vpack.c.b16 %v366, %v361
      %v387 = vpack.c.b16 %v367, %v362
      %v388 = vpack.c.b16 %v368, %v363
      %v389 = vpack.c.b16 %v369, %v364
      %v478 = vunpack.c.l.b16 %v230
      %v479 = vunpack.c.l.b16 %v231
      %v480 = vunpack.c.l.b16 %v232
      %v481 = vunpack.c.l.b16 %v233
      %v482 = vunpack.c.l.b16 %v234
      %v483 = vunpack.c.l.b16 %v235
      %v484 = vunpack.c.l.b16 %v236
      %v485 = vunpack.c.l.b16 %v237
      %v486 = vunpack.c.l.b16 %v238
      %v487 = vunpack.c.l.b16 %v239
      %v488 = vunpack.c.l.b16 %v240
      %v489 = vunpack.c.l.b16 %v241
      %v490 = vunpack.c.l.b16 %v242
      %v491 = vunpack.c.l.b16 %v243
      %v492 = vunpack.c.l.b16 %v244
      %v493 = vunpack.c.l.b16 %v245
      %v494 = vunpack.c.l.b16 %v246
      %v495 = vunpack.c.l.b16 %v247
      %v496 = vunpack.c.l.b16 %v248
      %v497 = vunpack.c.l.b16 %v249
      %v498 = vunpack.c.l.b16 %v250
      %v499 = vunpack.c.l.b16 %v251
      %v500 = vunpack.c.l.b16 %v252
      %v501 = vunpack.c.l.b16 %v253
      %v502 = vunpack.c.l.b16 %v254
      %v503 = vunpack.c.l.b16 %v255
      %v504 = vunpack.c.l.b16 %v256
      %v505 = vunpack.c.l.b16 %v257
      %v506 = vunpack.c.l.b16 %v258
      %v507 = vunpack.c.l.b16 %v259
      %v508 = vunpack.c.l.b16 %v260
      %v509 = vunpack.c.l.b16 %v261
      %v510 = vunpack.c.l.b16 %v262
      %v511 = vunpack.c.l.b16 %v263
      %v512 = vunpack.c.l.b16 %v264
      %v513 = vunpack.c.l.b16 %v265
      %v514 = vunpack.c.l.b16 %v266
      %v515 = vunpack.c.l.b16 %v267
      %v516 = vunpack.c.l.b16 %v268
      %v517 = vunpack.c.l.b16 %v269
      %v518 = vunpack.c.l.b16 %v270
      %v519 = vunpack.c.l.b16 %v271
      %v520 = vunpack.c.l.b16 %v272
      %v521 = vunpack.c.l.b16 %v273
      %v522 = vunpack.c.l.b16 %v274
      %v523 = vunpack.c.l.b16 %v275
      %v524 = vunpack.c.l.b16 %v276
      %v525 = vunpack.c.l.b16 %v277
      %v526 = vunpack.c.l.b16 %v278
      %v527 = vunpack.c.l.b16 %v279
      %v528 = vunpack.c.l.b16 %v280
      %v529 = vunpack.c.l.b16 %v281
      %v530 = vunpack.c.l.b16 %v282
      %v531 = vunpack.c.l.b16 %v283
      %v532 = vunpack.c.l.b16 %v284
      %v533 = vunpack.c.l.b16 %v285
      %v534 = vunpack.c.l.b16 %v286
      %v535 = vunpack.c.l.b16 %v287
      %v536 = vunpack.c.l.b16 %v288
      %v537 = vunpack.c.l.b16 %v289
      %v538 = vunpack.c.l.b16 %v290
      %v539 = vunpack.c.l.b16 %v291
      %v540 = vunpack.c.l.b16 %v292
      %v541 = vunpack.c.l.b16 %v293
      %v542 = vunpack.c.l.b16 %v294
      %v543 = vunpack.c.l.b16 %v295
      %v544 = vunpack.c.l.b16 %v296
      %v545 = vunpack.c.l.b16 %v297
      %v546 = vunpack.c.l.b16 %v298
      %v547 = vunpack.c.l.b16 %v299
      %v548 = vunpack.c.l.b16 %v300
      %v549 = vunpack.c.l.b16 %v301
      %v550 = vpack.c.b16 %v479, %v478
      %v551 = vpack.c.b16 %v481, %v480
      %v552 = vpack.c.b16 %v483, %v482
      %v553 = vpack.c.b16 %v485, %v484
      %v554 = vpack.c.b16 %v487, %v486
      %v555 = vpack.c.b16 %v489, %v488
      %v556 = vpack.c.b16 %v491, %v490
      %v557 = vpack.c.b16 %v493, %v492
      %v558 = vpack.c.b16 %v495, %v494
      %v559 = vpack.c.b16 %v497, %v496
      %v560 = vpack.c.b16 %v499, %v498
      %v561 = vpack.c.b16 %v501, %v500
      %v562 = vpack.c.b16 %v503, %v502
      %v563 = vpack.c.b16 %v505, %v504
      %v564 = vpack.c.b16 %v507, %v506
      %v565 = vpack.c.b16 %v509, %v508
      %v566 = vpack.c.b16 %v511, %v510
      %v567 = vpack.c.b16 %v513, %v512
      %v568 = vpack.c.b16 %v515, %v514
      %v569 = vpack.c.b16 %v517, %v516
      %v570 = vpack.c.b16 %v519, %v518
      %v571 = vpack.c.b16 %v521, %v520
      %v572 = vpack.c.b16 %v523, %v522
      %v573 = vpack.c.b16 %v525, %v524
      %v574 = vpack.c.b16 %v527, %v526
      %v575 = vpack.c.b16 %v529, %v528
      %v576 = vpack.c.b16 %v531, %v530
      %v577 = vpack.c.b16 %v533, %v532
      %v578 = vpack.c.b16 %v535, %v534
      %v579 = vpack.c.b16 %v537, %v536
      %v580 = vpack.c.b16 %v539, %v538
      %v581 = vpack.c.b16 %v541, %v540
      %v582 = vpack.c.b16 %v543, %v542
      %v583 = vpack.c.b16 %v545, %v544
      %v584 = vpack.c.b16 %v547, %v546
      %v585 = vpack.c.b16 %v549, %v548
      %vm622 = vcmask 523264
      %v624 = vsel %vm622, %v374, 0
      %v627 = vsel %vm622, %v379, 0
      %v630 = vsel %vm622, %v384, 0
      %v633 = vsel %vm622, %v389, 0
      %635 = vmatpush.bf16.msra.mxu0 %v557
      %636 = vmatpush.bf16.msra.mxu0 %v556
      %637 = vmatpush.bf16.msra.mxu0 %v555
      %638 = vmatpush.bf16.msra.mxu0 %v554
      %639 = vmatpush.bf16.msra.mxu0 %v553
      %640 = vmatpush.bf16.msra.mxu0 %v552
      %641 = vmatpush.bf16.msra.mxu0 %v551
      %642 = vmatpush.bf16.msra.mxu0 %v550
      %643 = vmatmul.bf16.gmra.mxu0 %v370
      %v644 = vpop.f32.mrf.mxu0
      %v645 = vadd.f32 %v304, %v644
      %v646 = vpop.f32.mrf.mxu0
      %v647 = vadd.f32 %v304, %v646
      %648 = vmatmul.bf16.gmra.mxu0 %v375
      %v649 = vpop.f32.mrf.mxu0
      %v650 = vadd.f32 %v304, %v649
      %v651 = vpop.f32.mrf.mxu0
      %v652 = vadd.f32 %v304, %v651
      %653 = vmatmul.bf16.gmra.mxu0 %v380
      %v654 = vpop.f32.mrf.mxu0
      %v655 = vadd.f32 %v304, %v654
      %v656 = vpop.f32.mrf.mxu0
      %v657 = vadd.f32 %v304, %v656
      %658 = vmatmul.bf16.gmra.mxu0 %v385
      %v659 = vpop.f32.mrf.mxu0
      %v660 = vadd.f32 %v304, %v659
      %v661 = vpop.f32.mrf.mxu0
      %v662 = vadd.f32 %v304, %v661
      %663 = vdwg.mxu0
      %664 = vmatpush.bf16.msra.mxu0 %v565
      %665 = vmatpush.bf16.msra.mxu0 %v564
      %666 = vmatpush.bf16.msra.mxu0 %v563
      %667 = vmatpush.bf16.msra.mxu0 %v562
      %668 = vmatpush.bf16.msra.mxu0 %v561
      %669 = vmatpush.bf16.msra.mxu0 %v560
      %670 = vmatpush.bf16.msra.mxu0 %v559
      %671 = vmatpush.bf16.msra.mxu0 %v558
      %672 = vmatmul.bf16.gmra.mxu0 %v371
      %v673 = vpop.f32.mrf.mxu0
      %v674 = vadd.f32 %v645, %v673
      %v675 = vpop.f32.mrf.mxu0
      %v676 = vadd.f32 %v647, %v675
      %677 = vmatmul.bf16.gmra.mxu0 %v376
      %v678 = vpop.f32.mrf.mxu0
      %v679 = vadd.f32 %v650, %v678
      %v680 = vpop.f32.mrf.mxu0
      %v681 = vadd.f32 %v652, %v680
      %682 = vmatmul.bf16.gmra.mxu0 %v381
      %v683 = vpop.f32.mrf.mxu0
      %v684 = vadd.f32 %v655, %v683
      %v685 = vpop.f32.mrf.mxu0
      %v686 = vadd.f32 %v657, %v685
      %687 = vmatmul.bf16.gmra.mxu0 %v386
      %v688 = vpop.f32.mrf.mxu0
      %v689 = vadd.f32 %v660, %v688
      %v690 = vpop.f32.mrf.mxu0
      %v691 = vadd.f32 %v662, %v690
      %692 = vdwg.mxu0
      %693 = vmatpush.bf16.msra.mxu0 %v573
      %694 = vmatpush.bf16.msra.mxu0 %v572
      %695 = vmatpush.bf16.msra.mxu0 %v571
      %696 = vmatpush.bf16.msra.mxu0 %v570
      %697 = vmatpush.bf16.msra.mxu0 %v569
      %698 = vmatpush.bf16.msra.mxu0 %v568
      %699 = vmatpush.bf16.msra.mxu0 %v567
      %700 = vmatpush.bf16.msra.mxu0 %v566
      %701 = vmatmul.bf16.gmra.mxu0 %v372
      %v702 = vpop.f32.mrf.mxu0
      %v703 = vadd.f32 %v674, %v702
      %v704 = vpop.f32.mrf.mxu0
      %v705 = vadd.f32 %v676, %v704
      %706 = vmatmul.bf16.gmra.mxu0 %v377
      %v707 = vpop.f32.mrf.mxu0
      %v708 = vadd.f32 %v679, %v707
      %v709 = vpop.f32.mrf.mxu0
      %v710 = vadd.f32 %v681, %v709
      %711 = vmatmul.bf16.gmra.mxu0 %v382
      %v712 = vpop.f32.mrf.mxu0
      %v713 = vadd.f32 %v684, %v712
      %v714 = vpop.f32.mrf.mxu0
      %v715 = vadd.f32 %v686, %v714
      %716 = vmatmul.bf16.gmra.mxu0 %v387
      %v717 = vpop.f32.mrf.mxu0
      %v718 = vadd.f32 %v689, %v717
      %v719 = vpop.f32.mrf.mxu0
      %v720 = vadd.f32 %v691, %v719
      %721 = vdwg.mxu0
      %722 = vmatpush.bf16.msra.mxu0 %v581
      %723 = vmatpush.bf16.msra.mxu0 %v580
      %724 = vmatpush.bf16.msra.mxu0 %v579
      %725 = vmatpush.bf16.msra.mxu0 %v578
      %726 = vmatpush.bf16.msra.mxu0 %v577
      %727 = vmatpush.bf16.msra.mxu0 %v576
      %728 = vmatpush.bf16.msra.mxu0 %v575
      %729 = vmatpush.bf16.msra.mxu0 %v574
      %730 = vmatmul.bf16.gmra.mxu0 %v373
      %v731 = vpop.f32.mrf.mxu0
      %v732 = vadd.f32 %v703, %v731
      %v733 = vpop.f32.mrf.mxu0
      %v734 = vadd.f32 %v705, %v733
      %735 = vmatmul.bf16.gmra.mxu0 %v378
      %v736 = vpop.f32.mrf.mxu0
      %v737 = vadd.f32 %v708, %v736
      %v738 = vpop.f32.mrf.mxu0
      %v739 = vadd.f32 %v710, %v738
      %740 = vmatmul.bf16.gmra.mxu0 %v383
      %v741 = vpop.f32.mrf.mxu0
      %v742 = vadd.f32 %v713, %v741
      %v743 = vpop.f32.mrf.mxu0
      %v744 = vadd.f32 %v715, %v743
      %745 = vmatmul.bf16.gmra.mxu0 %v388
      %v746 = vpop.f32.mrf.mxu0
      %v747 = vadd.f32 %v718, %v746
      %v748 = vpop.f32.mrf.mxu0
      %v749 = vadd.f32 %v720, %v748
      %750 = vdwg.mxu0
      %751 = vmatpush.bf16.msra.mxu0 0
      %752 = vmatpush.bf16.msra.mxu0 0
      %753 = vmatpush.bf16.msra.mxu0 0
      %754 = vmatpush.bf16.msra.mxu0 0
      %755 = vmatpush.bf16.msra.mxu0 %v585
      %756 = vmatpush.bf16.msra.mxu0 %v584
      %757 = vmatpush.bf16.msra.mxu0 %v583
      %758 = vmatpush.bf16.msra.mxu0 %v582
      %759 = vmatmul.bf16.gmra.mxu0 %v624
      %v760 = vpop.f32.mrf.mxu0
      %v761 = vadd.f32 %v732, %v760
      %v762 = vpop.f32.mrf.mxu0
      %v763 = vadd.f32 %v734, %v762
      %764 = vmatmul.bf16.gmra.mxu0 %v627
      %v765 = vpop.f32.mrf.mxu0
      %v766 = vadd.f32 %v737, %v765
      %v767 = vpop.f32.mrf.mxu0
      %v768 = vadd.f32 %v739, %v767
      %769 = vmatmul.bf16.gmra.mxu0 %v630
      %v770 = vpop.f32.mrf.mxu0
      %v771 = vadd.f32 %v742, %v770
      %v772 = vpop.f32.mrf.mxu0
      %v773 = vadd.f32 %v744, %v772
      %774 = vmatmul.bf16.gmra.mxu0 %v633
      %v775 = vpop.f32.mrf.mxu0
      %v776 = vadd.f32 %v747, %v775
      %v777 = vpop.f32.mrf.mxu0
      %v778 = vadd.f32 %v749, %v777
      %779 = vdwg.mxu0
      %v780 = vmax.f32 %v761, 0.0
      %v781 = vmax.f32 %v763, 0.0
      %v782 = vmax.f32 %v766, 0.0
      %v783 = vmax.f32 %v768, 0.0
      %v784 = vmax.f32 %v771, 0.0
      %v785 = vmax.f32 %v773, 0.0
      %v786 = vmax.f32 %v776, 0.0
      %v787 = vmax.f32 %v778, 0.0
      %v788 = vpack.c.bf16 %v780, %v780
      %v789 = vpack.c.bf16 %v781, %v781
      %v790 = vpack.c.bf16 %v782, %v782
      %v791 = vpack.c.bf16 %v783, %v783
      %v792 = vpack.c.bf16 %v784, %v784
      %v793 = vpack.c.bf16 %v785, %v785
      %v794 = vpack.c.bf16 %v786, %v786
      %v795 = vpack.c.bf16 %v787, %v787
      %vm796 = vcmask 519168
      %797 = vst.msk [vmem:[%s204] sm:$0xf] %vm796, %v788
      %798 = vst.msk [vmem:[%s204 + $0x4] sm:$0xf] %vm796, %v789
      %799 = vst.msk [vmem:[%s204 + $0x8] sm:$0xf] %vm796, %v790
      %800 = vst.msk [vmem:[%s204 + $0xc] sm:$0xf] %vm796, %v791
      %801 = vst.msk [vmem:[%s204 + $0x10] sm:$0xf] %vm796, %v792
      %802 = vst.msk [vmem:[%s204 + $0x14] sm:$0xf] %vm796, %v793
      %803 = vst.msk [vmem:[%s204 + $0x18] sm:$0xf] %vm796, %v794
      %804 = vst.msk [vmem:[%s204 + $0x1c] sm:$0xf] %vm796, %v795
      %p805 = scmp.lt.s32.totalorder %s14, 1
      %s806 = scalar_select %p805, %s14, 1
      %s807 = smul.addr %s806, 8
      %s808 = smul.addr %s807, 4
      %s809 = scalar_lea.vmem %s3, %s808
      // Predicated region
      $region33: #{forward.6} parent=31 // pred_check
        %p810 = pneg %p110
      $region34: #{forward.6} parent=31 // pred_check_branch
        %812 = sbr.rel (%p810) target = $region36
      $region35: #{forward.6} parent=31 // pred_region
        _
      $region36: #{forward.6} parent=31 // pred_fallthru
        _
    $region32: #{forward.6} parent=5 // pred_fallthru
      _
    %p813 = scmp.le.s32.totalorder 2, %s9
    // Predicated region
    $region37: #{forward.6} parent=5 // pred_check
      %p814 = pneg %p813
    $region38: #{forward.6} parent=5 // pred_check_branch
      %816 = sbr.rel (%p814) target = $region40
    $region39: #{forward.6} parent=5 // pred_region
      %s817 = ssub.s32 %s9, 2
      // Predicated region
      $region41: #{forward.6} parent=39 // pred_check
        %p818 = pneg %p116
      $region42: #{forward.6} parent=39 // pred_check_branch
        %820 = sbr.rel (%p818) target = $region44
      $region43: #{forward.6} parent=39 // pred_region
        %p821 = scmp.lt.s32.totalorder %s15, 1
        %s822 = scalar_select %p821, %s15, 1
        %s823 = smul.addr %s822, 8
        %s824 = smul.addr %s823, 4
        %s825 = scalar_lea.vmem %s3, %s824
      $region44: #{forward.6} parent=39 // pred_fallthru
        _
    $region40: #{forward.6} parent=5 // pred_fallthru
      _
  $region6: #{forward.6} parent=0 // loop_footer
    %s13 = sadd.s32 1, %s9
  $region7: #{forward.6} parent=0 // loop_footer_branch
    %8 = sbr.rel target = $region3
  $region8: #{forward.6} parent=0 // loop_exit
    _

// kernel: forward.7
$region0: #{forward.7}
  #allocation0 [shape = 'u32[]', space=smem, size = 0x4, offset = 0x4, fixed_abs, tag = 'smem constant byte address 0x4 - core index']
  #allocation1 [shape = 'u32[72,128]{1,0:T(1,128)}', space=vmem, size = 0x9000, scoped, tag = 'internal scratch']
  %s0 = inlined_call_operand.vmem [shape: bf16[4,1024], index: 0, kind: input, shape index: {}]
  %s1 = inlined_call_operand.vmem [shape: bf16[4,1024], index: 1, kind: input, shape index: {}]
  %s2 = inlined_call_operand.vmem [shape: f32[4,16], index: 2, kind: input, shape index: {}]
  %s3 = inlined_call_operand.vmem [shape: f32[2,2,1], index: 3, kind: input, shape index: {}]
  %s4 = inlined_call_operand.vmem [shape: f32[2,32], index: 4, kind: input, shape index: {}]
  %s5 = inlined_call_operand.vmem [shape: f32[2,32], index: 5, kind: input, shape index: {}]
  %s6 = inlined_call_operand.vmem [shape: bf16[2,1024,32], index: 6, kind: input, shape index: {}]
  %s7 = inlined_call_operand.vmem [shape: f32[4,96,96], index: 7, kind: input, shape index: {}]
  %s8 = inlined_call_operand.vmem [shape: f32[96,192], index: 8, kind: input, shape index: {}]
  %s9 = inlined_call_operand.vmem [shape: f32[64,128], index: 9, kind: input, shape index: {}]
  %s10 = inlined_call_operand.vmem [shape: f32[16,32], index: 10, kind: input, shape index: {}]
  %s11 = inlined_call_operand.vmem [shape: f32[19,192], index: 11, kind: input, shape index: {}]
  %s12 = inlined_call_operand.hbm [shape: f32[2,2,32], index: 12, kind: output, shape index: {0}]
  %s13 = inlined_call_operand.hbm [shape: f32[2,32], index: 13, kind: output, shape index: {1}]
  %s14 = inlined_call_operand.hbm [shape: f32[2,32], index: 14, kind: output, shape index: {2}]
  %15 = xla_tuple %s12, %s13, %s14
  %s16 = sld [smem:[#allocation0]]
  $region74: #{forward.7} parent=0
    _
  %s18 = ssub.s32 1, %s16
  %s19 = scalar_select 0, %s18, %s16
  $region1: #{forward.7} parent=0
    #allocation2 [shape = 'u8[2048]{0}', space=vmem, size = 0x800, scoped, tag = 'output window, operand 0, single buffered']
    #allocation3 [shape = 's32[1]{0}', space=sflag, size = 0x4, scoped, tag = 'scoped memory for forward.7']
    #allocation4 [shape = 'u8[1024]{0}', space=vmem, size = 0x400, scoped, tag = 'output window, operand 1, single buffered']
    #allocation5 [shape = 's32[1]{0}', space=sflag, size = 0x4, scoped, tag = 'scoped memory for forward.7']
    #allocation6 [shape = 'u8[1024]{0}', space=vmem, size = 0x400, scoped, tag = 'output window, operand 2, single buffered']
    %20 = vsyncpa [#allocation3], 0
    %21 = vsyncpa [#allocation5], 0
    // Predicated region
    $region2: #{forward.7} parent=1 // pred_check
      _
    $region3: #{forward.7} parent=1 // pred_check_branch
      %23 = sbr.rel (0) target = $region5
    $region4: #{forward.7} parent=1 // pred_region
      _
    $region5: #{forward.7} parent=1 // pred_fallthru
      _
    // Predicated region
    $region6: #{forward.7} parent=1 // pred_check
      _
    $region7: #{forward.7} parent=1 // pred_check_branch
      %25 = sbr.rel (0) target = $region9
    $region8: #{forward.7} parent=1 // pred_region
      _
    $region9: #{forward.7} parent=1 // pred_fallthru
      _
    // Predicated region
    $region10: #{forward.7} parent=1 // pred_check
      _
    $region11: #{forward.7} parent=1 // pred_check_branch
      %27 = sbr.rel (0) target = $region13
    $region12: #{forward.7} parent=1 // pred_region
      _
    $region13: #{forward.7} parent=1 // pred_fallthru
      _
    // Predicated region
    $region14: #{forward.7} parent=1 // pred_check
      _
    $region15: #{forward.7} parent=1 // pred_check_branch
      %29 = sbr.rel (0) target = $region17
    $region16: #{forward.7} parent=1 // pred_region
      _
    $region17: #{forward.7} parent=1 // pred_fallthru
      _
    // Predicated region
    $region18: #{forward.7} parent=1 // pred_check
      _
    $region19: #{forward.7} parent=1 // pred_check_branch
      %31 = sbr.rel (0) target = $region21
    $region20: #{forward.7} parent=1 // pred_region
      _
    $region21: #{forward.7} parent=1 // pred_fallthru
      _
    // Predicated region
    $region22: #{forward.7} parent=1 // pred_check
      _
    $region23: #{forward.7} parent=1 // pred_check_branch
      %33 = sbr.rel (0) target = $region25
    $region24: #{forward.7} parent=1 // pred_region
      _
    $region25: #{forward.7} parent=1 // pred_fallthru
      _
    // Predicated region
    $region26: #{forward.7} parent=1 // pred_check
      _
    $region27: #{forward.7} parent=1 // pred_check_branch
      %35 = sbr.rel (0) target = $region29
    $region28: #{forward.7} parent=1 // pred_region
      _
    $region29: #{forward.7} parent=1 // pred_fallthru
      _
    // Predicated region
    $region30: #{forward.7} parent=1 // pred_check
      _
    $region31: #{forward.7} parent=1 // pred_check_branch
      %37 = sbr.rel (0) target = $region33
    $region32: #{forward.7} parent=1 // pred_region
      _
    $region33: #{forward.7} parent=1 // pred_fallthru
      _
    // Predicated region
    $region34: #{forward.7} parent=1 // pred_check
      _
    $region35: #{forward.7} parent=1 // pred_check_branch
      %39 = sbr.rel (0) target = $region37
    $region36: #{forward.7} parent=1 // pred_region
      _
    $region37: #{forward.7} parent=1 // pred_fallthru
      _
    // Predicated region
    $region38: #{forward.7} parent=1 // pred_check
      _
    $region39: #{forward.7} parent=1 // pred_check_branch
      %41 = sbr.rel (0) target = $region41
    $region40: #{forward.7} parent=1 // pred_region
      _
    $region41: #{forward.7} parent=1 // pred_fallthru
      _
    // Predicated region
    $region42: #{forward.7} parent=1 // pred_check
      _
    $region43: #{forward.7} parent=1 // pred_check_branch
      %43 = sbr.rel (0) target = $region45
    $region44: #{forward.7} parent=1 // pred_region
      _
    $region45: #{forward.7} parent=1 // pred_fallthru
      _
    // Predicated region
    $region46: #{forward.7} parent=1 // pred_check
      _
    $region47: #{forward.7} parent=1 // pred_check_branch
      %45 = sbr.rel (0) target = $region49
    $region48: #{forward.7} parent=1 // pred_region
      _
    $region49: #{forward.7} parent=1 // pred_fallthru
      _
    %v46 = vld [vmem:[%s11] sm:$0xff]
    %v47 = vld [vmem:[%s11 + $0x8] sm:$0xff]
    %v48 = vld [vmem:[%s11 + $0x10] sm:$0xff]
    %v49 = vld [vmem:[%s11 + $0x20] sm:$0x7]
    %v50 = vld [vmem:[%s0] sm:$0xff]
    %v51 = vld [vmem:[%s0 + $0x8] sm:$0xff]
    %v52 = vld [vmem:[%s6] sm:$0xf]
    %v53 = vld [vmem:[%s6 + $0x4] sm:$0xf]
    %v54 = vld [vmem:[%s6 + $0x8] sm:$0xf]
    %v55 = vld [vmem:[%s6 + $0xc] sm:$0xf]
    %v56 = vld [vmem:[%s6 + $0x10] sm:$0xf]
    %v57 = vld [vmem:[%s6 + $0x14] sm:$0xf]
    %v58 = vld [vmem:[%s6 + $0x18] sm:$0xf]
    %v59 = vld [vmem:[%s6 + $0x1c] sm:$0xf]
    %v60 = vld [vmem:[%s6 + $0x20] sm:$0xf]
    %v61 = vld [vmem:[%s6 + $0x24] sm:$0xf]
    %v62 = vld [vmem:[%s6 + $0x28] sm:$0xf]
    %v63 = vld [vmem:[%s6 + $0x2c] sm:$0xf]
    %v64 = vld [vmem:[%s6 + $0x30] sm:$0xf]
    %v65 = vld [vmem:[%s6 + $0x34] sm:$0xf]
    %v66 = vld [vmem:[%s6 + $0x38] sm:$0xf]
    %v67 = vld [vmem:[%s6 + $0x3c] sm:$0xf]
    %v68 = vld [vmem:[%s6 + $0x40] sm:$0xf]
    %v69 = vld [vmem:[%s6 + $0x44] sm:$0xf]
    %v70 = vld [vmem:[%s6 + $0x48] sm:$0xf]
    %v71 = vld [vmem:[%s6 + $0x4c] sm:$0xf]
    %v72 = vld [vmem:[%s6 + $0x50] sm:$0xf]
    %v73 = vld [vmem:[%s6 + $0x54] sm:$0xf]
    %v74 = vld [vmem:[%s6 + $0x58] sm:$0xf]
    %v75 = vld [vmem:[%s6 + $0x5c] sm:$0xf]
    %v76 = vld [vmem:[%s6 + $0x60] sm:$0xf]
    %v77 = vld [vmem:[%s6 + $0x64] sm:$0xf]
    %v78 = vld [vmem:[%s6 + $0x68] sm:$0xf]
    %v79 = vld [vmem:[%s6 + $0x6c] sm:$0xf]
    %v80 = vld [vmem:[%s6 + $0x70] sm:$0xf]
    %v81 = vld [vmem:[%s6 + $0x74] sm:$0xf]
    %v82 = vld [vmem:[%s6 + $0x78] sm:$0xf]
    %v83 = vld [vmem:[%s6 + $0x7c] sm:$0xf]
    %v84 = vld [vmem:[%s6 + $0x80] sm:$0xf]
    %v85 = vld [vmem:[%s6 + $0x84] sm:$0xf]
    %v86 = vld [vmem:[%s6 + $0x88] sm:$0xf]
    %v87 = vld [vmem:[%s6 + $0x8c] sm:$0xf]
    %v88 = vld [vmem:[%s6 + $0x90] sm:$0xf]
    %v89 = vld [vmem:[%s6 + $0x94] sm:$0xf]
    %v90 = vld [vmem:[%s6 + $0x98] sm:$0xf]
    %v91 = vld [vmem:[%s6 + $0x9c] sm:$0xf]
    %v92 = vld [vmem:[%s6 + $0xa0] sm:$0xf]
    %v93 = vld [vmem:[%s6 + $0xa4] sm:$0xf]
    %v94 = vld [vmem:[%s6 + $0xa8] sm:$0xf]
    %v95 = vld [vmem:[%s6 + $0xac] sm:$0xf]
    %v96 = vld [vmem:[%s6 + $0xb0] sm:$0xf]
    %v97 = vld [vmem:[%s6 + $0xb4] sm:$0xf]
    %v98 = vld [vmem:[%s6 + $0xb8] sm:$0xf]
    %v99 = vld [vmem:[%s6 + $0xbc] sm:$0xf]
    %v100 = vld [vmem:[%s6 + $0xc0] sm:$0xf]
    %v101 = vld [vmem:[%s6 + $0xc4] sm:$0xf]
    %v102 = vld [vmem:[%s6 + $0xc8] sm:$0xf]
    %v103 = vld [vmem:[%s6 + $0xcc] sm:$0xf]
    %v104 = vld [vmem:[%s6 + $0xd0] sm:$0xf]
    %v105 = vld [vmem:[%s6 + $0xd4] sm:$0xf]
    %v106 = vld [vmem:[%s6 + $0xd8] sm:$0xf]
    %v107 = vld [vmem:[%s6 + $0xdc] sm:$0xf]
    %v108 = vld [vmem:[%s6 + $0xe0] sm:$0xf]
    %v109 = vld [vmem:[%s6 + $0xe4] sm:$0xf]
    %v110 = vld [vmem:[%s6 + $0xe8] sm:$0xf]
    %v111 = vld [vmem:[%s6 + $0xec] sm:$0xf]
    %v112 = vld [vmem:[%s6 + $0xf0] sm:$0xf]
    %v113 = vld [vmem:[%s6 + $0xf4] sm:$0xf]
    %v114 = vld [vmem:[%s6 + $0xf8] sm:$0xf]
    %v115 = vld [vmem:[%s6 + $0xfc] sm:$0xf]
    %v116 = vld [vmem:[%s6 + $0x100] sm:$0xf]
    %v117 = vld [vmem:[%s6 + $0x104] sm:$0xf]
    %v118 = vld [vmem:[%s6 + $0x108] sm:$0xf]
    %v119 = vld [vmem:[%s6 + $0x10c] sm:$0xf]
    %v120 = vld [vmem:[%s6 + $0x110] sm:$0xf]
    %v121 = vld [vmem:[%s6 + $0x114] sm:$0xf]
    %v122 = vld [vmem:[%s6 + $0x118] sm:$0xf]
    %v123 = vld [vmem:[%s6 + $0x11c] sm:$0xf]
    %v124 = vld [vmem:[%s6 + $0x120] sm:$0xf]
    %v125 = vld [vmem:[%s6 + $0x124] sm:$0xf]
    %v126 = vld [vmem:[%s6 + $0x128] sm:$0xf]
    %v127 = vld [vmem:[%s6 + $0x12c] sm:$0xf]
    %v128 = vld [vmem:[%s6 + $0x130] sm:$0xf]
    %v129 = vld [vmem:[%s6 + $0x134] sm:$0xf]
    %v130 = vld [vmem:[%s6 + $0x138] sm:$0xf]
    %v131 = vld [vmem:[%s6 + $0x13c] sm:$0xf]
    %v132 = vld [vmem:[%s6 + $0x140] sm:$0xf]
    %v133 = vld [vmem:[%s6 + $0x144] sm:$0xf]
    %v134 = vld [vmem:[%s6 + $0x148] sm:$0xf]
    %v135 = vld [vmem:[%s6 + $0x14c] sm:$0xf]
    %v136 = vld [vmem:[%s6 + $0x150] sm:$0xf]
    %v137 = vld [vmem:[%s6 + $0x154] sm:$0xf]
    %v138 = vld [vmem:[%s6 + $0x158] sm:$0xf]
    %v139 = vld [vmem:[%s6 + $0x15c] sm:$0xf]
    %v140 = vld [vmem:[%s6 + $0x160] sm:$0xf]
    %v141 = vld [vmem:[%s6 + $0x164] sm:$0xf]
    %v142 = vld [vmem:[%s6 + $0x168] sm:$0xf]
    %v143 = vld [vmem:[%s6 + $0x16c] sm:$0xf]
    %v144 = vld [vmem:[%s6 + $0x170] sm:$0xf]
    %v145 = vld [vmem:[%s6 + $0x174] sm:$0xf]
    %v146 = vld [vmem:[%s6 + $0x178] sm:$0xf]
    %v147 = vld [vmem:[%s6 + $0x17c] sm:$0xf]
    %v148 = vld [vmem:[%s6 + $0x180] sm:$0xf]
    %v149 = vld [vmem:[%s6 + $0x184] sm:$0xf]
    %v150 = vld [vmem:[%s6 + $0x188] sm:$0xf]
    %v151 = vld [vmem:[%s6 + $0x18c] sm:$0xf]
    %v152 = vld [vmem:[%s6 + $0x190] sm:$0xf]
    %v153 = vld [vmem:[%s6 + $0x194] sm:$0xf]
    %v154 = vld [vmem:[%s6 + $0x198] sm:$0xf]
    %v155 = vld [vmem:[%s6 + $0x19c] sm:$0xf]
    %v156 = vld [vmem:[%s6 + $0x1a0] sm:$0xf]
    %v157 = vld [vmem:[%s6 + $0x1a4] sm:$0xf]
    %v158 = vld [vmem:[%s6 + $0x1a8] sm:$0xf]
    %v159 = vld [vmem:[%s6 + $0x1ac] sm:$0xf]
    %v160 = vld [vmem:[%s6 + $0x1b0] sm:$0xf]
    %v161 = vld [vmem:[%s6 + $0x1b4] sm:$0xf]
    %v162 = vld [vmem:[%s6 + $0x1b8] sm:$0xf]
    %v163 = vld [vmem:[%s6 + $0x1bc] sm:$0xf]
    %v164 = vld [vmem:[%s6 + $0x1c0] sm:$0xf]
    %v165 = vld [vmem:[%s6 + $0x1c4] sm:$0xf]
    %v166 = vld [vmem:[%s6 + $0x1c8] sm:$0xf]
    %v167 = vld [vmem:[%s6 + $0x1cc] sm:$0xf]
    %v168 = vld [vmem:[%s6 + $0x1d0] sm:$0xf]
    %v169 = vld [vmem:[%s6 + $0x1d4] sm:$0xf]
    %v170 = vld [vmem:[%s6 + $0x1d8] sm:$0xf]
    %v171 = vld [vmem:[%s6 + $0x1dc] sm:$0xf]
    %v172 = vld [vmem:[%s6 + $0x1e0] sm:$0xf]
    %v173 = vld [vmem:[%s6 + $0x1e4] sm:$0xf]
    %v174 = vld [vmem:[%s6 + $0x1e8] sm:$0xf]
    %v175 = vld [vmem:[%s6 + $0x1ec] sm:$0xf]
    %v176 = vld [vmem:[%s6 + $0x1f0] sm:$0xf]
    %v177 = vld [vmem:[%s6 + $0x1f4] sm:$0xf]
    %v178 = vld [vmem:[%s6 + $0x1f8] sm:$0xf]
    %v179 = vld [vmem:[%s6 + $0x1fc] sm:$0xf]
    %v180 = vperm.slane %v48, 5
    %182 = vst [vmem:[#allocation1] ss:$4 sm:$0xff] %v50
    %s184 = scalar_lea.vmem [#allocation1], 32
    %185 = vst [vmem:[%s184] ss:$4 sm:$0xff] %v51
    %v186 = vld.sshfl [vmem:[#allocation1] sm:$0xff pattern:$0x73625140]
    %v187 = vld.sshfl [vmem:[#allocation1 + $0x8] sm:$0xff pattern:$0x73625140]
    %v188 = vld.sshfl [vmem:[#allocation1 + $0x10] sm:$0xff pattern:$0x73625140]
    %v189 = vld.sshfl [vmem:[#allocation1 + $0x18] sm:$0xff pattern:$0x73625140]
    %v190 = vld.sshfl [vmem:[#allocation1 + $0x20] sm:$0xff pattern:$0x73625140]
    %v191 = vld.sshfl [vmem:[#allocation1 + $0x28] sm:$0xff pattern:$0x73625140]
    %v192 = vld.sshfl [vmem:[#allocation1 + $0x30] sm:$0xff pattern:$0x73625140]
    %v193 = vld.sshfl [vmem:[#allocation1 + $0x38] sm:$0xff pattern:$0x73625140]
    %v330 = vunpack.c.l.b16 %v52
    %v331 = vunpack.c.l.b16 %v53
    %v332 = vunpack.c.l.b16 %v54
    %v333 = vunpack.c.l.b16 %v55
    %v334 = vunpack.c.l.b16 %v56
    %v335 = vunpack.c.l.b16 %v57
    %v336 = vunpack.c.l.b16 %v58
    %v337 = vunpack.c.l.b16 %v59
    %v338 = vunpack.c.l.b16 %v60
    %v339 = vunpack.c.l.b16 %v61
    %v340 = vunpack.c.l.b16 %v62
    %v341 = vunpack.c.l.b16 %v63
    %v342 = vunpack.c.l.b16 %v64
    %v343 = vunpack.c.l.b16 %v65
    %v344 = vunpack.c.l.b16 %v66
    %v345 = vunpack.c.l.b16 %v67
    %v346 = vunpack.c.l.b16 %v68
    %v347 = vunpack.c.l.b16 %v69
    %v348 = vunpack.c.l.b16 %v70
    %v349 = vunpack.c.l.b16 %v71
    %v350 = vunpack.c.l.b16 %v72
    %v351 = vunpack.c.l.b16 %v73
    %v352 = vunpack.c.l.b16 %v74
    %v353 = vunpack.c.l.b16 %v75
    %v354 = vunpack.c.l.b16 %v76
    %v355 = vunpack.c.l.b16 %v77
    %v356 = vunpack.c.l.b16 %v78
    %v357 = vunpack.c.l.b16 %v79
    %v358 = vunpack.c.l.b16 %v80
    %v359 = vunpack.c.l.b16 %v81
    %v360 = vunpack.c.l.b16 %v82
    %v361 = vunpack.c.l.b16 %v83
    %v362 = vunpack.c.l.b16 %v84
    %v363 = vunpack.c.l.b16 %v85
    %v364 = vunpack.c.l.b16 %v86
    %v365 = vunpack.c.l.b16 %v87
    %v366 = vunpack.c.l.b16 %v88
    %v367 = vunpack.c.l.b16 %v89
    %v368 = vunpack.c.l.b16 %v90
    %v369 = vunpack.c.l.b16 %v91
    %v370 = vunpack.c.l.b16 %v92
    %v371 = vunpack.c.l.b16 %v93
    %v372 = vunpack.c.l.b16 %v94
    %v373 = vunpack.c.l.b16 %v95
    %v374 = vunpack.c.l.b16 %v96
    %v375 = vunpack.c.l.b16 %v97
    %v376 = vunpack.c.l.b16 %v98
    %v377 = vunpack.c.l.b16 %v99
    %v378 = vunpack.c.l.b16 %v100
    %v379 = vunpack.c.l.b16 %v101
    %v380 = vunpack.c.l.b16 %v102
    %v381 = vunpack.c.l.b16 %v103
    %v382 = vunpack.c.l.b16 %v104
    %v383 = vunpack.c.l.b16 %v105
    %v384 = vunpack.c.l.b16 %v106
    %v385 = vunpack.c.l.b16 %v107
    %v386 = vunpack.c.l.b16 %v108
    %v387 = vunpack.c.l.b16 %v109
    %v388 = vunpack.c.l.b16 %v110
    %v389 = vunpack.c.l.b16 %v111
    %v390 = vunpack.c.l.b16 %v112
    %v391 = vunpack.c.l.b16 %v113
    %v392 = vunpack.c.l.b16 %v114
    %v393 = vunpack.c.l.b16 %v115
    %v394 = vunpack.c.l.b16 %v116
    %v395 = vunpack.c.l.b16 %v117
    %v396 = vunpack.c.l.b16 %v118
    %v397 = vunpack.c.l.b16 %v119
    %v398 = vunpack.c.l.b16 %v120
    %v399 = vunpack.c.l.b16 %v121
    %v400 = vunpack.c.l.b16 %v122
    %v401 = vunpack.c.l.b16 %v123
    %v402 = vunpack.c.l.b16 %v124
    %v403 = vunpack.c.l.b16 %v125
    %v404 = vunpack.c.l.b16 %v126
    %v405 = vunpack.c.l.b16 %v127
    %v406 = vunpack.c.l.b16 %v128
    %v407 = vunpack.c.l.b16 %v129
    %v408 = vunpack.c.l.b16 %v130
    %v409 = vunpack.c.l.b16 %v131
    %v410 = vunpack.c.l.b16 %v132
    %v411 = vunpack.c.l.b16 %v133
    %v412 = vunpack.c.l.b16 %v134
    %v413 = vunpack.c.l.b16 %v135
    %v414 = vunpack.c.l.b16 %v136
    %v415 = vunpack.c.l.b16 %v137
    %v416 = vunpack.c.l.b16 %v138
    %v417 = vunpack.c.l.b16 %v139
    %v418 = vunpack.c.l.b16 %v140
    %v419 = vunpack.c.l.b16 %v141
    %v420 = vunpack.c.l.b16 %v142
    %v421 = vunpack.c.l.b16 %v143
    %v422 = vunpack.c.l.b16 %v144
    %v423 = vunpack.c.l.b16 %v145
    %v424 = vunpack.c.l.b16 %v146
    %v425 = vunpack.c.l.b16 %v147
    %v426 = vunpack.c.l.b16 %v148
    %v427 = vunpack.c.l.b16 %v149
    %v428 = vunpack.c.l.b16 %v150
    %v429 = vunpack.c.l.b16 %v151
    %v430 = vunpack.c.l.b16 %v152
    %v431 = vunpack.c.l.b16 %v153
    %v432 = vunpack.c.l.b16 %v154
    %v433 = vunpack.c.l.b16 %v155
    %v434 = vunpack.c.l.b16 %v156
    %v435 = vunpack.c.l.b16 %v157
    %v436 = vunpack.c.l.b16 %v158
    %v437 = vunpack.c.l.b16 %v159
    %v438 = vunpack.c.l.b16 %v160
    %v439 = vunpack.c.l.b16 %v161
    %v440 = vunpack.c.l.b16 %v162
    %v441 = vunpack.c.l.b16 %v163
    %v442 = vunpack.c.l.b16 %v164
    %v443 = vunpack.c.l.b16 %v165
    %v444 = vunpack.c.l.b16 %v166
    %v445 = vunpack.c.l.b16 %v167
    %v446 = vunpack.c.l.b16 %v168
    %v447 = vunpack.c.l.b16 %v169
    %v448 = vunpack.c.l.b16 %v170
    %v449 = vunpack.c.l.b16 %v171
    %v450 = vunpack.c.l.b16 %v172
    %v451 = vunpack.c.l.b16 %v173
    %v452 = vunpack.c.l.b16 %v174
    %v453 = vunpack.c.l.b16 %v175
    %v454 = vunpack.c.l.b16 %v176
    %v455 = vunpack.c.l.b16 %v177
    %v456 = vunpack.c.l.b16 %v178
    %v457 = vunpack.c.l.b16 %v179
    %v458 = vpack.c.b16 %v331, %v330
    %v459 = vpack.c.b16 %v333, %v332
    %v460 = vpack.c.b16 %v335, %v334
    %v461 = vpack.c.b16 %v337, %v336
    %v462 = vpack.c.b16 %v339, %v338
    %v463 = vpack.c.b16 %v341, %v340
    %v464 = vpack.c.b16 %v343, %v342
    %v465 = vpack.c.b16 %v345, %v344
    %v466 = vpack.c.b16 %v347, %v346
    %v467 = vpack.c.b16 %v349, %v348
    %v468 = vpack.c.b16 %v351, %v350
    %v469 = vpack.c.b16 %v353, %v352
    %v470 = vpack.c.b16 %v355, %v354
    %v471 = vpack.c.b16 %v357, %v356
    %v472 = vpack.c.b16 %v359, %v358
    %v473 = vpack.c.b16 %v361, %v360
    %v474 = vpack.c.b16 %v363, %v362
    %v475 = vpack.c.b16 %v365, %v364
    %v476 = vpack.c.b16 %v367, %v366
    %v477 = vpack.c.b16 %v369, %v368
    %v478 = vpack.c.b16 %v371, %v370
    %v479 = vpack.c.b16 %v373, %v372
    %v480 = vpack.c.b16 %v375, %v374
    %v481 = vpack.c.b16 %v377, %v376
    %v482 = vpack.c.b16 %v379, %v378
    %v483 = vpack.c.b16 %v381, %v380
    %v484 = vpack.c.b16 %v383, %v382
    %v485 = vpack.c.b16 %v385, %v384
    %v486 = vpack.c.b16 %v387, %v386
    %v487 = vpack.c.b16 %v389, %v388
    %v488 = vpack.c.b16 %v391, %v390
    %v489 = vpack.c.b16 %v393, %v392
    %v490 = vpack.c.b16 %v395, %v394
    %v491 = vpack.c.b16 %v397, %v396
    %v492 = vpack.c.b16 %v399, %v398
    %v493 = vpack.c.b16 %v401, %v400
    %v494 = vpack.c.b16 %v403, %v402
    %v495 = vpack.c.b16 %v405, %v404
    %v496 = vpack.c.b16 %v407, %v406
    %v497 = vpack.c.b16 %v409, %v408
    %v498 = vpack.c.b16 %v411, %v410
    %v499 = vpack.c.b16 %v413, %v412
    %v500 = vpack.c.b16 %v415, %v414
    %v501 = vpack.c.b16 %v417, %v416
    %v502 = vpack.c.b16 %v419, %v418
    %v503 = vpack.c.b16 %v421, %v420
    %v504 = vpack.c.b16 %v423, %v422
    %v505 = vpack.c.b16 %v425, %v424
    %v506 = vpack.c.b16 %v427, %v426
    %v507 = vpack.c.b16 %v429, %v428
    %v508 = vpack.c.b16 %v431, %v430
    %v509 = vpack.c.b16 %v433, %v432
    %v510 = vpack.c.b16 %v435, %v434
    %v511 = vpack.c.b16 %v437, %v436
    %v512 = vpack.c.b16 %v439, %v438
    %v513 = vpack.c.b16 %v441, %v440
    %v514 = vpack.c.b16 %v443, %v442
    %v515 = vpack.c.b16 %v445, %v444
    %v516 = vpack.c.b16 %v447, %v446
    %v517 = vpack.c.b16 %v449, %v448
    %v518 = vpack.c.b16 %v451, %v450
    %v519 = vpack.c.b16 %v453, %v452
    %v520 = vpack.c.b16 %v455, %v454
    %v521 = vpack.c.b16 %v457, %v456
    %586 = vmatpush.bf16.msra.mxu0 %v465
    %587 = vmatpush.bf16.msra.mxu0 %v464
    %588 = vmatpush.bf16.msra.mxu0 %v463
    %589 = vmatpush.bf16.msra.mxu0 %v462
    %590 = vmatpush.bf16.msra.mxu0 %v461
    %591 = vmatpush.bf16.msra.mxu0 %v460
    %592 = vmatpush.bf16.msra.mxu0 %v459
    %593 = vmatpush.bf16.msra.mxu0 %v458
    %594 = vmatmul.bf16.gmra.mxu0 %v186
    %v595 = vpop.f32.mrf.mxu0
    %v596 = vadd.f32 %v180, %v595
    %v597 = vpop.f32.mrf.mxu0
    %598 = vdwg.mxu0
    %599 = vmatpush.bf16.msra.mxu0 %v473
    %600 = vmatpush.bf16.msra.mxu0 %v472
    %601 = vmatpush.bf16.msra.mxu0 %v471
    %602 = vmatpush.bf16.msra.mxu0 %v470
    %603 = vmatpush.bf16.msra.mxu0 %v469
    %604 = vmatpush.bf16.msra.mxu0 %v468
    %605 = vmatpush.bf16.msra.mxu0 %v467
    %606 = vmatpush.bf16.msra.mxu0 %v466
    %607 = vmatmul.bf16.gmra.mxu0 %v187
    %v608 = vpop.f32.mrf.mxu0
    %v609 = vadd.f32 %v596, %v608
    %v610 = vpop.f32.mrf.mxu0
    %611 = vdwg.mxu0
    %612 = vmatpush.bf16.msra.mxu0 %v481
    %613 = vmatpush.bf16.msra.mxu0 %v480
    %614 = vmatpush.bf16.msra.mxu0 %v479
    %615 = vmatpush.bf16.msra.mxu0 %v478
    %616 = vmatpush.bf16.msra.mxu0 %v477
    %617 = vmatpush.bf16.msra.mxu0 %v476
    %618 = vmatpush.bf16.msra.mxu0 %v475
    %619 = vmatpush.bf16.msra.mxu0 %v474
    %620 = vmatmul.bf16.gmra.mxu0 %v188
    %v621 = vpop.f32.mrf.mxu0
    %v622 = vadd.f32 %v609, %v621
    %v623 = vpop.f32.mrf.mxu0
    %624 = vdwg.mxu0
    %625 = vmatpush.bf16.msra.mxu0 %v489
    %626 = vmatpush.bf16.msra.mxu0 %v488
    %627 = vmatpush.bf16.msra.mxu0 %v487
    %628 = vmatpush.bf16.msra.mxu0 %v486
    %629 = vmatpush.bf16.msra.mxu0 %v485
    %630 = vmatpush.bf16.msra.mxu0 %v484
    %631 = vmatpush.bf16.msra.mxu0 %v483
    %632 = vmatpush.bf16.msra.mxu0 %v482
    %633 = vmatmul.bf16.gmra.mxu0 %v189
    %v634 = vpop.f32.mrf.mxu0
    %v635 = vadd.f32 %v622, %v634
    %v636 = vpop.f32.mrf.mxu0
    %637 = vdwg.mxu0
    %638 = vmatpush.bf16.msra.mxu0 %v497
    %639 = vmatpush.bf16.msra.mxu0 %v496
    %640 = vmatpush.bf16.msra.mxu0 %v495
    %641 = vmatpush.bf16.msra.mxu0 %v494
    %642 = vmatpush.bf16.msra.mxu0 %v493
    %643 = vmatpush.bf16.msra.mxu0 %v492
    %644 = vmatpush.bf16.msra.mxu0 %v491
    %645 = vmatpush.bf16.msra.mxu0 %v490
    %646 = vmatmul.bf16.gmra.mxu0 %v190
    %v647 = vpop.f32.mrf.mxu0
    %v648 = vadd.f32 %v635, %v647
    %v649 = vpop.f32.mrf.mxu0
    %650 = vdwg.mxu0
    %651 = vmatpush.bf16.msra.mxu0 %v505
    %652 = vmatpush.bf16.msra.mxu0 %v504
    %653 = vmatpush.bf16.msra.mxu0 %v503
    %654 = vmatpush.bf16.msra.mxu0 %v502
    %655 = vmatpush.bf16.msra.mxu0 %v501
    %656 = vmatpush.bf16.msra.mxu0 %v500
    %657 = vmatpush.bf16.msra.mxu0 %v499
    %658 = vmatpush.bf16.msra.mxu0 %v498
    %659 = vmatmul.bf16.gmra.mxu0 %v191
    %v660 = vpop.f32.mrf.mxu0
    %v661 = vadd.f32 %v648, %v660
    %v662 = vpop.f32.mrf.mxu0
    %663 = vdwg.mxu0
    %664 = vmatpush.bf16.msra.mxu0 %v513
    %665 = vmatpush.bf16.msra.mxu0 %v512
    %666 = vmatpush.bf16.msra.mxu0 %v511
    %667 = vmatpush.bf16.msra.mxu0 %v510
    %668 = vmatpush.bf16.msra.mxu0 %v509
    %669 = vmatpush.bf16.msra.mxu0 %v508
    %670 = vmatpush.bf16.msra.mxu0 %v507
    %671 = vmatpush.bf16.msra.mxu0 %v506
    %672 = vmatmul.bf16.gmra.mxu0 %v192
    %v673 = vpop.f32.mrf.mxu0
    %v674 = vadd.f32 %v661, %v673
    %v675 = vpop.f32.mrf.mxu0
    %676 = vdwg.mxu0
    %677 = vmatpush.bf16.msra.mxu0 %v521
    %678 = vmatpush.bf16.msra.mxu0 %v520
    %679 = vmatpush.bf16.msra.mxu0 %v519
    %680 = vmatpush.bf16.msra.mxu0 %v518
    %681 = vmatpush.bf16.msra.mxu0 %v517
    %682 = vmatpush.bf16.msra.mxu0 %v516
    %683 = vmatpush.bf16.msra.mxu0 %v515
    %684 = vmatpush.bf16.msra.mxu0 %v514
    %685 = vmatmul.bf16.gmra.mxu0 %v193
    %v686 = vpop.f32.mrf.mxu0
    %v687 = vadd.f32 %v674, %v686
    %v688 = vpop.f32.mrf.mxu0
    %689 = vdwg.mxu0
    %v690 = vmax.f32 %v687, 0.0
    %v691 = vld [vmem:[%s1] sm:$0xff]
    %v692 = vld [vmem:[%s1 + $0x8] sm:$0xff]
    %s693 = scalar_lea.vmem %s6, 512
    %v694 = vld [vmem:[%s693] sm:$0xf]
    %v695 = vld [vmem:[%s693 + $0x4] sm:$0xf]
    %v696 = vld [vmem:[%s693 + $0x8] sm:$0xf]
    %v697 = vld [vmem:[%s693 + $0xc] sm:$0xf]
    %v698 = vld [vmem:[%s693 + $0x10] sm:$0xf]
    %v699 = vld [vmem:[%s693 + $0x14] sm:$0xf]
    %v700 = vld [vmem:[%s693 + $0x18] sm:$0xf]
    %v701 = vld [vmem:[%s693 + $0x1c] sm:$0xf]
    %v702 = vld [vmem:[%s693 + $0x20] sm:$0xf]
    %v703 = vld [vmem:[%s693 + $0x24] sm:$0xf]
    %v704 = vld [vmem:[%s693 + $0x28] sm:$0xf]
    %v705 = vld [vmem:[%s693 + $0x2c] sm:$0xf]
    %v706 = vld [vmem:[%s693 + $0x30] sm:$0xf]
    %v707 = vld [vmem:[%s693 + $0x34] sm:$0xf]
    %v708 = vld [vmem:[%s693 + $0x38] sm:$0xf]
    %v709 = vld [vmem:[%s693 + $0x3c] sm:$0xf]
    %v710 = vld [vmem:[%s693 + $0x40] sm:$0xf]
    %v711 = vld [vmem:[%s693 + $0x44] sm:$0xf]
    %v712 = vld [vmem:[%s693 + $0x48] sm:$0xf]
    %v713 = vld [vmem:[%s693 + $0x4c] sm:$0xf]
    %v714 = vld [vmem:[%s693 + $0x50] sm:$0xf]
    %v715 = vld [vmem:[%s693 + $0x54] sm:$0xf]
    %v716 = vld [vmem:[%s693 + $0x58] sm:$0xf]
    %v717 = vld [vmem:[%s693 + $0x5c] sm:$0xf]
    %v718 = vld [vmem:[%s693 + $0x60] sm:$0xf]
    %v719 = vld [vmem:[%s693 + $0x64] sm:$0xf]
    %v720 = vld [vmem:[%s693 + $0x68] sm:$0xf]
    %v721 = vld [vmem:[%s693 + $0x6c] sm:$0xf]
    %v722 = vld [vmem:[%s693 + $0x70] sm:$0xf]
    %v723 = vld [vmem:[%s693 + $0x74] sm:$0xf]
    %v724 = vld [vmem:[%s693 + $0x78] sm:$0xf]
    %v725 = vld [vmem:[%s693 + $0x7c] sm:$0xf]
    %v726 = vld [vmem:[%s693 + $0x80] sm:$0xf]
    %v727 = vld [vmem:[%s693 + $0x84] sm:$0xf]
    %v728 = vld [vmem:[%s693 + $0x88] sm:$0xf]
    %v729 = vld [vmem:[%s693 + $0x8c] sm:$0xf]
    %v730 = vld [vmem:[%s693 + $0x90] sm:$0xf]
    %v731 = vld [vmem:[%s693 + $0x94] sm:$0xf]
    %v732 = vld [vmem:[%s693 + $0x98] sm:$0xf]
    %v733 = vld [vmem:[%s693 + $0x9c] sm:$0xf]
    %v734 = vld [vmem:[%s693 + $0xa0] sm:$0xf]
    %v735 = vld [vmem:[%s693 + $0xa4] sm:$0xf]
    %v736 = vld [vmem:[%s693 + $0xa8] sm:$0xf]
    %v737 = vld [vmem:[%s693 + $0xac] sm:$0xf]
    %v738 = vld [vmem:[%s693 + $0xb0] sm:$0xf]
    %v739 = vld [vmem:[%s693 + $0xb4] sm:$0xf]
    %v740 = vld [vmem:[%s693 + $0xb8] sm:$0xf]
    %v741 = vld [vmem:[%s693 + $0xbc] sm:$0xf]
    %v742 = vld [vmem:[%s693 + $0xc0] sm:$0xf]
    %v743 = vld [vmem:[%s693 + $0xc4] sm:$0xf]
    %v744 = vld [vmem:[%s693 + $0xc8] sm:$0xf]
    %v745 = vld [vmem:[%s693 + $0xcc] sm:$0xf]
    %v746 = vld [vmem:[%s693 + $0xd0] sm:$0xf]
    %v747 = vld [vmem:[%s693 + $0xd4] sm:$0xf]
    %v748 = vld [vmem:[%s693 + $0xd8] sm:$0xf]
    %v749 = vld [vmem:[%s693 + $0xdc] sm:$0xf]
    %v750 = vld [vmem:[%s693 + $0xe0] sm:$0xf]
    %v751 = vld [vmem:[%s693 + $0xe4] sm:$0xf]
    %v752 = vld [vmem:[%s693 + $0xe8] sm:$0xf]
    %v753 = vld [vmem:[%s693 + $0xec] sm:$0xf]
    %v754 = vld [vmem:[%s693 + $0xf0] sm:$0xf]
    %v755 = vld [vmem:[%s693 + $0xf4] sm:$0xf]
    %v756 = vld [vmem:[%s693 + $0xf8] sm:$0xf]
    %v757 = vld [vmem:[%s693 + $0xfc] sm:$0xf]
    %v758 = vld [vmem:[%s693 + $0x100] sm:$0xf]
    %v759 = vld [vmem:[%s693 + $0x104] sm:$0xf]
    %v760 = vld [vmem:[%s693 + $0x108] sm:$0xf]
    %v761 = vld [vmem:[%s693 + $0x10c] sm:$0xf]
    %v762 = vld [vmem:[%s693 + $0x110] sm:$0xf]
    %v763 = vld [vmem:[%s693 + $0x114] sm:$0xf]
    %v764 = vld [vmem:[%s693 + $0x118] sm:$0xf]
    %v765 = vld [vmem:[%s693 + $0x11c] sm:$0xf]
    %v766 = vld [vmem:[%s693 + $0x120] sm:$0xf]
    %v767 = vld [vmem:[%s693 + $0x124] sm:$0xf]
    %v768 = vld [vmem:[%s693 + $0x128] sm:$0xf]
    %v769 = vld [vmem:[%s693 + $0x12c] sm:$0xf]
    %v770 = vld [vmem:[%s693 + $0x130] sm:$0xf]
    %v771 = vld [vmem:[%s693 + $0x134] sm:$0xf]
    %v772 = vld [vmem:[%s693 + $0x138] sm:$0xf]
    %v773 = vld [vmem:[%s693 + $0x13c] sm:$0xf]
    %v774 = vld [vmem:[%s693 + $0x140] sm:$0xf]
    %v775 = vld [vmem:[%s693 + $0x144] sm:$0xf]
    %v776 = vld [vmem:[%s693 + $0x148] sm:$0xf]
    %v777 = vld [vmem:[%s693 + $0x14c] sm:$0xf]
    %v778 = vld [vmem:[%s693 + $0x150] sm:$0xf]
    %v779 = vld [vmem:[%s693 + $0x154] sm:$0xf]
    %v780 = vld [vmem:[%s693 + $0x158] sm:$0xf]
    %v781 = vld [vmem:[%s693 + $0x15c] sm:$0xf]
    %v782 = vld [vmem:[%s693 + $0x160] sm:$0xf]
    %v783 = vld [vmem:[%s693 + $0x164] sm:$0xf]
    %v784 = vld [vmem:[%s693 + $0x168] sm:$0xf]
    %v785 = vld [vmem:[%s693 + $0x16c] sm:$0xf]
    %v786 = vld [vmem:[%s693 + $0x170] sm:$0xf]
    %v787 = vld [vmem:[%s693 + $0x174] sm:$0xf]
    %v788 = vld [vmem:[%s693 + $0x178] sm:$0xf]
    %v789 = vld [vmem:[%s693 + $0x17c] sm:$0xf]
    %v790 = vld [vmem:[%s693 + $0x180] sm:$0xf]
    %v791 = vld [vmem:[%s693 + $0x184] sm:$0xf]
    %v792 = vld [vmem:[%s693 + $0x188] sm:$0xf]
    %v793 = vld [vmem:[%s693 + $0x18c] sm:$0xf]
    %v794 = vld [vmem:[%s693 + $0x190] sm:$0xf]
    %v795 = vld [vmem:[%s693 + $0x194] sm:$0xf]
    %v796 = vld [vmem:[%s693 + $0x198] sm:$0xf]
    %v797 = vld [vmem:[%s693 + $0x19c] sm:$0xf]
    %v798 = vld [vmem:[%s693 + $0x1a0] sm:$0xf]
    %v799 = vld [vmem:[%s693 + $0x1a4] sm:$0xf]
    %v800 = vld [vmem:[%s693 + $0x1a8] sm:$0xf]
    %v801 = vld [vmem:[%s693 + $0x1ac] sm:$0xf]
    %v802 = vld [vmem:[%s693 + $0x1b0] sm:$0xf]
    %v803 = vld [vmem:[%s693 + $0x1b4] sm:$0xf]
    %v804 = vld [vmem:[%s693 + $0x1b8] sm:$0xf]
    %v805 = vld [vmem:[%s693 + $0x1bc] sm:$0xf]
    %v806 = vld [vmem:[%s693 + $0x1c0] sm:$0xf]
    %v807 = vld [vmem:[%s693 + $0x1c4] sm:$0xf]
    %v808 = vld [vmem:[%s693 + $0x1c8] sm:$0xf]
    %v809 = vld [vmem:[%s693 + $0x1cc] sm:$0xf]
    %v810 = vld [vmem:[%s693 + $0x1d0] sm:$0xf]
    %v811 = vld [vmem:[%s693 + $0x1d4] sm:$0xf]
    %v812 = vld [vmem:[%s693 + $0x1d8] sm:$0xf]
    %v813 = vld [vmem:[%s693 + $0x1dc] sm:$0xf]
    %v814 = vld [vmem:[%s693 + $0x1e0] sm:$0xf]
    %v815 = vld [vmem:[%s693 + $0x1e4] sm:$0xf]
    %v816 = vld [vmem:[%s693 + $0x1e8] sm:$0xf]
    %v817 = vld [vmem:[%s693 + $0x1ec] sm:$0xf]
    %v818 = vld [vmem:[%s693 + $0x1f0] sm:$0xf]
    %v819 = vld [vmem:[%s693 + $0x1f4] sm:$0xf]
    %v820 = vld [vmem:[%s693 + $0x1f8] sm:$0xf]
    %v821 = vld [vmem:[%s693 + $0x1fc] sm:$0xf]
    %v822 = vperm.slane %v48, 6
    %824 = vst [vmem:[#allocation1] ss:$4 sm:$0xff] %v691
    %s826 = scalar_lea.vmem [#allocation1], 32
    %827 = vst [vmem:[%s826] ss:$4 sm:$0xff] %v692
    %v828 = vld.sshfl [vmem:[#allocation1] sm:$0xff pattern:$0x73625140]
    %v829 = vld.sshfl [vmem:[#allocation1 + $0x8] sm:$0xff pattern:$0x73625140]
    %v830 = vld.sshfl [vmem:[#allocation1 + $0x10] sm:$0xff pattern:$0x73625140]
    %v831 = vld.sshfl [vmem:[#allocation1 + $0x18] sm:$0xff pattern:$0x73625140]
    %v832 = vld.sshfl [vmem:[#allocation1 + $0x20] sm:$0xff pattern:$0x73625140]
    %v833 = vld.sshfl [vmem:[#allocation1 + $0x28] sm:$0xff pattern:$0x73625140]
    %v834 = vld.sshfl [vmem:[#allocation1 + $0x30] sm:$0xff pattern:$0x73625140]
    %v835 = vld.sshfl [vmem:[#allocation1 + $0x38] sm:$0xff pattern:$0x73625140]
    %v972 = vunpack.c.l.b16 %v694
    %v973 = vunpack.c.l.b16 %v695
    %v974 = vunpack.c.l.b16 %v696
    %v975 = vunpack.c.l.b16 %v697
    %v976 = vunpack.c.l.b16 %v698
    %v977 = vunpack.c.l.b16 %v699
    %v978 = vunpack.c.l.b16 %v700
    %v979 = vunpack.c.l.b16 %v701
    %v980 = vunpack.c.l.b16 %v702
    %v981 = vunpack.c.l.b16 %v703
    %v982 = vunpack.c.l.b16 %v704
    %v983 = vunpack.c.l.b16 %v705
    %v984 = vunpack.c.l.b16 %v706
    %v985 = vunpack.c.l.b16 %v707
    %v986 = vunpack.c.l.b16 %v708
    %v987 = vunpack.c.l.b16 %v709
    %v988 = vunpack.c.l.b16 %v710
    %v989 = vunpack.c.l.b16 %v711
    %v990 = vunpack.c.l.b16 %v712
    %v991 = vunpack.c.l.b16 %v713
    %v992 = vunpack.c.l.b16 %v714
    %v993 = vunpack.c.l.b16 %v715
    %v994 = vunpack.c.l.b16 %v716
    %v995 = vunpack.c.l.b16 %v717
    %v996 = vunpack.c.l.b16 %v718
    %v997 = vunpack.c.l.b16 %v719
    %v998 = vunpack.c.l.b16 %v720
    %v999 = vunpack.c.l.b16 %v721
    %v1000 = vunpack.c.l.b16 %v722
    %v1001 = vunpack.c.l.b16 %v723
    %v1002 = vunpack.c.l.b16 %v724
    %v1003 = vunpack.c.l.b16 %v725
    %v1004 = vunpack.c.l.b16 %v726
    %v1005 = vunpack.c.l.b16 %v727
    %v1006 = vunpack.c.l.b16 %v728
    %v1007 = vunpack.c.l.b16 %v729
    %v1008 = vunpack.c.l.b16 %v730
    %v1009 = vunpack.c.l.b16 %v731
    %v1010 = vunpack.c.l.b16 %v732
    %v1011 = vunpack.c.l.b16 %v733
    %v1012 = vunpack.c.l.b16 %v734
    %v1013 = vunpack.c.l.b16 %v735
    %v1014 = vunpack.c.l.b16 %v736
    %v1015 = vunpack.c.l.b16 %v737
    %v1016 = vunpack.c.l.b16 %v738
    %v1017 = vunpack.c.l.b16 %v739
    %v1018 = vunpack.c.l.b16 %v740
    %v1019 = vunpack.c.l.b16 %v741
    %v1020 = vunpack.c.l.b16 %v742
    %v1021 = vunpack.c.l.b16 %v743
    %v1022 = vunpack.c.l.b16 %v744
    %v1023 = vunpack.c.l.b16 %v745
    %v1024 = vunpack.c.l.b16 %v746
    %v1025 = vunpack.c.l.b16 %v747
    %v1026 = vunpack.c.l.b16 %v748
    %v1027 = vunpack.c.l.b16 %v749
    %v1028 = vunpack.c.l.b16 %v750
    %v1029 = vunpack.c.l.b16 %v751
    %v1030 = vunpack.c.l.b16 %v752
    %v1031 = vunpack.c.l.b16 %v753
    %v1032 = vunpack.c.l.b16 %v754
    %v1033 = vunpack.c.l.b16 %v755
    %v1034 = vunpack.c.l.b16 %v756
    %v1035 = vunpack.c.l.b16 %v757
    %v1036 = vunpack.c.l.b16 %v758
    %v1037 = vunpack.c.l.b16 %v759
    %v1038 = vunpack.c.l.b16 %v760
    %v1039 = vunpack.c.l.b16 %v761
    %v1040 = vunpack.c.l.b16 %v762
    %v1041 = vunpack.c.l.b16 %v763
    %v1042 = vunpack.c.l.b16 %v764
    %v1043 = vunpack.c.l.b16 %v765
    %v1044 = vunpack.c.l.b16 %v766
    %v1045 = vunpack.c.l.b16 %v767
    %v1046 = vunpack.c.l.b16 %v768
    %v1047 = vunpack.c.l.b16 %v769
    %v1048 = vunpack.c.l.b16 %v770
    %v1049 = vunpack.c.l.b16 %v771
    %v1050 = vunpack.c.l.b16 %v772
    %v1051 = vunpack.c.l.b16 %v773
    %v1052 = vunpack.c.l.b16 %v774
    %v1053 = vunpack.c.l.b16 %v775
    %v1054 = vunpack.c.l.b16 %v776
    %v1055 = vunpack.c.l.b16 %v777
    %v1056 = vunpack.c.l.b16 %v778
    %v1057 = vunpack.c.l.b16 %v779
    %v1058 = vunpack.c.l.b16 %v780
    %v1059 = vunpack.c.l.b16 %v781
    %v1060 = vunpack.c.l.b16 %v782
    %v1061 = vunpack.c.l.b16 %v783
    %v1062 = vunpack.c.l.b16 %v784
    %v1063 = vunpack.c.l.b16 %v785
    %v1064 = vunpack.c.l.b16 %v786
    %v1065 = vunpack.c.l.b16 %v787
    %v1066 = vunpack.c.l.b16 %v788
    %v1067 = vunpack.c.l.b16 %v789
    %v1068 = vunpack.c.l.b16 %v790
    %v1069 = vunpack.c.l.b16 %v791
    %v1070 = vunpack.c.l.b16 %v792
    %v1071 = vunpack.c.l.b16 %v793
    %v1072 = vunpack.c.l.b16 %v794
    %v1073 = vunpack.c.l.b16 %v795
    %v1074 = vunpack.c.l.b16 %v796
    %v1075 = vunpack.c.l.b16 %v797
    %v1076 = vunpack.c.l.b16 %v798
    %v1077 = vunpack.c.l.b16 %v799
    %v1078 = vunpack.c.l.b16 %v800
    %v1079 = vunpack.c.l.b16 %v801
    %v1080 = vunpack.c.l.b16 %v802
    %v1081 = vunpack.c.l.b16 %v803
    %v1082 = vunpack.c.l.b16 %v804
    %v1083 = vunpack.c.l.b16 %v805
    %v1084 = vunpack.c.l.b16 %v806
    %v1085 = vunpack.c.l.b16 %v807
    %v1086 = vunpack.c.l.b16 %v808
    %v1087 = vunpack.c.l.b16 %v809
    %v1088 = vunpack.c.l.b16 %v810
    %v1089 = vunpack.c.l.b16 %v811
    %v1090 = vunpack.c.l.b16 %v812
    %v1091 = vunpack.c.l.b16 %v813
    %v1092 = vunpack.c.l.b16 %v814
    %v1093 = vunpack.c.l.b16 %v815
    %v1094 = vunpack.c.l.b16 %v816
    %v1095 = vunpack.c.l.b16 %v817
    %v1096 = vunpack.c.l.b16 %v818
    %v1097 = vunpack.c.l.b16 %v819
    %v1098 = vunpack.c.l.b16 %v820
    %v1099 = vunpack.c.l.b16 %v821
    %v1100 = vpack.c.b16 %v973, %v972
    %v1101 = vpack.c.b16 %v975, %v974
    %v1102 = vpack.c.b16 %v977, %v976
    %v1103 = vpack.c.b16 %v979, %v978
    %v1104 = vpack.c.b16 %v981, %v980
    %v1105 = vpack.c.b16 %v983, %v982
    %v1106 = vpack.c.b16 %v985, %v984
    %v1107 = vpack.c.b16 %v987, %v986
    %v1108 = vpack.c.b16 %v989, %v988
    %v1109 = vpack.c.b16 %v991, %v990
    %v1110 = vpack.c.b16 %v993, %v992
    %v1111 = vpack.c.b16 %v995, %v994
    %v1112 = vpack.c.b16 %v997, %v996
    %v1113 = vpack.c.b16 %v999, %v998
    %v1114 = vpack.c.b16 %v1001, %v1000
    %v1115 = vpack.c.b16 %v1003, %v1002
    %v1116 = vpack.c.b16 %v1005, %v1004
    %v1117 = vpack.c.b16 %v1007, %v1006
    %v1118 = vpack.c.b16 %v1009, %v1008
    %v1119 = vpack.c.b16 %v1011, %v1010
    %v1120 = vpack.c.b16 %v1013, %v1012
    %v1121 = vpack.c.b16 %v1015, %v1014
    %v1122 = vpack.c.b16 %v1017, %v1016
    %v1123 = vpack.c.b16 %v1019, %v1018
    %v1124 = vpack.c.b16 %v1021, %v1020
    %v1125 = vpack.c.b16 %v1023, %v1022
    %v1126 = vpack.c.b16 %v1025, %v1024
    %v1127 = vpack.c.b16 %v1027, %v1026
    %v1128 = vpack.c.b16 %v1029, %v1028
    %v1129 = vpack.c.b16 %v1031, %v1030
    %v1130 = vpack.c.b16 %v1033, %v1032
    %v1131 = vpack.c.b16 %v1035, %v1034
    %v1132 = vpack.c.b16 %v1037, %v1036
    %v1133 = vpack.c.b16 %v1039, %v1038
    %v1134 = vpack.c.b16 %v1041, %v1040
    %v1135 = vpack.c.b16 %v1043, %v1042
    %v1136 = vpack.c.b16 %v1045, %v1044
    %v1137 = vpack.c.b16 %v1047, %v1046
    %v1138 = vpack.c.b16 %v1049, %v1048
    %v1139 = vpack.c.b16 %v1051, %v1050
    %v1140 = vpack.c.b16 %v1053, %v1052
    %v1141 = vpack.c.b16 %v1055, %v1054
    %v1142 = vpack.c.b16 %v1057, %v1056
    %v1143 = vpack.c.b16 %v1059, %v1058
    %v1144 = vpack.c.b16 %v1061, %v1060
    %v1145 = vpack.c.b16 %v1063, %v1062
    %v1146 = vpack.c.b16 %v1065, %v1064
    %v1147 = vpack.c.b16 %v1067, %v1066
    %v1148 = vpack.c.b16 %v1069, %v1068
    %v1149 = vpack.c.b16 %v1071, %v1070
    %v1150 = vpack.c.b16 %v1073, %v1072
    %v1151 = vpack.c.b16 %v1075, %v1074
    %v1152 = vpack.c.b16 %v1077, %v1076
    %v1153 = vpack.c.b16 %v1079, %v1078
    %v1154 = vpack.c.b16 %v1081, %v1080
    %v1155 = vpack.c.b16 %v1083, %v1082
    %v1156 = vpack.c.b16 %v1085, %v1084
    %v1157 = vpack.c.b16 %v1087, %v1086
    %v1158 = vpack.c.b16 %v1089, %v1088
    %v1159 = vpack.c.b16 %v1091, %v1090
    %v1160 = vpack.c.b16 %v1093, %v1092
    %v1161 = vpack.c.b16 %v1095, %v1094
    %v1162 = vpack.c.b16 %v1097, %v1096
    %v1163 = vpack.c.b16 %v1099, %v1098
    %1228 = vmatpush.bf16.msra.mxu0 %v1107
    %1229 = vmatpush.bf16.msra.mxu0 %v1106
    %1230 = vmatpush.bf16.msra.mxu0 %v1105
    %1231 = vmatpush.bf16.msra.mxu0 %v1104
    %1232 = vmatpush.bf16.msra.mxu0 %v1103
    %1233 = vmatpush.bf16.msra.mxu0 %v1102
    %1234 = vmatpush.bf16.msra.mxu0 %v1101
    %1235 = vmatpush.bf16.msra.mxu0 %v1100
    %1236 = vmatmul.bf16.gmra.mxu0 %v828
    %v1237 = vpop.f32.mrf.mxu0
    %v1238 = vadd.f32 %v822, %v1237
    %v1239 = vpop.f32.mrf.mxu0
    %1240 = vdwg.mxu0
    %1241 = vmatpush.bf16.msra.mxu0 %v1115
    %1242 = vmatpush.bf16.msra.mxu0 %v1114
    %1243 = vmatpush.bf16.msra.mxu0 %v1113
    %1244 = vmatpush.bf16.msra.mxu0 %v1112
    %1245 = vmatpush.bf16.msra.mxu0 %v1111
    %1246 = vmatpush.bf16.msra.mxu0 %v1110
    %1247 = vmatpush.bf16.msra.mxu0 %v1109
    %1248 = vmatpush.bf16.msra.mxu0 %v1108
    %1249 = vmatmul.bf16.gmra.mxu0 %v829
    %v1250 = vpop.f32.mrf.mxu0
    %v1251 = vadd.f32 %v1238, %v1250
    %v1252 = vpop.f32.mrf.mxu0
    %1253 = vdwg.mxu0
    %1254 = vmatpush.bf16.msra.mxu0 %v1123
    %1255 = vmatpush.bf16.msra.mxu0 %v1122
    %1256 = vmatpush.bf16.msra.mxu0 %v1121
    %1257 = vmatpush.bf16.msra.mxu0 %v1120
    %1258 = vmatpush.bf16.msra.mxu0 %v1119
    %1259 = vmatpush.bf16.msra.mxu0 %v1118
    %1260 = vmatpush.bf16.msra.mxu0 %v1117
    %1261 = vmatpush.bf16.msra.mxu0 %v1116
    %1262 = vmatmul.bf16.gmra.mxu0 %v830
    %v1263 = vpop.f32.mrf.mxu0
    %v1264 = vadd.f32 %v1251, %v1263
    %v1265 = vpop.f32.mrf.mxu0
    %1266 = vdwg.mxu0
    %1267 = vmatpush.bf16.msra.mxu0 %v1131
    %1268 = vmatpush.bf16.msra.mxu0 %v1130
    %1269 = vmatpush.bf16.msra.mxu0 %v1129
    %1270 = vmatpush.bf16.msra.mxu0 %v1128
    %1271 = vmatpush.bf16.msra.mxu0 %v1127
    %1272 = vmatpush.bf16.msra.mxu0 %v1126
    %1273 = vmatpush.bf16.msra.mxu0 %v1125
    %1274 = vmatpush.bf16.msra.mxu0 %v1124
    %1275 = vmatmul.bf16.gmra.mxu0 %v831
    %v1276 = vpop.f32.mrf.mxu0
    %v1277 = vadd.f32 %v1264, %v1276
    %v1278 = vpop.f32.mrf.mxu0
    %1279 = vdwg.mxu0
    %1280 = vmatpush.bf16.msra.mxu0 %v1139
    %1281 = vmatpush.bf16.msra.mxu0 %v1138
    %1282 = vmatpush.bf16.msra.mxu0 %v1137
    %1283 = vmatpush.bf16.msra.mxu0 %v1136
    %1284 = vmatpush.bf16.msra.mxu0 %v1135
    %1285 = vmatpush.bf16.msra.mxu0 %v1134
    %1286 = vmatpush.bf16.msra.mxu0 %v1133
    %1287 = vmatpush.bf16.msra.mxu0 %v1132
    %1288 = vmatmul.bf16.gmra.mxu0 %v832
    %v1289 = vpop.f32.mrf.mxu0
    %v1290 = vadd.f32 %v1277, %v1289
    %v1291 = vpop.f32.mrf.mxu0
    %1292 = vdwg.mxu0
    %1293 = vmatpush.bf16.msra.mxu0 %v1147
    %1294 = vmatpush.bf16.msra.mxu0 %v1146
    %1295 = vmatpush.bf16.msra.mxu0 %v1145
    %1296 = vmatpush.bf16.msra.mxu0 %v1144
    %1297 = vmatpush.bf16.msra.mxu0 %v1143
    %1298 = vmatpush.bf16.msra.mxu0 %v1142
    %1299 = vmatpush.bf16.msra.mxu0 %v1141
    %1300 = vmatpush.bf16.msra.mxu0 %v1140
    %1301 = vmatmul.bf16.gmra.mxu0 %v833
    %v1302 = vpop.f32.mrf.mxu0
    %v1303 = vadd.f32 %v1290, %v1302
    %v1304 = vpop.f32.mrf.mxu0
    %1305 = vdwg.mxu0
    %1306 = vmatpush.bf16.msra.mxu0 %v1155
    %1307 = vmatpush.bf16.msra.mxu0 %v1154
    %1308 = vmatpush.bf16.msra.mxu0 %v1153
    %1309 = vmatpush.bf16.msra.mxu0 %v1152
    %1310 = vmatpush.bf16.msra.mxu0 %v1151
    %1311 = vmatpush.bf16.msra.mxu0 %v1150
    %1312 = vmatpush.bf16.msra.mxu0 %v1149
    %1313 = vmatpush.bf16.msra.mxu0 %v1148
    %1314 = vmatmul.bf16.gmra.mxu0 %v834
    %v1315 = vpop.f32.mrf.mxu0
    %v1316 = vadd.f32 %v1303, %v1315
    %v1317 = vpop.f32.mrf.mxu0
    %1318 = vdwg.mxu0
    %1319 = vmatpush.bf16.msra.mxu0 %v1163
    %1320 = vmatpush.bf16.msra.mxu0 %v1162
    %1321 = vmatpush.bf16.msra.mxu0 %v1161
    %1322 = vmatpush.bf16.msra.mxu0 %v1160
    %1323 = vmatpush.bf16.msra.mxu0 %v1159
    %1324 = vmatpush.bf16.msra.mxu0 %v1158
    %1325 = vmatpush.bf16.msra.mxu0 %v1157
    %1326 = vmatpush.bf16.msra.mxu0 %v1156
    %1327 = vmatmul.bf16.gmra.mxu0 %v835
    %v1328 = vpop.f32.mrf.mxu0
    %v1329 = vadd.f32 %v1316, %v1328
    %v1330 = vpop.f32.mrf.mxu0
    %1331 = vdwg.mxu0
    %v1332 = vmax.f32 %v1329, 0.0
    %v1333 = vld [vmem:[%s2] sm:$0xf]
    %v1334 = vld [vmem:[%s10] sm:$0xff]
    %v1335 = vld [vmem:[%s10 + $0x8] sm:$0xff]
    %v1336 = vperm.slane %v48, 4
    %vm1337 = vcmask 130048
    %v1339 = vsel %vm1337, %v1333, 0
    %1341 = vmatpush.msra.mxu0 0.0
    %1342 = vmatpush.msra.mxu0 0.0
    %1343 = vmatpush.msra.mxu0 0.0
    %1344 = vmatpush.msra.mxu0 0.0
    %1345 = vmatpush.msra.mxu0 0.0
    %1346 = vmatpush.msra.mxu0 0.0
    %1347 = vmatpush.msra.mxu0 0.0
    %1348 = vmatpush.msra.mxu0 0.0
    %1349 = vmatpush.msra.mxu0 0.0
    %1350 = vmatpush.msra.mxu0 0.0
    %1351 = vmatpush.msra.mxu0 0.0
    %1352 = vmatpush.msra.mxu0 0.0
    %1353 = vmatpush.msra.mxu0 0.0
    %1354 = vmatpush.msra.mxu0 0.0
    %1355 = vmatpush.msra.mxu0 %v1335
    %1356 = vmatpush.msra.mxu0 %v1334
    %1357 = vmatmul.f32.gmra.mxu0 %v1339
    %v1358 = vpop.f32.mrf.mxu0
    %v1359 = vadd.f32 %v1336, %v1358
    %1360 = vdwg.mxu0
    %v1361 = vmax.f32 %v1359, 0.0
    %1363 = vrot.lane.b32.xlu0 %v1332, 32
    %v1364 = vpop.permute.xlu0 %1363
    %1367 = vrot.lane.b32.xlu0 %v1361, 64
    %v1368 = vpop.permute.xlu0 %1367
    %vm1370 = vcmask 261120
    %v1371 = vsel %vm1370, %v690, %v1364
    %vm1372 = vcmask 523264
    %v1373 = vsel %vm1372, %v1371, %v1368
    %1375 = vrot.lane.b32.xlu0 %v690, 32
    %v1376 = vpop.permute.xlu0 %1375
    %1378 = vrot.lane.b32.xlu0 %v690, 64
    %v1379 = vpop.permute.xlu0 %1378
    %v1381 = vsel %vm1370, %v1332, %v1376
    %v1382 = vsel %vm1372, %v1381, %v1379
    %1383 = vrot.lane.b32.xlu0 %v1361, 32
    %v1384 = vpop.permute.xlu0 %1383
    %1386 = vrot.lane.b32.xlu0 %v1332, 64
    %v1387 = vpop.permute.xlu0 %1386
    %v1389 = vsel %vm1370, %v1361, %v1384
    %v1390 = vsel %vm1372, %v1389, %v1387
    %v1392 = vrot.slane %v1390, 4
    %vm1394 = vcmask 1043456
    %v1395 = vsel %vm1394, %v1382, %v1392
    %v1396 = vld [vmem:[%s7] sm:$0xff]
    %v1397 = vld [vmem:[%s7 + $0x8] sm:$0xff]
    %v1398 = vld [vmem:[%s7 + $0x10] sm:$0xff]
    %v1399 = vld [vmem:[%s7 + $0x18] sm:$0xff]
    %v1400 = vld [vmem:[%s7 + $0x20] sm:$0xff]
    %v1401 = vld [vmem:[%s7 + $0x28] sm:$0xff]
    %v1402 = vld [vmem:[%s7 + $0x30] sm:$0xff]
    %v1403 = vld [vmem:[%s7 + $0x38] sm:$0xff]
    %v1404 = vld [vmem:[%s7 + $0x40] sm:$0xff]
    %v1405 = vld [vmem:[%s7 + $0x48] sm:$0xff]
    %v1406 = vld [vmem:[%s7 + $0x50] sm:$0xff]
    %v1407 = vld [vmem:[%s7 + $0x58] sm:$0xff]
    %v1408 = vperm.slane %v46, 0
    %vm1409 = vcmask 785408
    %v1411 = vsel %vm1409, %v1373, 0
    %1413 = vmatpush.msra.mxu0 0.0
    %1414 = vmatpush.msra.mxu0 0.0
    %1415 = vmatpush.msra.mxu0 0.0
    %1416 = vmatpush.msra.mxu0 0.0
    %1417 = vmatpush.msra.mxu0 %v1407
    %1418 = vmatpush.msra.mxu0 %v1406
    %1419 = vmatpush.msra.mxu0 %v1405
    %1420 = vmatpush.msra.mxu0 %v1404
    %1421 = vmatpush.msra.mxu0 %v1403
    %1422 = vmatpush.msra.mxu0 %v1402
    %1423 = vmatpush.msra.mxu0 %v1401
    %1424 = vmatpush.msra.mxu0 %v1400
    %1425 = vmatpush.msra.mxu0 %v1399
    %1426 = vmatpush.msra.mxu0 %v1398
    %1427 = vmatpush.msra.mxu0 %v1397
    %1428 = vmatpush.msra.mxu0 %v1396
    %1429 = vmatmul.f32.gmra.mxu0 %v1411
    %v1430 = vpop.f32.mrf.mxu0
    %v1431 = vadd.f32 %v1408, %v1430
    %1432 = vdwg.mxu0
    %v1433 = vld [vmem:[%s8] sm:$0xff]
    %v1434 = vld [vmem:[%s8 + $0x8] sm:$0xff]
    %v1435 = vld [vmem:[%s8 + $0x10] sm:$0xff]
    %v1436 = vld [vmem:[%s8 + $0x18] sm:$0xff]
    %v1437 = vld [vmem:[%s8 + $0x20] sm:$0xff]
    %v1438 = vld [vmem:[%s8 + $0x28] sm:$0xff]
    %v1439 = vld [vmem:[%s8 + $0x30] sm:$0xff]
    %v1440 = vld [vmem:[%s8 + $0x38] sm:$0xff]
    %v1441 = vld [vmem:[%s8 + $0x40] sm:$0xff]
    %v1442 = vld [vmem:[%s8 + $0x48] sm:$0xff]
    %v1443 = vld [vmem:[%s8 + $0x50] sm:$0xff]
    %v1444 = vld [vmem:[%s8 + $0x58] sm:$0xff]
    %v1445 = vld [vmem:[%s8 + $0x60] sm:$0xff]
    %v1446 = vld [vmem:[%s8 + $0x68] sm:$0xff]
    %v1447 = vld [vmem:[%s8 + $0x70] sm:$0xff]
    %v1448 = vld [vmem:[%s8 + $0x78] sm:$0xff]
    %v1449 = vld [vmem:[%s8 + $0x80] sm:$0xff]
    %v1450 = vld [vmem:[%s8 + $0x88] sm:$0xff]
    %v1451 = vld [vmem:[%s8 + $0x90] sm:$0xff]
    %v1452 = vld [vmem:[%s8 + $0x98] sm:$0xff]
    %v1453 = vld [vmem:[%s8 + $0xa0] sm:$0xff]
    %v1454 = vld [vmem:[%s8 + $0xa8] sm:$0xff]
    %v1455 = vld [vmem:[%s8 + $0xb0] sm:$0xff]
    %v1456 = vld [vmem:[%s8 + $0xb8] sm:$0xff]
    %v1457 = vperm.slane %v46, 2
    %v1458 = vperm.slane %v47, 2
    %v1460 = vsel %vm1409, %v1395, 0
    %1462 = vmatpush.msra.mxu0 0.0
    %1463 = vmatpush.msra.mxu0 0.0
    %1464 = vmatpush.msra.mxu0 0.0
    %1465 = vmatpush.msra.mxu0 0.0
    %1466 = vmatpush.msra.mxu0 %v1455
    %1467 = vmatpush.msra.mxu0 %v1453
    %1468 = vmatpush.msra.mxu0 %v1451
    %1469 = vmatpush.msra.mxu0 %v1449
    %1470 = vmatpush.msra.mxu0 %v1447
    %1471 = vmatpush.msra.mxu0 %v1445
    %1472 = vmatpush.msra.mxu0 %v1443
    %1473 = vmatpush.msra.mxu0 %v1441
    %1474 = vmatpush.msra.mxu0 %v1439
    %1475 = vmatpush.msra.mxu0 %v1437
    %1476 = vmatpush.msra.mxu0 %v1435
    %1477 = vmatpush.msra.mxu0 %v1433
    %1478 = vmatmul.f32.gmra.mxu0 %v1460
    %v1479 = vpop.f32.mrf.mxu0
    %v1480 = vadd.f32 %v1457, %v1479
    %1481 = vdwg.mxu0
    %1482 = vmatpush.msra.mxu0 0.0
    %1483 = vmatpush.msra.mxu0 0.0
    %1484 = vmatpush.msra.mxu0 0.0
    %1485 = vmatpush.msra.mxu0 0.0
    %1486 = vmatpush.msra.mxu0 %v1456
    %1487 = vmatpush.msra.mxu0 %v1454
    %1488 = vmatpush.msra.mxu0 %v1452
    %1489 = vmatpush.msra.mxu0 %v1450
    %1490 = vmatpush.msra.mxu0 %v1448
    %1491 = vmatpush.msra.mxu0 %v1446
    %1492 = vmatpush.msra.mxu0 %v1444
    %1493 = vmatpush.msra.mxu0 %v1442
    %1494 = vmatpush.msra.mxu0 %v1440
    %1495 = vmatpush.msra.mxu0 %v1438
    %1496 = vmatpush.msra.mxu0 %v1436
    %1497 = vmatpush.msra.mxu0 %v1434
    %1498 = vmatmul.f32.gmra.mxu0 %v1460
    %v1499 = vpop.f32.mrf.mxu0
    %v1500 = vadd.f32 %v1458, %v1499
    %1501 = vdwg.mxu0
    %v1502 = vmul.f32 %v1431, 0.17677669
    %vm1505 = vcmask 1040384
    %v1506 = vrot.slane %v48, 7
    %v1507 = vrot.slane %v49, 7
    %v1508 = vsel %vm1505, %v1506, %v1507
    %v1511 = vsel %vm1370, %v1502, 0
    %v1514 = vsel %vm1370, %v1480, 0
    %1516 = vmatpush.xpose.msra.mxu0 0.0
    %1517 = vmatpush.xpose.msra.mxu0 0.0
    %1518 = vmatpush.xpose.msra.mxu0 0.0
    %1519 = vmatpush.xpose.msra.mxu0 0.0
    %1520 = vmatpush.xpose.msra.mxu0 0.0
    %1521 = vmatpush.xpose.msra.mxu0 0.0
    %1522 = vmatpush.xpose.msra.mxu0 0.0
    %1523 = vmatpush.xpose.msra.mxu0 0.0
    %1524 = vmatpush.xpose.msra.mxu0 0.0
    %1525 = vmatpush.xpose.msra.mxu0 0.0
    %1526 = vmatpush.xpose.msra.mxu0 0.0
    %1527 = vmatpush.xpose.msra.mxu0 0.0
    %1528 = vmatpush.xpose.msra.mxu0 0.0
    %1529 = vmatpush.xpose.msra.mxu0 0.0
    %1530 = vmatpush.xpose.msra.mxu0 0.0
    %1531 = vmatpush.xpose.msra.mxu0 %v1514
    %1532 = vmatmul.f32.gmra.mxu0 %v1511
    %v1533 = vpop.f32.mrf.mxu0
    %v1534 = vadd.f32 %v1508, %v1533
    %1535 = vdwg.mxu0
    %vm1536 = vcmask 60416
    %v1537 = vsel %vm1536, %v1534, -inf
    %1538 = vmax.xlane.f32.xlu0 %v1537
    %v1539 = vpop.xlane.xlu0 %1538
    %v1540 = vsub.f32 %v1534, %v1539
    %v1541 = vmul.f32 %v1540, 1.442695
    %v1542 = vpow.pop %v1541
    %v1543 = vsel %vm1536, %v1542, 0.0
    %1544 = vadd.xlane.f32.xlu0 %v1543
    %v1545 = vpop.xlane.xlu0 %1544
    %v1546 = vrcp.pop %v1545
    %v1547 = vmul.f32 %v1542, %v1546
    %1548 = vrot.lane.b32.xlu0 %v1480, 96
    %v1549 = vpop.permute.xlu0 %1548
    %vm1551 = vcmask 64512
    %v1553 = vsel %vm1551, %v1547, 0
    %1555 = vmatpush.msra.mxu0 0.0
    %1556 = vmatpush.msra.mxu0 0.0
    %1557 = vmatpush.msra.mxu0 0.0
    %1558 = vmatpush.msra.mxu0 0.0
    %1559 = vmatpush.msra.mxu0 0.0
    %1560 = vmatpush.msra.mxu0 0.0
    %1561 = vmatpush.msra.mxu0 0.0
    %1562 = vmatpush.msra.mxu0 0.0
    %1563 = vmatpush.msra.mxu0 0.0
    %1564 = vmatpush.msra.mxu0 0.0
    %1565 = vmatpush.msra.mxu0 0.0
    %1566 = vmatpush.msra.mxu0 0.0
    %1567 = vmatpush.msra.mxu0 0.0
    %1568 = vmatpush.msra.mxu0 0.0
    %1569 = vmatpush.msra.mxu0 0.0
    %1570 = vmatpush.msra.mxu0 %v1549
    %1571 = vmatmul.f32.gmra.mxu0 %v1553
    %v1572 = vpop.f32.mrf.mxu0
    %v1573 = vadd.f32 0.0, %v1572
    %1574 = vdwg.mxu0
    %1575 = vrot.lane.b32.xlu0 %v1502, 96
    %v1576 = vpop.permute.xlu0 %1575
    %1577 = vrot.lane.b32.xlu0 %v1480, 64
    %v1578 = vpop.permute.xlu0 %1577
    %v1579 = vsel %vm1370, %v1576, 0
    %v1581 = vsel %vm1370, %v1578, 0
    %1583 = vmatpush.xpose.msra.mxu0 0.0
    %1584 = vmatpush.xpose.msra.mxu0 0.0
    %1585 = vmatpush.xpose.msra.mxu0 0.0
    %1586 = vmatpush.xpose.msra.mxu0 0.0
    %1587 = vmatpush.xpose.msra.mxu0 0.0
    %1588 = vmatpush.xpose.msra.mxu0 0.0
    %1589 = vmatpush.xpose.msra.mxu0 0.0
    %1590 = vmatpush.xpose.msra.mxu0 0.0
    %1591 = vmatpush.xpose.msra.mxu0 0.0
    %1592 = vmatpush.xpose.msra.mxu0 0.0
    %1593 = vmatpush.xpose.msra.mxu0 0.0
    %1594 = vmatpush.xpose.msra.mxu0 0.0
    %1595 = vmatpush.xpose.msra.mxu0 0.0
    %1596 = vmatpush.xpose.msra.mxu0 0.0
    %1597 = vmatpush.xpose.msra.mxu0 0.0
    %1598 = vmatpush.xpose.msra.mxu0 %v1581
    %1599 = vmatmul.f32.gmra.mxu0 %v1579
    %v1600 = vpop.f32.mrf.mxu0
    %v1601 = vadd.f32 %v1508, %v1600
    %1602 = vdwg.mxu0
    %v1603 = vsel %vm1536, %v1601, -inf
    %1604 = vmax.xlane.f32.xlu0 %v1603
    %v1605 = vpop.xlane.xlu0 %1604
    %v1606 = vsub.f32 %v1601, %v1605
    %v1607 = vmul.f32 %v1606, 1.442695
    %v1608 = vpow.pop %v1607
    %v1609 = vsel %vm1536, %v1608, 0.0
    %1610 = vadd.xlane.f32.xlu0 %v1609
    %v1611 = vpop.xlane.xlu0 %1610
    %v1612 = vrcp.pop %v1611
    %v1613 = vmul.f32 %v1608, %v1612
    %1614 = vrot.lane.b32.xlu0 %v1480, 32
    %v1615 = vpop.permute.xlu0 %1614
    %v1618 = vsel %vm1551, %v1613, 0
    %1620 = vmatpush.msra.mxu0 0.0
    %1621 = vmatpush.msra.mxu0 0.0
    %1622 = vmatpush.msra.mxu0 0.0
    %1623 = vmatpush.msra.mxu0 0.0
    %1624 = vmatpush.msra.mxu0 0.0
    %1625 = vmatpush.msra.mxu0 0.0
    %1626 = vmatpush.msra.mxu0 0.0
    %1627 = vmatpush.msra.mxu0 0.0
    %1628 = vmatpush.msra.mxu0 0.0
    %1629 = vmatpush.msra.mxu0 0.0
    %1630 = vmatpush.msra.mxu0 0.0
    %1631 = vmatpush.msra.mxu0 0.0
    %1632 = vmatpush.msra.mxu0 0.0
    %1633 = vmatpush.msra.mxu0 0.0
    %1634 = vmatpush.msra.mxu0 0.0
    %1635 = vmatpush.msra.mxu0 %v1615
    %1636 = vmatmul.f32.gmra.mxu0 %v1618
    %v1637 = vpop.f32.mrf.mxu0
    %v1638 = vadd.f32 0.0, %v1637
    %1639 = vdwg.mxu0
    %1640 = vrot.lane.b32.xlu0 %v1502, 64
    %v1641 = vpop.permute.xlu0 %1640
    %v1642 = vsel %vm1370, %v1641, 0
    %v1645 = vsel %vm1370, %v1500, 0
    %1647 = vmatpush.xpose.msra.mxu0 0.0
    %1648 = vmatpush.xpose.msra.mxu0 0.0
    %1649 = vmatpush.xpose.msra.mxu0 0.0
    %1650 = vmatpush.xpose.msra.mxu0 0.0
    %1651 = vmatpush.xpose.msra.mxu0 0.0
    %1652 = vmatpush.xpose.msra.mxu0 0.0
    %1653 = vmatpush.xpose.msra.mxu0 0.0
    %1654 = vmatpush.xpose.msra.mxu0 0.0
    %1655 = vmatpush.xpose.msra.mxu0 0.0
    %1656 = vmatpush.xpose.msra.mxu0 0.0
    %1657 = vmatpush.xpose.msra.mxu0 0.0
    %1658 = vmatpush.xpose.msra.mxu0 0.0
    %1659 = vmatpush.xpose.msra.mxu0 0.0
    %1660 = vmatpush.xpose.msra.mxu0 0.0
    %1661 = vmatpush.xpose.msra.mxu0 0.0
    %1662 = vmatpush.xpose.msra.mxu0 %v1645
    %1663 = vmatmul.f32.gmra.mxu0 %v1642
    %v1664 = vpop.f32.mrf.mxu0
    %v1665 = vadd.f32 %v1508, %v1664
    %1666 = vdwg.mxu0
    %v1667 = vsel %vm1536, %v1665, -inf
    %1668 = vmax.xlane.f32.xlu0 %v1667
    %v1669 = vpop.xlane.xlu0 %1668
    %v1670 = vsub.f32 %v1665, %v1669
    %v1671 = vmul.f32 %v1670, 1.442695
    %v1672 = vpow.pop %v1671
    %v1673 = vsel %vm1536, %v1672, 0.0
    %1674 = vadd.xlane.f32.xlu0 %v1673
    %v1675 = vpop.xlane.xlu0 %1674
    %v1676 = vrcp.pop %v1675
    %v1677 = vmul.f32 %v1672, %v1676
    %1678 = vrot.lane.b32.xlu0 %v1500, 96
    %v1679 = vpop.permute.xlu0 %1678
    %v1682 = vsel %vm1551, %v1677, 0
    %1684 = vmatpush.msra.mxu0 0.0
    %1685 = vmatpush.msra.mxu0 0.0
    %1686 = vmatpush.msra.mxu0 0.0
    %1687 = vmatpush.msra.mxu0 0.0
    %1688 = vmatpush.msra.mxu0 0.0
    %1689 = vmatpush.msra.mxu0 0.0
    %1690 = vmatpush.msra.mxu0 0.0
    %1691 = vmatpush.msra.mxu0 0.0
    %1692 = vmatpush.msra.mxu0 0.0
    %1693 = vmatpush.msra.mxu0 0.0
    %1694 = vmatpush.msra.mxu0 0.0
    %1695 = vmatpush.msra.mxu0 0.0
    %1696 = vmatpush.msra.mxu0 0.0
    %1697 = vmatpush.msra.mxu0 0.0
    %1698 = vmatpush.msra.mxu0 0.0
    %1699 = vmatpush.msra.mxu0 %v1679
    %1700 = vmatmul.f32.gmra.mxu0 %v1682
    %v1701 = vpop.f32.mrf.mxu0
    %v1702 = vadd.f32 0.0, %v1701
    %1703 = vdwg.mxu0
    %1705 = vrot.lane.b32.xlu0 %v1638, 32
    %v1706 = vpop.permute.xlu0 %1705
    %1709 = vrot.lane.b32.xlu0 %v1702, 64
    %v1710 = vpop.permute.xlu0 %1709
    %v1712 = vsel %vm1370, %v1573, %v1706
    %v1713 = vsel %vm1372, %v1712, %v1710
    %s1714 = scalar_lea.vmem %s7, 96
    %v1715 = vld [vmem:[%s1714] sm:$0xff]
    %v1716 = vld [vmem:[%s1714 + $0x8] sm:$0xff]
    %v1717 = vld [vmem:[%s1714 + $0x10] sm:$0xff]
    %v1718 = vld [vmem:[%s1714 + $0x18] sm:$0xff]
    %v1719 = vld [vmem:[%s1714 + $0x20] sm:$0xff]
    %v1720 = vld [vmem:[%s1714 + $0x28] sm:$0xff]
    %v1721 = vld [vmem:[%s1714 + $0x30] sm:$0xff]
    %v1722 = vld [vmem:[%s1714 + $0x38] sm:$0xff]
    %v1723 = vld [vmem:[%s1714 + $0x40] sm:$0xff]
    %v1724 = vld [vmem:[%s1714 + $0x48] sm:$0xff]
    %v1725 = vld [vmem:[%s1714 + $0x50] sm:$0xff]
    %v1726 = vld [vmem:[%s1714 + $0x58] sm:$0xff]
    %v1727 = vperm.slane %v46, 1
    %v1729 = vsel %vm1409, %v1713, 0
    %1731 = vmatpush.msra.mxu0 0.0
    %1732 = vmatpush.msra.mxu0 0.0
    %1733 = vmatpush.msra.mxu0 0.0
    %1734 = vmatpush.msra.mxu0 0.0
    %1735 = vmatpush.msra.mxu0 %v1726
    %1736 = vmatpush.msra.mxu0 %v1725
    %1737 = vmatpush.msra.mxu0 %v1724
    %1738 = vmatpush.msra.mxu0 %v1723
    %1739 = vmatpush.msra.mxu0 %v1722
    %1740 = vmatpush.msra.mxu0 %v1721
    %1741 = vmatpush.msra.mxu0 %v1720
    %1742 = vmatpush.msra.mxu0 %v1719
    %1743 = vmatpush.msra.mxu0 %v1718
    %1744 = vmatpush.msra.mxu0 %v1717
    %1745 = vmatpush.msra.mxu0 %v1716
    %1746 = vmatpush.msra.mxu0 %v1715
    %1747 = vmatmul.f32.gmra.mxu0 %v1729
    %v1748 = vpop.f32.mrf.mxu0
    %v1749 = vadd.f32 %v1727, %v1748
    %1750 = vdwg.mxu0
    %v1751 = vadd.f32 %v1749, %v1373
    %vm1752 = vcmask 257024
    %v1753 = vsel %vm1752, %v1751, 0.0
    %1754 = vadd.xlane.f32.xlu0 %v1753
    %v1755 = vpop.xlane.xlu0 %1754
    %v1756 = vrcp.pop 32.0
    %v1757 = vmul.f32 32.0, %v1756
    %v1758 = vsub.f32 1.0, %v1757
    %v1759 = vmul.f32 %v1756, %v1758
    %v1760 = vadd.f32 %v1756, %v1759
    %vm1761 = vweird.f32 %v1756
    %v1762 = vsel %vm1761, %v1756, %v1760
    %v1763 = vmul.f32 %v1755, %v1762
    %v1764 = vsub.f32 %v1751, %v1763
    %v1765 = vmul.f32 %v1764, %v1764
    %v1766 = vsel %vm1752, %v1765, 0.0
    %1767 = vadd.xlane.f32.xlu0 %v1766
    %v1768 = vpop.xlane.xlu0 %1767
    %v1769 = vmul.f32 %v1768, %v1762
    %v1770 = vadd.f32 %v1769, 1e-05
    %v1771 = vrsqrt.pop %v1770
    %v1772 = vmul.f32 %v1771, %v1770
    %v1773 = vmul.f32 %v1772, %v1771
    %v1774 = vmul.f32 0.5, %v1773
    %v1775 = vsub.f32 1.5, %v1774
    %v1776 = vmul.f32 %v1771, %v1775
    %vm1777 = vweird.f32 %v1770
    %vm1778 = vweird.f32 %v1771
    %vm1779 = vmor %vm1777, %vm1778
    %v1780 = vsel %vm1779, %v1771, %v1776
    %v1781 = vmul.f32 %v1764, %v1780
    %v1782 = vperm.slane %v46, 3
    %v1783 = vmul.f32 %v1781, %v1782
    %v1784 = vperm.slane %v46, 4
    %v1785 = vadd.f32 %v1783, %v1784
    %1787 = vrot.lane.b32.xlu0 %v1751, 96
    %v1788 = vpop.permute.xlu0 %1787
    %v1790 = vsel %vm1752, %v1788, 0.0
    %1791 = vadd.xlane.f32.xlu0 %v1790
    %v1792 = vpop.xlane.xlu0 %1791
    %v1793 = vmul.f32 %v1792, %v1762
    %v1794 = vsub.f32 %v1751, %v1793
    %v1795 = vmul.f32 %v1794, %v1794
    %1797 = vrot.lane.b32.xlu0 %v1795, 96
    %v1798 = vpop.permute.xlu0 %1797
    %v1800 = vsel %vm1752, %v1798, 0.0
    %1801 = vadd.xlane.f32.xlu0 %v1800
    %v1802 = vpop.xlane.xlu0 %1801
    %v1803 = vmul.f32 %v1802, %v1762
    %v1804 = vadd.f32 %v1803, 1e-05
    %v1805 = vrsqrt.pop %v1804
    %v1806 = vmul.f32 %v1805, %v1804
    %v1807 = vmul.f32 %v1806, %v1805
    %v1808 = vmul.f32 0.5, %v1807
    %v1809 = vsub.f32 1.5, %v1808
    %v1810 = vmul.f32 %v1805, %v1809
    %vm1811 = vweird.f32 %v1804
    %vm1812 = vweird.f32 %v1805
    %vm1813 = vmor %vm1811, %vm1812
    %v1814 = vsel %vm1813, %v1805, %v1810
    %v1815 = vmul.f32 %v1794, %v1814
    %v1816 = vmul.f32 %v1815, %v1782
    %v1817 = vadd.f32 %v1816, %v1784
    %1818 = vrot.lane.b32.xlu0 %v1751, 64
    %v1819 = vpop.permute.xlu0 %1818
    %v1821 = vsel %vm1752, %v1819, 0.0
    %1822 = vadd.xlane.f32.xlu0 %v1821
    %v1823 = vpop.xlane.xlu0 %1822
    %v1824 = vmul.f32 %v1823, %v1762
    %v1825 = vsub.f32 %v1751, %v1824
    %v1826 = vmul.f32 %v1825, %v1825
    %1828 = vrot.lane.b32.xlu0 %v1826, 64
    %v1829 = vpop.permute.xlu0 %1828
    %v1831 = vsel %vm1752, %v1829, 0.0
    %1832 = vadd.xlane.f32.xlu0 %v1831
    %v1833 = vpop.xlane.xlu0 %1832
    %v1834 = vmul.f32 %v1833, %v1762
    %v1835 = vadd.f32 %v1834, 1e-05
    %v1836 = vrsqrt.pop %v1835
    %v1837 = vmul.f32 %v1836, %v1835
    %v1838 = vmul.f32 %v1837, %v1836
    %v1839 = vmul.f32 0.5, %v1838
    %v1840 = vsub.f32 1.5, %v1839
    %v1841 = vmul.f32 %v1836, %v1840
    %vm1842 = vweird.f32 %v1835
    %vm1843 = vweird.f32 %v1836
    %vm1844 = vmor %vm1842, %vm1843
    %v1845 = vsel %vm1844, %v1836, %v1841
    %v1846 = vmul.f32 %v1825, %v1845
    %v1847 = vmul.f32 %v1846, %v1782
    %v1848 = vadd.f32 %v1847, %v1784
    %v1849 = vsel %vm1370, %v1785, %v1817
    %v1850 = vsel %vm1372, %v1849, %v1848
    %s1851 = scalar_lea.vmem %s7, 192
    %v1852 = vld [vmem:[%s1851] sm:$0xff]
    %v1853 = vld [vmem:[%s1851 + $0x8] sm:$0xff]
    %v1854 = vld [vmem:[%s1851 + $0x10] sm:$0xff]
    %v1855 = vld [vmem:[%s1851 + $0x18] sm:$0xff]
    %v1856 = vld [vmem:[%s1851 + $0x20] sm:$0xff]
    %v1857 = vld [vmem:[%s1851 + $0x28] sm:$0xff]
    %v1858 = vld [vmem:[%s1851 + $0x30] sm:$0xff]
    %v1859 = vld [vmem:[%s1851 + $0x38] sm:$0xff]
    %v1860 = vld [vmem:[%s1851 + $0x40] sm:$0xff]
    %v1861 = vld [vmem:[%s1851 + $0x48] sm:$0xff]
    %v1862 = vld [vmem:[%s1851 + $0x50] sm:$0xff]
    %v1863 = vld [vmem:[%s1851 + $0x58] sm:$0xff]
    %v1864 = vperm.slane %v46, 5
    %v1866 = vsel %vm1409, %v1850, 0
    %1868 = vmatpush.msra.mxu0 0.0
    %1869 = vmatpush.msra.mxu0 0.0
    %1870 = vmatpush.msra.mxu0 0.0
    %1871 = vmatpush.msra.mxu0 0.0
    %1872 = vmatpush.msra.mxu0 %v1863
    %1873 = vmatpush.msra.mxu0 %v1862
    %1874 = vmatpush.msra.mxu0 %v1861
    %1875 = vmatpush.msra.mxu0 %v1860
    %1876 = vmatpush.msra.mxu0 %v1859
    %1877 = vmatpush.msra.mxu0 %v1858
    %1878 = vmatpush.msra.mxu0 %v1857
    %1879 = vmatpush.msra.mxu0 %v1856
    %1880 = vmatpush.msra.mxu0 %v1855
    %1881 = vmatpush.msra.mxu0 %v1854
    %1882 = vmatpush.msra.mxu0 %v1853
    %1883 = vmatpush.msra.mxu0 %v1852
    %1884 = vmatmul.f32.gmra.mxu0 %v1866
    %v1885 = vpop.f32.mrf.mxu0
    %v1886 = vadd.f32 %v1864, %v1885
    %1887 = vdwg.mxu0
    %v1888 = vmax.f32 %v1886, 0.0
    %s1889 = scalar_lea.vmem %s7, 288
    %v1890 = vld [vmem:[%s1889] sm:$0xff]
    %v1891 = vld [vmem:[%s1889 + $0x8] sm:$0xff]
    %v1892 = vld [vmem:[%s1889 + $0x10] sm:$0xff]
    %v1893 = vld [vmem:[%s1889 + $0x18] sm:$0xff]
    %v1894 = vld [vmem:[%s1889 + $0x20] sm:$0xff]
    %v1895 = vld [vmem:[%s1889 + $0x28] sm:$0xff]
    %v1896 = vld [vmem:[%s1889 + $0x30] sm:$0xff]
    %v1897 = vld [vmem:[%s1889 + $0x38] sm:$0xff]
    %v1898 = vld [vmem:[%s1889 + $0x40] sm:$0xff]
    %v1899 = vld [vmem:[%s1889 + $0x48] sm:$0xff]
    %v1900 = vld [vmem:[%s1889 + $0x50] sm:$0xff]
    %v1901 = vld [vmem:[%s1889 + $0x58] sm:$0xff]
    %v1902 = vperm.slane %v46, 6
    %v1904 = vsel %vm1409, %v1888, 0
    %1906 = vmatpush.msra.mxu0 0.0
    %1907 = vmatpush.msra.mxu0 0.0
    %1908 = vmatpush.msra.mxu0 0.0
    %1909 = vmatpush.msra.mxu0 0.0
    %1910 = vmatpush.msra.mxu0 %v1901
    %1911 = vmatpush.msra.mxu0 %v1900
    %1912 = vmatpush.msra.mxu0 %v1899
    %1913 = vmatpush.msra.mxu0 %v1898
    %1914 = vmatpush.msra.mxu0 %v1897
    %1915 = vmatpush.msra.mxu0 %v1896
    %1916 = vmatpush.msra.mxu0 %v1895
    %1917 = vmatpush.msra.mxu0 %v1894
    %1918 = vmatpush.msra.mxu0 %v1893
    %1919 = vmatpush.msra.mxu0 %v1892
    %1920 = vmatpush.msra.mxu0 %v1891
    %1921 = vmatpush.msra.mxu0 %v1890
    %1922 = vmatmul.f32.gmra.mxu0 %v1904
    %v1923 = vpop.f32.mrf.mxu0
    %v1924 = vadd.f32 %v1902, %v1923
    %1925 = vdwg.mxu0
    %1927 = vrot.lane.b32.xlu0 %v1924, 96
    %v1928 = vpop.permute.xlu0 %1927
    %v1930 = vmul.f32 %v1924, %v1928
    %1931 = vrot.lane.b32.xlu0 %v1924, 64
    %v1932 = vpop.permute.xlu0 %1931
    %v1934 = vmul.f32 %v1930, %v1932
    %v1935 = vld [vmem:[%s4] sm:$0x3]
    %v1936 = vld [vmem:[%s5] sm:$0x3]
    %v1937 = vld [vmem:[%s3] sm:$0x3]
    %1939 = vset.pattern.permute.xlu0 0
    %1940 = vperm.xlu0 %1939, %v1937
    %v1941 = vpop.permute.xlu0 %1940
    %v1943 = vmul.f32 %v1935, %v1941
    %v1944 = vmul.f32 %v1936, %v1941
    %1946 = vrot.lane.b32.xlu0 %v1943, 32
    %v1947 = vpop.permute.xlu0 %1946
    %v1949 = vsel %vm1370, %v1934, %v1947
    %v1950 = vld [vmem:[%s9] sm:$0xff]
    %v1951 = vld [vmem:[%s9 + $0x8] sm:$0xff]
    %v1952 = vld [vmem:[%s9 + $0x10] sm:$0xff]
    %v1953 = vld [vmem:[%s9 + $0x18] sm:$0xff]
    %v1954 = vld [vmem:[%s9 + $0x20] sm:$0xff]
    %v1955 = vld [vmem:[%s9 + $0x28] sm:$0xff]
    %v1956 = vld [vmem:[%s9 + $0x30] sm:$0xff]
    %v1957 = vld [vmem:[%s9 + $0x38] sm:$0xff]
    %v1958 = vperm.slane %v46, 7
    %v1960 = vsel %vm1372, %v1949, 0
    %1962 = vmatpush.msra.mxu0 0.0
    %1963 = vmatpush.msra.mxu0 0.0
    %1964 = vmatpush.msra.mxu0 0.0
    %1965 = vmatpush.msra.mxu0 0.0
    %1966 = vmatpush.msra.mxu0 0.0
    %1967 = vmatpush.msra.mxu0 0.0
    %1968 = vmatpush.msra.mxu0 0.0
    %1969 = vmatpush.msra.mxu0 0.0
    %1970 = vmatpush.msra.mxu0 %v1957
    %1971 = vmatpush.msra.mxu0 %v1956
    %1972 = vmatpush.msra.mxu0 %v1955
    %1973 = vmatpush.msra.mxu0 %v1954
    %1974 = vmatpush.msra.mxu0 %v1953
    %1975 = vmatpush.msra.mxu0 %v1952
    %1976 = vmatpush.msra.mxu0 %v1951
    %1977 = vmatpush.msra.mxu0 %v1950
    %1978 = vmatmul.f32.gmra.mxu0 %v1960
    %v1979 = vpop.f32.mrf.mxu0
    %v1980 = vadd.f32 %v1958, %v1979
    %1981 = vdwg.mxu0
    %vm1982 = vcmask 1041408
    %v1983 = vsel %vm1982, %v1980, 0.0
    %1984 = vadd.xlane.f32.xlu0 %v1983
    %v1985 = vpop.xlane.xlu0 %1984
    %v1986 = vrcp.pop 128.0
    %v1987 = vmul.f32 128.0, %v1986
    %v1988 = vsub.f32 1.0, %v1987
    %v1989 = vmul.f32 %v1986, %v1988
    %v1990 = vadd.f32 %v1986, %v1989
    %vm1991 = vweird.f32 %v1986
    %v1992 = vsel %vm1991, %v1986, %v1990
    %v1993 = vmul.f32 %v1985, %v1992
    %v1994 = vsub.f32 %v1980, %v1993
    %v1995 = vmul.f32 %v1994, %v1994
    %v1996 = vsel %vm1982, %v1995, 0.0
    %1997 = vadd.xlane.f32.xlu0 %v1996
    %v1998 = vpop.xlane.xlu0 %1997
    %v1999 = vmul.f32 %v1998, %v1992
    %v2000 = vadd.f32 %v1999, 1e-05
    %v2001 = vrsqrt.pop %v2000
    %v2002 = vmul.f32 %v2001, %v2000
    %v2003 = vmul.f32 %v2002, %v2001
    %v2004 = vmul.f32 0.5, %v2003
    %v2005 = vsub.f32 1.5, %v2004
    %v2006 = vmul.f32 %v2001, %v2005
    %vm2007 = vweird.f32 %v2000
    %vm2008 = vweird.f32 %v2001
    %vm2009 = vmor %vm2007, %vm2008
    %v2010 = vsel %vm2009, %v2001, %v2006
    %v2011 = vmul.f32 %v1994, %v2010
    %v2012 = vperm.slane %v48, 0
    %v2013 = vmul.f32 %v2011, %v2012
    %v2014 = vperm.slane %v48, 1
    %v2015 = vadd.f32 %v2013, %v2014
    %v2016 = vxor.u32 %v2015, 2147483648
    %v2017 = vmul.f32 %v2016, 1.442695
    %v2018 = vpow.pop %v2017
    %v2019 = vadd.f32 %v2018, 1.0
    %v2020 = vrcp.pop %v2019
    %v2021 = vmul.f32 %v2019, %v2020
    %v2022 = vsub.f32 1.0, %v2021
    %v2023 = vmul.f32 %v2020, %v2022
    %v2024 = vadd.f32 %v2020, %v2023
    %vm2025 = vweird.f32 %v2019
    %vm2026 = vweird.f32 %v2020
    %vm2027 = vmor %vm2025, %vm2026
    %v2028 = vsel %vm2027, %v2020, %v2024
    %v2029 = vand.u32 2147483647, %v2019
    %vm2030 = vcmp.eq.f32.partialorder %v2029, 8.507059e+37
    %v2031 = vand.u32 %v2019, 2147483648
    %v2032 = vor.u32 1.1754944e-38, %v2031
    %v2033 = vsel %vm2030, %v2032, %v2028
    %v2034 = vmul.f32 1.0, %v2033
    %v2035 = vtanh.pop %v2015
    %2037 = vrot.lane.b32.xlu0 %v1944, 32
    %v2038 = vpop.permute.xlu0 %2037
    %v2040 = vmul.f32 %v2034, %v2038
    %2042 = vrot.lane.b32.xlu0 %v2035, 64
    %v2043 = vpop.permute.xlu0 %2042
    %v2045 = vmul.f32 %v2034, %v2043
    %2047 = vrot.lane.b32.xlu0 %v2045, 32
    %v2048 = vpop.permute.xlu0 %2047
    %v2050 = vadd.f32 %v2040, %v2048
    %2052 = vrot.lane.b32.xlu0 %v2050, 96
    %v2053 = vpop.permute.xlu0 %2052
    %vm2055 = vcmask 254976
    %v2056 = vsel %vm2055, %v2053, 0.0
    %2057 = vadd.xlane.f32.xlu0 %v2056
    %v2058 = vpop.xlane.xlu0 %2057
    %v2059 = vmul.f32 %v2058, %v1762
    %v2060 = vsub.f32 %v2050, %v2059
    %v2061 = vmul.f32 %v2060, %v2060
    %2063 = vrot.lane.b32.xlu0 %v2061, 96
    %v2064 = vpop.permute.xlu0 %2063
    %v2066 = vsel %vm2055, %v2064, 0.0
    %2067 = vadd.xlane.f32.xlu0 %v2066
    %v2068 = vpop.xlane.xlu0 %2067
    %v2069 = vmul.f32 %v2068, %v1762
    %v2070 = vadd.f32 %v2069, 1e-05
    %v2071 = vrsqrt.pop %v2070
    %v2072 = vmul.f32 %v2071, %v2070
    %v2073 = vmul.f32 %v2072, %v2071
    %v2074 = vmul.f32 0.5, %v2073
    %v2075 = vsub.f32 1.5, %v2074
    %v2076 = vmul.f32 %v2071, %v2075
    %vm2077 = vweird.f32 %v2070
    %vm2078 = vweird.f32 %v2071
    %vm2079 = vmor %vm2077, %vm2078
    %v2080 = vsel %vm2079, %v2071, %v2076
    %v2081 = vmul.f32 %v2060, %v2080
    %v2082 = vperm.slane %v48, 2
    %2084 = vrot.lane.b32.xlu0 %v2082, 32
    %v2085 = vpop.permute.xlu0 %2084
    %v2087 = vmul.f32 %v2081, %v2085
    %v2088 = vperm.slane %v48, 3
    %2090 = vrot.lane.b32.xlu0 %v2088, 32
    %v2091 = vpop.permute.xlu0 %2090
    %v2093 = vadd.f32 %v2087, %v2091
    %v2094 = vtanh.pop %v2093
    %2096 = vrot.lane.b32.xlu0 %v2094, 64
    %v2097 = vpop.permute.xlu0 %2096
    %v2099 = vmul.f32 %v2034, %v2097
    %2101 = vrot.lane.b32.xlu0 %v2099, 32
    %v2102 = vpop.permute.xlu0 %2101
    %2104 = vst.msk [vmem:[#allocation2] sm:$0x3] %vm2055, %v2102
    %s2105 = scalar_lea.vmem %s3, 2
    %v2106 = vld [vmem:[%s2105] sm:$0x3]
    %2108 = vset.pattern.permute.xlu0 0
    %2109 = vperm.xlu0 %2108, %v2106
    %v2110 = vpop.permute.xlu0 %2109
    %v2112 = vmul.f32 %v2099, %v2110
    %v2113 = vmul.f32 %v2050, %v2110
    %v2115 = vrot.slane %v2112, 6
    %2116 = vrot.lane.b32.xlu0 %v2115, 64
    %v2117 = vpop.permute.xlu0 %2116
    %v2119 = vsel %vm1370, %v1934, %v2117
    %v2120 = vld [vmem:[%s9] sm:$0xff]
    %v2121 = vld [vmem:[%s9 + $0x8] sm:$0xff]
    %v2122 = vld [vmem:[%s9 + $0x10] sm:$0xff]
    %v2123 = vld [vmem:[%s9 + $0x18] sm:$0xff]
    %v2124 = vld [vmem:[%s9 + $0x20] sm:$0xff]
    %v2125 = vld [vmem:[%s9 + $0x28] sm:$0xff]
    %v2126 = vld [vmem:[%s9 + $0x30] sm:$0xff]
    %v2127 = vld [vmem:[%s9 + $0x38] sm:$0xff]
    %v2129 = vrot.slane %v2119, 2
    %v2130 = vsel %vm1372, %v2129, 0
    %2132 = vmatpush.msra.mxu0 0.0
    %2133 = vmatpush.msra.mxu0 0.0
    %2134 = vmatpush.msra.mxu0 0.0
    %2135 = vmatpush.msra.mxu0 0.0
    %2136 = vmatpush.msra.mxu0 0.0
    %2137 = vmatpush.msra.mxu0 0.0
    %2138 = vmatpush.msra.mxu0 0.0
    %2139 = vmatpush.msra.mxu0 0.0
    %2140 = vmatpush.msra.mxu0 %v2127
    %2141 = vmatpush.msra.mxu0 %v2126
    %2142 = vmatpush.msra.mxu0 %v2125
    %2143 = vmatpush.msra.mxu0 %v2124
    %2144 = vmatpush.msra.mxu0 %v2123
    %2145 = vmatpush.msra.mxu0 %v2122
    %2146 = vmatpush.msra.mxu0 %v2121
    %2147 = vmatpush.msra.mxu0 %v2120
    %2148 = vmatmul.f32.gmra.mxu0 %v2130
    %v2149 = vpop.f32.mrf.mxu0
    %v2150 = vadd.f32 %v1958, %v2149
    %2151 = vdwg.mxu0
    %v2152 = vsel %vm1982, %v2150, 0.0
    %2153 = vadd.xlane.f32.xlu0 %v2152
    %v2154 = vpop.xlane.xlu0 %2153
    %v2155 = vmul.f32 %v2154, %v1992
    %v2156 = vsub.f32 %v2150, %v2155
    %v2157 = vmul.f32 %v2156, %v2156
    %v2158 = vsel %vm1982, %v2157, 0.0
    %2159 = vadd.xlane.f32.xlu0 %v2158
    %v2160 = vpop.xlane.xlu0 %2159
    %v2161 = vmul.f32 %v2160, %v1992
    %v2162 = vadd.f32 %v2161, 1e-05
    %v2163 = vrsqrt.pop %v2162
    %v2164 = vmul.f32 %v2163, %v2162
    %v2165 = vmul.f32 %v2164, %v2163
    %v2166 = vmul.f32 0.5, %v2165
    %v2167 = vsub.f32 1.5, %v2166
    %v2168 = vmul.f32 %v2163, %v2167
    %vm2169 = vweird.f32 %v2162
    %vm2170 = vweird.f32 %v2163
    %vm2171 = vmor %vm2169, %vm2170
    %v2172 = vsel %vm2171, %v2163, %v2168
    %v2173 = vmul.f32 %v2156, %v2172
    %v2174 = vmul.f32 %v2173, %v2012
    %v2175 = vadd.f32 %v2174, %v2014
    %v2176 = vxor.u32 %v2175, 2147483648
    %v2177 = vmul.f32 %v2176, 1.442695
    %v2178 = vpow.pop %v2177
    %v2179 = vadd.f32 %v2178, 1.0
    %v2180 = vrcp.pop %v2179
    %v2181 = vmul.f32 %v2179, %v2180
    %v2182 = vsub.f32 1.0, %v2181
    %v2183 = vmul.f32 %v2180, %v2182
    %v2184 = vadd.f32 %v2180, %v2183
    %vm2185 = vweird.f32 %v2179
    %vm2186 = vweird.f32 %v2180
    %vm2187 = vmor %vm2185, %vm2186
    %v2188 = vsel %vm2187, %v2180, %v2184
    %v2189 = vand.u32 2147483647, %v2179
    %vm2190 = vcmp.eq.f32.partialorder %v2189, 8.507059e+37
    %v2191 = vand.u32 %v2179, 2147483648
    %v2192 = vor.u32 1.1754944e-38, %v2191
    %v2193 = vsel %vm2190, %v2192, %v2188
    %v2194 = vmul.f32 1.0, %v2193
    %v2195 = vtanh.pop %v2175
    %v2196 = vmul.f32 %v2194, %v2113
    %2198 = vrot.lane.b32.xlu0 %v2195, 64
    %v2199 = vpop.permute.xlu0 %2198
    %v2201 = vmul.f32 %v2194, %v2199
    %2203 = vrot.lane.b32.xlu0 %v2201, 32
    %v2204 = vpop.permute.xlu0 %2203
    %v2206 = vadd.f32 %v2196, %v2204
    %2208 = vrot.lane.b32.xlu0 %v2206, 96
    %v2209 = vpop.permute.xlu0 %2208
    %v2211 = vsel %vm2055, %v2209, 0.0
    %2212 = vadd.xlane.f32.xlu0 %v2211
    %v2213 = vpop.xlane.xlu0 %2212
    %v2214 = vmul.f32 %v2213, %v1762
    %v2215 = vsub.f32 %v2206, %v2214
    %v2216 = vmul.f32 %v2215, %v2215
    %2218 = vrot.lane.b32.xlu0 %v2216, 96
    %v2219 = vpop.permute.xlu0 %2218
    %v2221 = vsel %vm2055, %v2219, 0.0
    %2222 = vadd.xlane.f32.xlu0 %v2221
    %v2223 = vpop.xlane.xlu0 %2222
    %v2224 = vmul.f32 %v2223, %v1762
    %v2225 = vadd.f32 %v2224, 1e-05
    %v2226 = vrsqrt.pop %v2225
    %v2227 = vmul.f32 %v2226, %v2225
    %v2228 = vmul.f32 %v2227, %v2226
    %v2229 = vmul.f32 0.5, %v2228
    %v2230 = vsub.f32 1.5, %v2229
    %v2231 = vmul.f32 %v2226, %v2230
    %vm2232 = vweird.f32 %v2225
    %vm2233 = vweird.f32 %v2226
    %vm2234 = vmor %vm2232, %vm2233
    %v2235 = vsel %vm2234, %v2226, %v2231
    %v2236 = vmul.f32 %v2215, %v2235
    %v2237 = vmul.f32 %v2236, %v2085
    %v2238 = vadd.f32 %v2237, %v2091
    %v2239 = vtanh.pop %v2238
    %2241 = vrot.lane.b32.xlu0 %v2239, 64
    %v2242 = vpop.permute.xlu0 %2241
    %v2244 = vmul.f32 %v2194, %v2242
    %2246 = vrot.lane.b32.xlu0 %v2244, 32
    %v2247 = vpop.permute.xlu0 %2246
    %s2249 = scalar_lea.vmem [#allocation2], 2
    %2250 = vst.msk [vmem:[%s2249] sm:$0x3] %vm2055, %v2247
    %2251 = vst.msk [vmem:[#allocation4] sm:$0x3] %vm2055, %v2247
    %2252 = vst.msk [vmem:[#allocation6] sm:$0x3] %vm2055, %v2209
    // Predicated region
    $region50: #{forward.7} parent=1 // pred_check
      _
    $region51: #{forward.7} parent=1 // pred_check_branch
      %2254 = sbr.rel (0) target = $region53
    $region52: #{forward.7} parent=1 // pred_region
      %2256 = vsyncadd [#allocation3], 0
      %s2257 = sshll.u32 [#allocation2], 4
      %s2258 = int_to_ptr.vmem [resolvable:$true] %s2257
      %s2259 = sshll.u32 %s12, 4
      %s2260 = int_to_ptr.hbm [resolvable:$true] %s2259
      %2265 = dma.vmem_to_hbm [thread:$0]  %s2258, 64, %s2260, [#allocation3], 32, 32, 2
    $region53: #{forward.7} parent=1 // pred_fallthru
      _
    // Predicated region
    $region54: #{forward.7} parent=1 // pred_check
      _
    $region55: #{forward.7} parent=1 // pred_check_branch
      %2267 = sbr.rel (0) target = $region57
    $region56: #{forward.7} parent=1 // pred_region
      %2269 = vsyncadd [#allocation5], 0
      %s2271 = sshll.u32 [#allocation4], 4
      %s2272 = int_to_ptr.vmem [resolvable:$true] %s2271
      %s2273 = sshll.u32 %s13, 4
      %s2274 = int_to_ptr.hbm [resolvable:$true] %s2273
      %2276 = dma.vmem_to_hbm [thread:$0]  %s2272, 32, %s2274, [#allocation5]
    $region57: #{forward.7} parent=1 // pred_fallthru
      _
    // Predicated region
    $region58: #{forward.7} parent=1 // pred_check
      _
    $region59: #{forward.7} parent=1 // pred_check_branch
      %2278 = sbr.rel (0) target = $region61
    $region60: #{forward.7} parent=1 // pred_region
      %2280 = vsyncadd [#allocation5], 0
      %s2282 = sshll.u32 [#allocation6], 4
      %s2283 = int_to_ptr.vmem [resolvable:$true] %s2282
      %s2284 = sshll.u32 %s14, 4
      %s2285 = int_to_ptr.hbm [resolvable:$true] %s2284
      %2287 = dma.vmem_to_hbm [thread:$0]  %s2283, 32, %s2285, [#allocation5]
    $region61: #{forward.7} parent=1 // pred_fallthru
      _
    // Predicated region
    $region62: #{forward.7} parent=1 // pred_check
      _
    $region63: #{forward.7} parent=1 // pred_check_branch
      %2289 = sbr.rel (0) target = $region65
    $region64: #{forward.7} parent=1 // pred_region
      %2291 = dma.done [#allocation3], 64
    $region65: #{forward.7} parent=1 // pred_fallthru
      _
    // Predicated region
    $region66: #{forward.7} parent=1 // pred_check
      _
    $region67: #{forward.7} parent=1 // pred_check_branch
      %2293 = sbr.rel (0) target = $region69
    $region68: #{forward.7} parent=1 // pred_region
      %2295 = dma.done [#allocation5], 32
    $region69: #{forward.7} parent=1 // pred_fallthru
      _
    // Predicated region
    $region70: #{forward.7} parent=1 // pred_check
      _
    $region71: #{forward.7} parent=1 // pred_check_branch
      %2297 = sbr.rel (0) target = $region73
    $region72: #{forward.7} parent=1 // pred_region
      %2299 = dma.done [#allocation5], 32
    $region73: #{forward.7} parent=1 // pred_fallthru
      _
    %2300 = vsyncpa [#allocation3], 1
    %2301 = vsyncpa [#allocation5], 1

</llo_original>
